<compile_context>
chip_gen: v7x
topology: tpu7x:2x2x1
jax: 0.10.0
libtpu: 0.0.40
codegen_flags: <defaults>
</compile_context>

<pallas_src>
import functools

import jax
import jax.numpy as jnp
from jax import lax
from jax.experimental import pallas as pl
from jax.experimental.pallas import tpu as pltpu

LARGE_NUM = 1.0e9
COUT_PAD = 128          # conv output channels padded 64 -> 128 (lane-dense)
VMEM_LIMIT = 32 * 1024 * 1024   # safe on v5e/v6e (128 MiB) and v7x (64 MiB)

_VMEM = pl.BlockSpec(memory_space=pltpu.MemorySpace.VMEM)
_SMEM = pl.BlockSpec(memory_space=pltpu.MemorySpace.SMEM)


# ----------------------------- Pallas kernels ------------------------------ #

def _encoder_kernel(x_ref, wc_ref, wf_ref, fb_ref, o_ref, acc_ref, *, W, inv_hw):
    """Fused conv3x3+ReLU -> partial global-average-pool -> fc (at last step).

    x_ref : (tb, th, W+2, 3*Cin) bf16  dy-expanded padded rows for this tile
    wc_ref: (3, 3*Cin, COUT_PAD) bf16  per-dx conv weight slices (resident)
    wf_ref: (COUT_PAD, mlp_dim)  f32   fc weight (zero rows for padded chans)
    fb_ref: (1, mlp_dim)         f32   fc bias
    o_ref : (tb, mlp_dim)        f32   encoder output block (written at last r)
    acc_ref:(tb, COUT_PAD)       f32   pooled-sum accumulator (VMEM scratch)
    """
    r = pl.program_id(1)

    @pl.when(r == 0)
    def _init():
        acc_ref[...] = jnp.zeros_like(acc_ref)

    tb = x_ref.shape[0]
    th = x_ref.shape[1]
    kdim = x_ref.shape[3]
    rows = tb * th * W

    # conv as 3 accumulating shifted matmuls (dx = 0, 1, 2); MXU, f32 acc.
    conv = jnp.zeros((rows, COUT_PAD), jnp.float32)
    for dx in range(3):
        s = x_ref[:, :, pl.ds(dx, W), :]                    # (tb, th, W, 3*Cin)
        s2 = s.reshape(rows, kdim)
        conv = conv + jnp.dot(s2, wc_ref[dx],
                              preferred_element_type=jnp.float32)
    conv = jnp.maximum(conv, 0.0)                           # ReLU

    # partial global-average-pool: sum this row tile's spatial positions.
    acc_ref[...] += jnp.sum(conv.reshape(tb, th * W, COUT_PAD), axis=1)

    @pl.when(r == pl.num_programs(1) - 1)
    def _finish():
        pooled = acc_ref[...] * inv_hw                      # (tb, COUT_PAD)
        o_ref[...] = (jnp.dot(pooled, wf_ref[...],
                              preferred_element_type=jnp.float32) + fb_ref[...])


def _dcl_loss_kernel(scal_ref, h1_ref, h2_ref, u_ref, loss_ref, unew_ref, *,
                     inv_T, inv_denom, inv_B):
    """Dynamic contrastive loss, transposed orientation (per-sample axis on lanes)."""
    coef_old = scal_ref[0]      # 1 - gamma - gammad
    coef_new = scal_ref[1]      # (gamma + gammad) / (2*(B-1))

    h1 = h1_ref[...]
    h2 = h2_ref[...]
    B = h1.shape[0]

    # F.normalize(p=2, dim=1), eps=1e-12 (elementwise stays f32).
    h1 = h1 / jnp.maximum(jnp.sqrt(jnp.sum(h1 * h1, axis=1, keepdims=True)), 1e-12)
    h2 = h2 / jnp.maximum(jnp.sqrt(jnp.sum(h2 * h2, axis=1, keepdims=True)), 1e-12)

    # bf16 MXU operands, f32 accumulation.
    h1b = h1.astype(jnp.bfloat16)
    h2b = h2.astype(jnp.bfloat16)
    cat21 = jnp.concatenate([h2b, h1b], axis=0)      # (2B, D): [ab | aa] blocks
    cat12 = jnp.concatenate([h1b, h2b], axis=0)      # (2B, D): [ba | bb] blocks

    # logits in transposed (2B, B) layout: logits1[j, i] == logits_ab_aa[i, j].
    dn = (((1,), (1,)), ((), ()))
    logits1 = lax.dot_general(cat21, h1b, dn, preferred_element_type=jnp.float32)
    logits2 = lax.dot_general(cat12, h2b, dn, preferred_element_type=jnp.float32)

    rowj = lax.broadcasted_iota(jnp.int32, (2 * B, B), 0)
    coli = lax.broadcasted_iota(jnp.int32, (2 * B, B), 1)
    labels_t = (rowj == coli).astype(jnp.float32)               # ab/ba positives
    self_mask = jnp.where(rowj == coli + B, LARGE_NUM, 0.0)     # aa/bb diagonal
    neg_mask_t = 1.0 - labels_t

    logits1 = logits1 - self_mask
    logits2 = logits2 - self_mask

    neg1 = jnp.exp(logits1 * inv_T) * neg_mask_t
    neg2 = jnp.exp(logits2 * inv_T) * neg_mask_t

    u_prev = u_ref[...]                                          # (1, B)
    u1 = coef_old * u_prev + coef_new * jnp.sum(neg1, axis=0, keepdims=True)
    u2 = coef_old * u_prev + coef_new * jnp.sum(neg2, axis=0, keepdims=True)
    unew_ref[...] = u1 + u2                                      # lane-dense (1, B)

    w1 = neg1 * pl.reciprocal(u1, approx=True)                   # EUP reciprocal
    w2 = neg2 * pl.reciprocal(u2, approx=True)

    expsum1 = jnp.sum(w1 * logits1, axis=0, keepdims=True) * inv_denom
    expsum2 = jnp.sum(w2 * logits2, axis=0, keepdims=True) * inv_denom
    pos1 = jnp.sum(labels_t * logits1, axis=0, keepdims=True)
    pos2 = jnp.sum(labels_t * logits2, axis=0, keepdims=True)
    loss_rows = (expsum1 - pos1) + (expsum2 - pos2)              # (1, B)
    loss_ref[...] = jnp.sum(loss_rows, axis=1, keepdims=True) * inv_B


# ------------------------------ Pallas wrappers ----------------------------- #

def _pick_row_tile(H):
    for t in (64, 32, 16, 8, 4, 2):
        if H % t == 0 and H // t >= 2:
            return t
    return H


def encoder_forward_pallas(x_nchw, conv_w_oihw, fc_w, fc_b):
    """conv1(3->64, 3x3, s1, p1, no bias) + ReLU + avgpool + fc, fused."""
    x = jnp.transpose(x_nchw, (0, 2, 3, 1)).astype(jnp.float32)   # NCHW -> NHWC
    B, H, W, Cin = x.shape
    Cout = conv_w_oihw.shape[0]
    mlp_dim = fc_w.shape[1]

    # dy-row-expanded padded input (B, H, W+2, 3*Cin) in bf16: ~6x less HBM
    # traffic than the previous f32 9x im2col expansion.
    xp = jnp.pad(x, ((0, 0), (1, 1), (1, 1), (0, 0)))
    xr = jnp.concatenate([xp[:, dy:dy + H] for dy in range(3)], axis=-1)
    xr = xr.astype(jnp.bfloat16)

    # Per-dx conv weight slices (dy-major, cin-minor rows to match xr's last dim),
    # output channels zero-padded to 128 lanes.
    w = jnp.transpose(conv_w_oihw, (3, 2, 1, 0)).reshape(3, 3 * Cin, Cout)
    w = jnp.pad(w, ((0, 0), (0, 0), (0, COUT_PAD - Cout))).astype(jnp.bfloat16)
    fc_w_p = jnp.pad(fc_w.astype(jnp.float32), ((0, COUT_PAD - Cout), (0, 0)))
    fc_b_p = fc_b.reshape(1, mlp_dim).astype(jnp.float32)

    tb = min(B, 8)
    assert B % tb == 0, "batch must be a multiple of the batch tile"
    th = _pick_row_tile(H)
    nb, nr = B // tb, H // th

    kernel = functools.partial(_encoder_kernel, W=W, inv_hw=1.0 / float(H * W))
    flops = 2 * B * H * W * (3 * Cin) * COUT_PAD * 3 + 2 * B * COUT_PAD * mlp_dim
    bytes_accessed = (xr.size * 2 + w.size * 2 + fc_w_p.size * 4
                      + fc_b_p.size * 4 + B * mlp_dim * 4)

    return pl.pallas_call(
        kernel,
        out_shape=jax.ShapeDtypeStruct((B, mlp_dim), jnp.float32),
        grid_spec=pltpu.PrefetchScalarGridSpec(
            num_scalar_prefetch=0,
            grid=(nb, nr),
            in_specs=[
                pl.BlockSpec((tb, th, W + 2, 3 * Cin), lambda b, r: (b, r, 0, 0)),
                pl.BlockSpec((3, 3 * Cin, COUT_PAD), lambda b, r: (0, 0, 0)),
                pl.BlockSpec((COUT_PAD, mlp_dim), lambda b, r: (0, 0)),
                pl.BlockSpec((1, mlp_dim), lambda b, r: (0, 0)),
            ],
            out_specs=pl.BlockSpec((tb, mlp_dim), lambda b, r: (b, 0)),
            scratch_shapes=[pltpu.VMEM((tb, COUT_PAD), jnp.float32)],
        ),
        compiler_params=pltpu.CompilerParams(
            dimension_semantics=("parallel", "arbitrary"),
            vmem_limit_bytes=VMEM_LIMIT,
        ),
        cost_estimate=pl.CostEstimate(flops=flops, transcendentals=0,
                                      bytes_accessed=bytes_accessed),
    )(xr, w, fc_w_p, fc_b_p)


def dcl_loss_pallas(h1, h2, u_prev_row, gamma, gammad, T):
    B, D = h1.shape
    denom = 2.0 * (B - 1)
    # Host-folded scalars (review: fold coefficients, avoid in-kernel divides).
    scal = jnp.array([1.0 - gamma - gammad, (gamma + gammad) / denom], jnp.float32)
    kernel = functools.partial(_dcl_loss_kernel, inv_T=1.0 / float(T),
                               inv_denom=1.0 / denom, inv_B=1.0 / float(B))
    flops = 2 * 2 * (2 * B) * B * D
    transcendentals = 2 * (2 * B) * B
    bytes_accessed = (2 * B * D + 2 * B + 1) * 4

    loss, u_new = pl.pallas_call(
        kernel,
        out_shape=(jax.ShapeDtypeStruct((1, 1), jnp.float32),
                   jax.ShapeDtypeStruct((1, B), jnp.float32)),
        in_specs=[_SMEM, _VMEM, _VMEM, _VMEM],
        out_specs=(_VMEM, _VMEM),
        compiler_params=pltpu.CompilerParams(vmem_limit_bytes=VMEM_LIMIT),
        cost_estimate=pl.CostEstimate(flops=flops,
                                      transcendentals=transcendentals,
                                      bytes_accessed=bytes_accessed),
    )(scal, h1, h2, u_prev_row)
    return loss[0, 0], u_new


# --------------------------------- Module ----------------------------------- #

class SimCLRPallas:
    def __init__(self, key, dim=256, mlp_dim=128, T=1.0, loss_type='dcl', N=64):
        self.T = T
        self.N = N
        self.loss_type = loss_type
        k1, k2, k3 = jax.random.split(key, 3)
        # Deterministic synthetic parameters (shapes follow the module).
        self.conv1_w = 0.1 * jax.random.normal(k1, (64, 3, 3, 3), jnp.float32)   # (O, I, kH, kW)
        self.fc_w = 0.1 * jax.random.normal(k2, (64, mlp_dim), jnp.float32)      # encoder fc -> num_classes=mlp_dim
        self.fc_b = 0.1 * jax.random.normal(k3, (1, mlp_dim), jnp.float32)
        # _build_projector_and_predictor_mlps is `pass` in the reference -> no projector params.
        if loss_type == 'dcl':
            self.u = jnp.zeros((N, 1), jnp.float32)

    def base_encoder(self, x_nchw):
        return encoder_forward_pallas(x_nchw, self.conv1_w, self.fc_w, self.fc_b)

    def forward(self, x1, x2, index, gamma, i, epoch):
        h1 = self.base_encoder(x1)
        h2 = self.base_encoder(x2)
        total_iter = i + epoch * 782
        gammad = 1.0 / (total_iter + 3)
        # Matches the given module: u[index] <- u1 + u2, denom = 2*(batch-1).
        u_prev = self.u[index].reshape(1, -1)                 # (1, B) lane-dense gather (glue)
        loss, u_new = dcl_loss_pallas(h1, h2, u_prev, gamma, gammad, self.T)
        self.u = self.u.at[index].set(u_new.reshape(-1, 1))   # functional stand-in for in-place update
        return loss


if __name__ == "__main__":
    key = jax.random.PRNGKey(0)
    kx1, kx2, kmod = jax.random.split(key, 3)

    B, C, H, W = 8, 3, 16, 16
    x1 = jax.random.normal(kx1, (B, C, H, W), jnp.float32)
    x2 = jax.random.normal(kx2, (B, C, H, W), jnp.float32)
    index = jnp.arange(B, dtype=jnp.int32)

    model = SimCLRPallas(kmod, dim=256, mlp_dim=128, T=1.0, loss_type='dcl', N=64)
    loss = model.forward(x1, x2, index, gamma=0.99, i=0, epoch=0)
    loss = jax.block_until_ready(loss)
    assert jnp.isfinite(loss)
    print("KERNEL_OK")
</pallas_src>

<mosaic_0001>
module attributes {stable_mosaic.version = 11 : i64} {
  func.func @_encoder_kernel(%arg0: i32, %arg1: i32, %arg2: memref<8x8x18x9xbf16, #tpu.memory_space<vmem>>, %arg3: memref<3x9x128xbf16, #tpu.memory_space<vmem>>, %arg4: memref<128x128xf32, #tpu.memory_space<vmem>>, %arg5: memref<1x128xf32, #tpu.memory_space<vmem>>, %arg6: memref<8x128xf32, #tpu.memory_space<vmem>>, %arg7: memref<8x128xf32, #tpu.memory_space<vmem>>) attributes {dimension_semantics = [#tpu.dimension_semantics<parallel>, #tpu.dimension_semantics<arbitrary>], iteration_bounds = array<i64: 1, 2>, scalar_prefetch = 0 : i64, scratch_operands = 1 : i64, tpu.core_type = #tpu.core_type<tc>, window_params = [{transform_indices = @transform_0, window_bounds = array<i64: 8, 8, 18, 9>}, {pipeline_mode = #tpu.pipeline_mode<synchronous>, transform_indices = @transform_1, window_bounds = array<i64: 3, 9, 128>}, {pipeline_mode = #tpu.pipeline_mode<synchronous>, transform_indices = @transform_2, window_bounds = array<i64: 128, 128>}, {pipeline_mode = #tpu.pipeline_mode<synchronous>, transform_indices = @transform_3, window_bounds = array<i64: 1, 128>}, {transform_indices = @transform_4, window_bounds = array<i64: 8, 128>}]} {
    %c0_i32 = arith.constant 0 : i32
    %0 = arith.cmpi eq, %arg1, %c0_i32 : i32
    %1 = arith.extui %0 : i1 to i32
    %c0_i32_0 = arith.constant 0 : i32
    %2 = arith.cmpi ne, %1, %c0_i32_0 : i32
    scf.if %2 {
      %cst_29 = arith.constant 0.000000e+00 : f32
      %32 = vector.broadcast %cst_29 : f32 to vector<8x128xf32>
      %c0_30 = arith.constant 0 : index
      %c0_31 = arith.constant 0 : index
      %33 = vector.load %arg7[%c0_30, %c0_31] : memref<8x128xf32, #tpu.memory_space<vmem>>, vector<8x128xf32>
      tpu.vector_store %arg7[%c0_30, %c0_31], %32 {strides = array<i32>} : memref<8x128xf32, #tpu.memory_space<vmem>>, vector<8x128xf32>,
    } else {
    }
    %cst = arith.constant 0.000000e+00 : f32
    %3 = vector.broadcast %cst : f32 to vector<1024x128xf32>
    %c0 = arith.constant 0 : index
    %c0_1 = arith.constant 0 : index
    %c0_2 = arith.constant 0 : index
    %c0_3 = arith.constant 0 : index
    %4 = vector.load %arg2[%c0, %c0_1, %c0_2, %c0_3] : memref<8x8x18x9xbf16, #tpu.memory_space<vmem>>, vector<8x8x16x9xbf16>
    %5 = vector.shape_cast %4 : vector<8x8x16x9xbf16> to vector<1024x9xbf16>
    %c0_4 = arith.constant 0 : index
    %c0_5 = arith.constant 0 : index
    %c0_6 = arith.constant 0 : index
    %6 = vector.load %arg3[%c0_4, %c0_5, %c0_6] : memref<3x9x128xbf16, #tpu.memory_space<vmem>>, vector<1x9x128xbf16>
    %7 = vector.shape_cast %6 : vector<1x9x128xbf16> to vector<9x128xbf16>
    %cst_7 = arith.constant dense<0.000000e+00> : vector<1024x128xf32>
    %8 = tpu.matmul %5, %7, %cst_7 {dimension_numbers = #tpu.dot_dimension_numbers<[1], [0], [0], [1], [0, 0, 1, 1], [], []>} : vector<1024x9xbf16>, vector<9x128xbf16>, vector<1024x128xf32> -> vector<1024x128xf32>
    %9 = arith.addf %3, %8 : vector<1024x128xf32>
    %c0_8 = arith.constant 0 : index
    %c0_9 = arith.constant 0 : index
    %c1 = arith.constant 1 : index
    %c0_10 = arith.constant 0 : index
    %10 = vector.load %arg2[%c0_8, %c0_9, %c1, %c0_10] : memref<8x8x18x9xbf16, #tpu.memory_space<vmem>>, vector<8x8x16x9xbf16>
    %11 = vector.shape_cast %10 : vector<8x8x16x9xbf16> to vector<1024x9xbf16>
    %c1_11 = arith.constant 1 : index
    %c0_12 = arith.constant 0 : index
    %c0_13 = arith.constant 0 : index
    %12 = vector.load %arg3[%c1_11, %c0_12, %c0_13] : memref<3x9x128xbf16, #tpu.memory_space<vmem>>, vector<1x9x128xbf16>
    %13 = vector.shape_cast %12 : vector<1x9x128xbf16> to vector<9x128xbf16>
    %cst_14 = arith.constant dense<0.000000e+00> : vector<1024x128xf32>
    %14 = tpu.matmul %11, %13, %cst_14 {dimension_numbers = #tpu.dot_dimension_numbers<[1], [0], [0], [1], [0, 0, 1, 1], [], []>} : vector<1024x9xbf16>, vector<9x128xbf16>, vector<1024x128xf32> -> vector<1024x128xf32>
    %15 = arith.addf %9, %14 : vector<1024x128xf32>
    %c0_15 = arith.constant 0 : index
    %c0_16 = arith.constant 0 : index
    %c2 = arith.constant 2 : index
    %c0_17 = arith.constant 0 : index
    %16 = vector.load %arg2[%c0_15, %c0_16, %c2, %c0_17] : memref<8x8x18x9xbf16, #tpu.memory_space<vmem>>, vector<8x8x16x9xbf16>
    %17 = vector.shape_cast %16 : vector<8x8x16x9xbf16> to vector<1024x9xbf16>
    %c2_18 = arith.constant 2 : index
    %c0_19 = arith.constant 0 : index
    %c0_20 = arith.constant 0 : index
    %18 = vector.load %arg3[%c2_18, %c0_19, %c0_20] : memref<3x9x128xbf16, #tpu.memory_space<vmem>>, vector<1x9x128xbf16>
    %19 = vector.shape_cast %18 : vector<1x9x128xbf16> to vector<9x128xbf16>
    %cst_21 = arith.constant dense<0.000000e+00> : vector<1024x128xf32>
    %20 = tpu.matmul %17, %19, %cst_21 {dimension_numbers = #tpu.dot_dimension_numbers<[1], [0], [0], [1], [0, 0, 1, 1], [], []>} : vector<1024x9xbf16>, vector<9x128xbf16>, vector<1024x128xf32> -> vector<1024x128xf32>
    %21 = arith.addf %15, %20 : vector<1024x128xf32>
    %cst_22 = arith.constant 0.000000e+00 : f32
    %22 = vector.broadcast %cst_22 : f32 to vector<1024x128xf32>
    %23 = arith.maximumf %21, %22 : vector<1024x128xf32>
    %c0_23 = arith.constant 0 : index
    %c0_24 = arith.constant 0 : index
    %24 = vector.load %arg7[%c0_23, %c0_24] : memref<8x128xf32, #tpu.memory_space<vmem>>, vector<8x128xf32>
    %25 = vector.shape_cast %23 : vector<1024x128xf32> to vector<8x128x128xf32>
    %cst_25 = arith.constant dense<0.000000e+00> : vector<8x128xf32>
    %26 = vector.multi_reduction <add>, %25, %cst_25 [1] : vector<8x128x128xf32> to vector<8x128xf32>
    %27 = arith.addf %24, %26 : vector<8x128xf32>
    %c0_26 = arith.constant 0 : index
    %c0_27 = arith.constant 0 : index
    %28 = vector.load %arg7[%c0_26, %c0_27] : memref<8x128xf32, #tpu.memory_space<vmem>>, vector<8x128xf32>
    tpu.vector_store %arg7[%c0_26, %c0_27], %27 {strides = array<i32>} : memref<8x128xf32, #tpu.memory_space<vmem>>, vector<8x128xf32>,
    %c1_i32 = arith.constant 1 : i32
    %29 = arith.cmpi eq, %arg1, %c1_i32 : i32
    %30 = arith.extui %29 : i1 to i32
    %c0_i32_28 = arith.constant 0 : i32
    %31 = arith.cmpi ne, %30, %c0_i32_28 : i32
    scf.if %31 {
      %c0_29 = arith.constant 0 : index
      %c0_30 = arith.constant 0 : index
      %32 = vector.load %arg7[%c0_29, %c0_30] : memref<8x128xf32, #tpu.memory_space<vmem>>, vector<8x128xf32>
      %cst_31 = arith.constant 3.906250e-03 : f32
      %33 = vector.broadcast %cst_31 : f32 to vector<8x128xf32>
      %34 = arith.mulf %32, %33 : vector<8x128xf32>
      %c0_32 = arith.constant 0 : index
      %c0_33 = arith.constant 0 : index
      %35 = vector.load %arg4[%c0_32, %c0_33] : memref<128x128xf32, #tpu.memory_space<vmem>>, vector<128x128xf32>
      %cst_34 = arith.constant dense<0.000000e+00> : vector<8x128xf32>
      %36 = tpu.matmul %34, %35, %cst_34 {dimension_numbers = #tpu.dot_dimension_numbers<[1], [0], [0], [1], [0, 0, 1, 1], [], []>} : vector<8x128xf32>, vector<128x128xf32>, vector<8x128xf32> -> vector<8x128xf32>
      %c0_35 = arith.constant 0 : index
      %c0_36 = arith.constant 0 : index
      %37 = vector.load %arg5[%c0_35, %c0_36] : memref<1x128xf32, #tpu.memory_space<vmem>>, vector<1x128xf32>
      %38 = vector.broadcast %37 : vector<1x128xf32> to vector<8x128xf32>
      %39 = arith.addf %36, %38 : vector<8x128xf32>
      %c0_37 = arith.constant 0 : index
      %c0_38 = arith.constant 0 : index
      %40 = vector.load %arg6[%c0_37, %c0_38] : memref<8x128xf32, #tpu.memory_space<vmem>>, vector<8x128xf32>
      tpu.vector_store %arg6[%c0_37, %c0_38], %39 {strides = array<i32>} : memref<8x128xf32, #tpu.memory_space<vmem>>, vector<8x128xf32>,
    } else {
    }
    return
  }
  func.func @transform_0(%arg0: i32, %arg1: i32) -> (i32, i32, i32, i32) {
    %c0_i32 = arith.constant 0 : i32
    %c0_i32_0 = arith.constant 0 : i32
    %c0_i32_1 = arith.constant 0 : i32
    return %arg0, %arg1, %c0_i32, %c0_i32_0 : i32, i32, i32, i32
  }
  func.func @transform_1(%arg0: i32, %arg1: i32) -> (i32, i32, i32) {
    %c0_i32 = arith.constant 0 : i32
    %c0_i32_0 = arith.constant 0 : i32
    %c0_i32_1 = arith.constant 0 : i32
    %c0_i32_2 = arith.constant 0 : i32
    return %c0_i32, %c0_i32_0, %c0_i32_1 : i32, i32, i32
  }
  func.func @transform_2(%arg0: i32, %arg1: i32) -> (i32, i32) {
    %c0_i32 = arith.constant 0 : i32
    %c0_i32_0 = arith.constant 0 : i32
    %c0_i32_1 = arith.constant 0 : i32
    return %c0_i32, %c0_i32_0 : i32, i32
  }
  func.func @transform_3(%arg0: i32, %arg1: i32) -> (i32, i32) {
    %c0_i32 = arith.constant 0 : i32
    %c0_i32_0 = arith.constant 0 : i32
    %c0_i32_1 = arith.constant 0 : i32
    return %c0_i32, %c0_i32_0 : i32, i32
  }
  func.func @transform_4(%arg0: i32, %arg1: i32) -> (i32, i32) {
    %c0_i32 = arith.constant 0 : i32
    %c0_i32_0 = arith.constant 0 : i32
    return %arg0, %c0_i32 : i32, i32
  }
}

</mosaic_0001>

<llo_original>
// kernel: tpu_custom_call.1
$region0: #{tpu_custom_call.1}
  #allocation0 [shape = 'u32[]', space=smem, size = 0x4, offset = 0x4, fixed_abs, tag = 'smem constant byte address 0x4 - core index']
  #allocation1 [shape = 'u32[144,128]{1,0:T(1,128)}', space=vmem, size = 0x12000, scoped, tag = 'internal scratch']
  #allocation2 [shape = 'f32[8,128]{1,0:T(8,128)}', space=vmem, size = 0x1000, scoped, tag = 'scratch operand']
  %s0 = inlined_call_operand.vmem [shape: bf16[8,16,18,9], index: 0, kind: input, shape index: {}]
  %s1 = inlined_call_operand.vmem [shape: bf16[3,9,128], index: 1, kind: input, shape index: {}]
  %s2 = inlined_call_operand.vmem [shape: f32[128,128], index: 2, kind: input, shape index: {}]
  %s3 = inlined_call_operand.vmem [shape: f32[1,128], index: 3, kind: input, shape index: {}]
  %s4 = inlined_call_operand.hbm [shape: f32[8,128], index: 4, kind: output, shape index: {}]
  %s5 = sld [smem:[#allocation0]]
  $region98: #{tpu_custom_call.1} parent=0
    _
  %s7 = ssub.s32 1, %s5
  %s8 = scalar_select 0, %s7, %s5
  $region1: #{tpu_custom_call.1} parent=0
    #allocation3 [shape = 'u8[786432]{0}', space=vmem, size = 0xc0000, scoped, tag = 'input window, operand 0']
    #allocation4 [shape = 'u8[4096]{0}', space=vmem, size = 0x1000, scoped, tag = 'output window, operand 0, single buffered']
    #allocation5 [shape = 's32[2]{0}', space=sflag, size = 0x8, scoped, tag = 'scoped memory for tpu_custom_call.1']
    %9 = vsyncpa [#allocation5], 0
    loop: start=0, step=1, limit=4
    $region2: #{tpu_custom_call.1} parent=1 // loop_pre_header
      _
    $region3: #{tpu_custom_call.1} parent=1 // loop_header
      %s11 = sphi 0, %s15
      %p12 = scmp.ge.s32.totalorder %s11, 4
      %s18 = sphi 0, %s30
      %s19 = sphi 0, %s26
      %s20 = sphi 0, %s18
      %s21 = sphi 0, %s19
      %s22 = sphi 0, %s20
      %s23 = sphi 0, %s21
      %s35 = sphi 0, %s37
      %s38 = sphi 0, %s35
      %s39 = sphi 0, %s38
      %s55 = sphi 0, %s39
      %s59 = sphi 0, %s59
      %s61 = sphi 0, %s59
      %s62 = sphi 0, %s61
      %s76 = sphi 0, %s62
      %s80 = sphi 0, %s80
      %s82 = sphi 0, %s80
      %s83 = sphi 0, %s82
      %s97 = sphi 0, %s83
      %s101 = sphi 0, %s101
      %s103 = sphi 0, %s101
      %s104 = sphi 0, %s103
      %s118 = sphi 0, %s104
      %s124 = sphi 0, %s126
      %s127 = sphi 0, %s124
      %s128 = sphi 0, %s127
      %s144 = sphi 0, %s128
    $region4: #{tpu_custom_call.1} parent=1 // loop_header_branch
      %14 = sbr.rel (%p12) target = $region8
    $region5: #{tpu_custom_call.1} parent=1 // loop_body
      %s16 = ssub.s32 %s11, 1
      %s17 = ssub.s32 %s11, 2
      %s24 = sadd.s32 1, %s19
      %p25 = scmp.ge.s32.totalorder %s24, 2
      %s26 = scalar_select %p25, 0, %s24
      %s27 = sadd.s32 1, %s18
      %s28 = scalar_select %p25, %s27, %s18
      %p29 = scmp.ge.s32.totalorder %s28, 1
      %s30 = scalar_select %p29, 0, %s28
      %s31 = ssub.s32 %s18, %s30
      %s32 = ssub.s32 %s19, %s26
      %s33 = sor.u32 %s31, %s32
      %p34 = scmp.eq.s32.totalorder %s33, 0
      %s36 = sadd.s32 %s35, 1
      %s37 = scalar_select %p34, %s35, %s36
      %p40 = pneg %p34
      %p41 = scmp.eq.s32.totalorder %s11, 1
      %p42 = por %p40, %p41
      %p43 = scmp.ne.s32.totalorder %s35, %s38
      %p44 = scmp.eq.s32.totalorder %s11, 0
      %p45 = por %p43, %p44
      %p46 = scmp.ne.s32.totalorder %s35, %s38
      %p47 = scmp.eq.s32.totalorder %s16, 1
      %p48 = por %p46, %p47
      %p49 = scmp.ne.s32.totalorder %s38, %s39
      %p50 = scmp.eq.s32.totalorder %s16, 0
      %p51 = por %p49, %p50
      %p52 = scmp.ne.s32.totalorder %s38, %s39
      %p53 = scmp.eq.s32.totalorder %s17, 1
      %p54 = por %p52, %p53
      %p56 = scmp.ne.s32.totalorder %s39, %s55
      %p57 = scmp.eq.s32.totalorder %s17, 0
      %p58 = por %p56, %p57
      %s60 = sadd.s32 %s59, 1
      %p63 = scmp.eq.s32.totalorder %s11, 1
      %p64 = scmp.ne.s32.totalorder %s59, %s61
      %p65 = scmp.eq.s32.totalorder %s11, 0
      %p66 = por %p64, %p65
      %p67 = scmp.ne.s32.totalorder %s59, %s61
      %p68 = scmp.eq.s32.totalorder %s16, 1
      %p69 = por %p67, %p68
      %p70 = scmp.ne.s32.totalorder %s61, %s62
      %p71 = scmp.eq.s32.totalorder %s16, 0
      %p72 = por %p70, %p71
      %p73 = scmp.ne.s32.totalorder %s61, %s62
      %p74 = scmp.eq.s32.totalorder %s17, 1
      %p75 = por %p73, %p74
      %p77 = scmp.ne.s32.totalorder %s62, %s76
      %p78 = scmp.eq.s32.totalorder %s17, 0
      %p79 = por %p77, %p78
      %s81 = sadd.s32 %s80, 1
      %p84 = scmp.eq.s32.totalorder %s11, 1
      %p85 = scmp.ne.s32.totalorder %s80, %s82
      %p86 = scmp.eq.s32.totalorder %s11, 0
      %p87 = por %p85, %p86
      %p88 = scmp.ne.s32.totalorder %s80, %s82
      %p89 = scmp.eq.s32.totalorder %s16, 1
      %p90 = por %p88, %p89
      %p91 = scmp.ne.s32.totalorder %s82, %s83
      %p92 = scmp.eq.s32.totalorder %s16, 0
      %p93 = por %p91, %p92
      %p94 = scmp.ne.s32.totalorder %s82, %s83
      %p95 = scmp.eq.s32.totalorder %s17, 1
      %p96 = por %p94, %p95
      %p98 = scmp.ne.s32.totalorder %s83, %s97
      %p99 = scmp.eq.s32.totalorder %s17, 0
      %p100 = por %p98, %p99
      %s102 = sadd.s32 %s101, 1
      %p105 = scmp.eq.s32.totalorder %s11, 1
      %p106 = scmp.ne.s32.totalorder %s101, %s103
      %p107 = scmp.eq.s32.totalorder %s11, 0
      %p108 = por %p106, %p107
      %p109 = scmp.ne.s32.totalorder %s101, %s103
      %p110 = scmp.eq.s32.totalorder %s16, 1
      %p111 = por %p109, %p110
      %p112 = scmp.ne.s32.totalorder %s103, %s104
      %p113 = scmp.eq.s32.totalorder %s16, 0
      %p114 = por %p112, %p113
      %p115 = scmp.ne.s32.totalorder %s103, %s104
      %p116 = scmp.eq.s32.totalorder %s17, 1
      %p117 = por %p115, %p116
      %p119 = scmp.ne.s32.totalorder %s104, %s118
      %p120 = scmp.eq.s32.totalorder %s17, 0
      %p121 = por %p119, %p120
      %s122 = ssub.s32 %s18, %s30
      %p123 = scmp.eq.s32.totalorder %s122, 0
      %s125 = sadd.s32 %s124, 1
      %s126 = scalar_select %p123, %s124, %s125
      %p129 = pneg %p123
      %p130 = scmp.eq.s32.totalorder %s11, 1
      %p131 = por %p129, %p130
      %p132 = scmp.ne.s32.totalorder %s124, %s127
      %p133 = scmp.eq.s32.totalorder %s11, 0
      %p134 = por %p132, %p133
      %p135 = scmp.ne.s32.totalorder %s124, %s127
      %p136 = scmp.eq.s32.totalorder %s16, 1
      %p137 = por %p135, %p136
      %p138 = scmp.ne.s32.totalorder %s127, %s128
      %p139 = scmp.eq.s32.totalorder %s16, 0
      %p140 = por %p138, %p139
      %p141 = scmp.ne.s32.totalorder %s127, %s128
      %p142 = scmp.eq.s32.totalorder %s17, 1
      %p143 = por %p141, %p142
      %p145 = scmp.ne.s32.totalorder %s128, %s144
      %p146 = scmp.eq.s32.totalorder %s17, 0
      %p147 = por %p145, %p146
      %p148 = scmp.le.s32.totalorder 1, %s11
      %p149 = scmp.lt.s32.totalorder %s11, 3
      %p150 = pnand %p148, %p149
      %p151 = pneg %p150
      // Predicated region
      $region9: #{tpu_custom_call.1} parent=5 // pred_check
        _
      $region10: #{tpu_custom_call.1} parent=5 // pred_check_branch
        %153 = sbr.rel (%p150) target = $region12
      $region11: #{tpu_custom_call.1} parent=5 // pred_region
        %s154 = ssub.s32 %s11, 1
        // Predicated region
        $region13: #{tpu_custom_call.1} parent=11 // pred_check
          %p155 = pneg %p72
        $region14: #{tpu_custom_call.1} parent=11 // pred_check_branch
          %157 = sbr.rel (%p155) target = $region16
        $region15: #{tpu_custom_call.1} parent=11 // pred_region
          _
        $region16: #{tpu_custom_call.1} parent=11 // pred_fallthru
          _
        // Predicated region
        $region17: #{tpu_custom_call.1} parent=11 // pred_check
          %p158 = pneg %p93
        $region18: #{tpu_custom_call.1} parent=11 // pred_check_branch
          %160 = sbr.rel (%p158) target = $region20
        $region19: #{tpu_custom_call.1} parent=11 // pred_region
          _
        $region20: #{tpu_custom_call.1} parent=11 // pred_fallthru
          _
        // Predicated region
        $region21: #{tpu_custom_call.1} parent=11 // pred_check
          %p161 = pneg %p114
        $region22: #{tpu_custom_call.1} parent=11 // pred_check_branch
          %163 = sbr.rel (%p161) target = $region24
        $region23: #{tpu_custom_call.1} parent=11 // pred_region
          _
        $region24: #{tpu_custom_call.1} parent=11 // pred_fallthru
          _
      $region12: #{tpu_custom_call.1} parent=5 // pred_fallthru
        _
      %p164 = scmp.lt.s32.totalorder %s11, 2
      // Predicated region
      $region25: #{tpu_custom_call.1} parent=5 // pred_check
        %p165 = pneg %p164
      $region26: #{tpu_custom_call.1} parent=5 // pred_check_branch
        %167 = sbr.rel (%p165) target = $region28
      $region27: #{tpu_custom_call.1} parent=5 // pred_region
        // Predicated region
        $region29: #{tpu_custom_call.1} parent=27 // pred_check
          %p168 = pneg %p45
        $region30: #{tpu_custom_call.1} parent=27 // pred_check_branch
          %170 = sbr.rel (%p168) target = $region32
        $region31: #{tpu_custom_call.1} parent=27 // pred_region
          %s171 = sand.u32 %s35, 1
          %s172 = sand.u32 %s35, 1
          %s173 = smul.addr %s172, 768
          %s174 = scalar_lea.vmem [#allocation3], %s173
          %s175 = smul.u32 8, %s18
          %s176 = smul.u32 8, %s19
          %s177 = smul.addr %s176, 3
          %s178 = smul.addr %s175, 48
          %s179 = sadd.s32 %s177, %s178
          %s180 = smul.addr %s179, 4
          %s181 = scalar_lea.vmem %s0, %s180
          // Predicated region
          $region33: #{tpu_custom_call.1} parent=31 // pred_check
            _
          $region34: #{tpu_custom_call.1} parent=31 // pred_check_branch
            %183 = sbr.rel (0) target = $region36
          $region35: #{tpu_custom_call.1} parent=31 // pred_region
            // Predicated region
            $region37: #{tpu_custom_call.1} parent=35 // pred_check
              _
            $region38: #{tpu_custom_call.1} parent=35 // pred_check_branch
              %185 = sbr.rel target = $region40
            $region39: #{tpu_custom_call.1} parent=35 // pred_region
              // Predicated region
              $region52: #{tpu_custom_call.1} parent=39 // pred_check
                _
              $region53: #{tpu_custom_call.1} parent=39 // pred_check_branch
                %582 = sbr.rel (0) target = $region55
              $region54: #{tpu_custom_call.1} parent=39 // pred_region
                loop: start=0, step=1, limit=1
                $region56: #{tpu_custom_call.1} parent=54 // loop_pre_header
                  _
                $region57: #{tpu_custom_call.1} parent=54 // loop_header
                  %s584 = sphi 0, %s588
                  %p585 = scmp.ge.s32.totalorder %s584, 1
                  %s589 = sphi %s181, %s181
                  %s590 = sphi %s174, %s174
                $region58: #{tpu_custom_call.1} parent=54 // loop_header_branch
                  %587 = sbr.rel (%p585) target = $region62
                $region59: #{tpu_custom_call.1} parent=54 // loop_body
                  _
                $region60: #{tpu_custom_call.1} parent=54 // loop_footer
                  %s588 = sadd.s32 1, %s584
                $region61: #{tpu_custom_call.1} parent=54 // loop_footer_branch
                  %583 = sbr.rel target = $region57
                $region62: #{tpu_custom_call.1} parent=54 // loop_exit
                  _
                loop: start=0, step=1, limit=1
                $region63: #{tpu_custom_call.1} parent=54 // loop_pre_header
                  _
                $region64: #{tpu_custom_call.1} parent=54 // loop_header
                  %s593 = sphi 0, %s597
                  %p594 = scmp.ge.s32.totalorder %s593, 1
                  %s598 = sphi %s181, %s181
                  %s599 = sphi %s174, %s174
                $region65: #{tpu_custom_call.1} parent=54 // loop_header_branch
                  %596 = sbr.rel (%p594) target = $region69
                $region66: #{tpu_custom_call.1} parent=54 // loop_body
                  %v600 = vld [vmem:[%s598] sm:$0xf]
                  %601 = vst [vmem:[%s599] sm:$0xf] %v600
                  %v602 = vld [vmem:[%s598 + $0x4] sm:$0xf]
                  %603 = vst [vmem:[%s599 + $0x4] sm:$0xf] %v602
                  %v604 = vld [vmem:[%s598 + $0x8] sm:$0xf]
                  %605 = vst [vmem:[%s599 + $0x8] sm:$0xf] %v604
                  %v606 = vld [vmem:[%s598 + $0xc] sm:$0xf]
                  %607 = vst [vmem:[%s599 + $0xc] sm:$0xf] %v606
                  %v608 = vld [vmem:[%s598 + $0x10] sm:$0xf]
                  %609 = vst [vmem:[%s599 + $0x10] sm:$0xf] %v608
                  %v610 = vld [vmem:[%s598 + $0x14] sm:$0xf]
                  %611 = vst [vmem:[%s599 + $0x14] sm:$0xf] %v610
                  %v612 = vld [vmem:[%s598 + $0x18] sm:$0xf]
                  %613 = vst [vmem:[%s599 + $0x18] sm:$0xf] %v612
                  %v614 = vld [vmem:[%s598 + $0x1c] sm:$0xf]
                  %615 = vst [vmem:[%s599 + $0x1c] sm:$0xf] %v614
                  %v616 = vld [vmem:[%s598 + $0x20] sm:$0xf]
                  %617 = vst [vmem:[%s599 + $0x20] sm:$0xf] %v616
                  %v618 = vld [vmem:[%s598 + $0x24] sm:$0xf]
                  %619 = vst [vmem:[%s599 + $0x24] sm:$0xf] %v618
                  %v620 = vld [vmem:[%s598 + $0x28] sm:$0xf]
                  %621 = vst [vmem:[%s599 + $0x28] sm:$0xf] %v620
                  %v622 = vld [vmem:[%s598 + $0x2c] sm:$0xf]
                  %623 = vst [vmem:[%s599 + $0x2c] sm:$0xf] %v622
                  %v624 = vld [vmem:[%s598 + $0x30] sm:$0xf]
                  %625 = vst [vmem:[%s599 + $0x30] sm:$0xf] %v624
                  %v626 = vld [vmem:[%s598 + $0x34] sm:$0xf]
                  %627 = vst [vmem:[%s599 + $0x34] sm:$0xf] %v626
                  %v628 = vld [vmem:[%s598 + $0x38] sm:$0xf]
                  %629 = vst [vmem:[%s599 + $0x38] sm:$0xf] %v628
                  %v630 = vld [vmem:[%s598 + $0x3c] sm:$0xf]
                  %631 = vst [vmem:[%s599 + $0x3c] sm:$0xf] %v630
                  %v632 = vld [vmem:[%s598 + $0x40] sm:$0xf]
                  %633 = vst [vmem:[%s599 + $0x40] sm:$0xf] %v632
                  %v634 = vld [vmem:[%s598 + $0x44] sm:$0xf]
                  %635 = vst [vmem:[%s599 + $0x44] sm:$0xf] %v634
                  %v636 = vld [vmem:[%s598 + $0x48] sm:$0xf]
                  %637 = vst [vmem:[%s599 + $0x48] sm:$0xf] %v636
                  %v638 = vld [vmem:[%s598 + $0x4c] sm:$0xf]
                  %639 = vst [vmem:[%s599 + $0x4c] sm:$0xf] %v638
                  %v640 = vld [vmem:[%s598 + $0x50] sm:$0xf]
                  %641 = vst [vmem:[%s599 + $0x50] sm:$0xf] %v640
                  %v642 = vld [vmem:[%s598 + $0x54] sm:$0xf]
                  %643 = vst [vmem:[%s599 + $0x54] sm:$0xf] %v642
                  %v644 = vld [vmem:[%s598 + $0x58] sm:$0xf]
                  %645 = vst [vmem:[%s599 + $0x58] sm:$0xf] %v644
                  %v646 = vld [vmem:[%s598 + $0x5c] sm:$0xf]
                  %647 = vst [vmem:[%s599 + $0x5c] sm:$0xf] %v646
                  %v648 = vld [vmem:[%s598 + $0xc0] sm:$0xf]
                  %649 = vst [vmem:[%s599 + $0x60] sm:$0xf] %v648
                  %v650 = vld [vmem:[%s598 + $0xc4] sm:$0xf]
                  %651 = vst [vmem:[%s599 + $0x64] sm:$0xf] %v650
                  %v652 = vld [vmem:[%s598 + $0xc8] sm:$0xf]
                  %653 = vst [vmem:[%s599 + $0x68] sm:$0xf] %v652
                  %v654 = vld [vmem:[%s598 + $0xcc] sm:$0xf]
                  %655 = vst [vmem:[%s599 + $0x6c] sm:$0xf] %v654
                  %v656 = vld [vmem:[%s598 + $0xd0] sm:$0xf]
                  %657 = vst [vmem:[%s599 + $0x70] sm:$0xf] %v656
                  %v658 = vld [vmem:[%s598 + $0xd4] sm:$0xf]
                  %659 = vst [vmem:[%s599 + $0x74] sm:$0xf] %v658
                  %v660 = vld [vmem:[%s598 + $0xd8] sm:$0xf]
                  %661 = vst [vmem:[%s599 + $0x78] sm:$0xf] %v660
                  %v662 = vld [vmem:[%s598 + $0xdc] sm:$0xf]
                  %663 = vst [vmem:[%s599 + $0x7c] sm:$0xf] %v662
                  %v664 = vld [vmem:[%s598 + $0xe0] sm:$0xf]
                  %665 = vst [vmem:[%s599 + $0x80] sm:$0xf] %v664
                  %v666 = vld [vmem:[%s598 + $0xe4] sm:$0xf]
                  %667 = vst [vmem:[%s599 + $0x84] sm:$0xf] %v666
                  %v668 = vld [vmem:[%s598 + $0xe8] sm:$0xf]
                  %669 = vst [vmem:[%s599 + $0x88] sm:$0xf] %v668
                  %v670 = vld [vmem:[%s598 + $0xec] sm:$0xf]
                  %671 = vst [vmem:[%s599 + $0x8c] sm:$0xf] %v670
                  %v672 = vld [vmem:[%s598 + $0xf0] sm:$0xf]
                  %673 = vst [vmem:[%s599 + $0x90] sm:$0xf] %v672
                  %v674 = vld [vmem:[%s598 + $0xf4] sm:$0xf]
                  %675 = vst [vmem:[%s599 + $0x94] sm:$0xf] %v674
                  %v676 = vld [vmem:[%s598 + $0xf8] sm:$0xf]
                  %677 = vst [vmem:[%s599 + $0x98] sm:$0xf] %v676
                  %v678 = vld [vmem:[%s598 + $0xfc] sm:$0xf]
                  %679 = vst [vmem:[%s599 + $0x9c] sm:$0xf] %v678
                  %v680 = vld [vmem:[%s598 + $0x100] sm:$0xf]
                  %681 = vst [vmem:[%s599 + $0xa0] sm:$0xf] %v680
                  %v682 = vld [vmem:[%s598 + $0x104] sm:$0xf]
                  %683 = vst [vmem:[%s599 + $0xa4] sm:$0xf] %v682
                  %v684 = vld [vmem:[%s598 + $0x108] sm:$0xf]
                  %685 = vst [vmem:[%s599 + $0xa8] sm:$0xf] %v684
                  %v686 = vld [vmem:[%s598 + $0x10c] sm:$0xf]
                  %687 = vst [vmem:[%s599 + $0xac] sm:$0xf] %v686
                  %v688 = vld [vmem:[%s598 + $0x110] sm:$0xf]
                  %689 = vst [vmem:[%s599 + $0xb0] sm:$0xf] %v688
                  %v690 = vld [vmem:[%s598 + $0x114] sm:$0xf]
                  %691 = vst [vmem:[%s599 + $0xb4] sm:$0xf] %v690
                  %v692 = vld [vmem:[%s598 + $0x118] sm:$0xf]
                  %693 = vst [vmem:[%s599 + $0xb8] sm:$0xf] %v692
                  %v694 = vld [vmem:[%s598 + $0x11c] sm:$0xf]
                  %695 = vst [vmem:[%s599 + $0xbc] sm:$0xf] %v694
                  %v696 = vld [vmem:[%s598 + $0x180] sm:$0xf]
                  %697 = vst [vmem:[%s599 + $0xc0] sm:$0xf] %v696
                  %v698 = vld [vmem:[%s598 + $0x184] sm:$0xf]
                  %699 = vst [vmem:[%s599 + $0xc4] sm:$0xf] %v698
                  %v700 = vld [vmem:[%s598 + $0x188] sm:$0xf]
                  %701 = vst [vmem:[%s599 + $0xc8] sm:$0xf] %v700
                  %v702 = vld [vmem:[%s598 + $0x18c] sm:$0xf]
                  %703 = vst [vmem:[%s599 + $0xcc] sm:$0xf] %v702
                  %v704 = vld [vmem:[%s598 + $0x190] sm:$0xf]
                  %705 = vst [vmem:[%s599 + $0xd0] sm:$0xf] %v704
                  %v706 = vld [vmem:[%s598 + $0x194] sm:$0xf]
                  %707 = vst [vmem:[%s599 + $0xd4] sm:$0xf] %v706
                  %v708 = vld [vmem:[%s598 + $0x198] sm:$0xf]
                  %709 = vst [vmem:[%s599 + $0xd8] sm:$0xf] %v708
                  %v710 = vld [vmem:[%s598 + $0x19c] sm:$0xf]
                  %711 = vst [vmem:[%s599 + $0xdc] sm:$0xf] %v710
                  %v712 = vld [vmem:[%s598 + $0x1a0] sm:$0xf]
                  %713 = vst [vmem:[%s599 + $0xe0] sm:$0xf] %v712
                  %v714 = vld [vmem:[%s598 + $0x1a4] sm:$0xf]
                  %715 = vst [vmem:[%s599 + $0xe4] sm:$0xf] %v714
                  %v716 = vld [vmem:[%s598 + $0x1a8] sm:$0xf]
                  %717 = vst [vmem:[%s599 + $0xe8] sm:$0xf] %v716
                  %v718 = vld [vmem:[%s598 + $0x1ac] sm:$0xf]
                  %719 = vst [vmem:[%s599 + $0xec] sm:$0xf] %v718
                  %v720 = vld [vmem:[%s598 + $0x1b0] sm:$0xf]
                  %721 = vst [vmem:[%s599 + $0xf0] sm:$0xf] %v720
                  %v722 = vld [vmem:[%s598 + $0x1b4] sm:$0xf]
                  %723 = vst [vmem:[%s599 + $0xf4] sm:$0xf] %v722
                  %v724 = vld [vmem:[%s598 + $0x1b8] sm:$0xf]
                  %725 = vst [vmem:[%s599 + $0xf8] sm:$0xf] %v724
                  %v726 = vld [vmem:[%s598 + $0x1bc] sm:$0xf]
                  %727 = vst [vmem:[%s599 + $0xfc] sm:$0xf] %v726
                  %v728 = vld [vmem:[%s598 + $0x1c0] sm:$0xf]
                  %729 = vst [vmem:[%s599 + $0x100] sm:$0xf] %v728
                  %v730 = vld [vmem:[%s598 + $0x1c4] sm:$0xf]
                  %731 = vst [vmem:[%s599 + $0x104] sm:$0xf] %v730
                  %v732 = vld [vmem:[%s598 + $0x1c8] sm:$0xf]
                  %733 = vst [vmem:[%s599 + $0x108] sm:$0xf] %v732
                  %v734 = vld [vmem:[%s598 + $0x1cc] sm:$0xf]
                  %735 = vst [vmem:[%s599 + $0x10c] sm:$0xf] %v734
                  %v736 = vld [vmem:[%s598 + $0x1d0] sm:$0xf]
                  %737 = vst [vmem:[%s599 + $0x110] sm:$0xf] %v736
                  %v738 = vld [vmem:[%s598 + $0x1d4] sm:$0xf]
                  %739 = vst [vmem:[%s599 + $0x114] sm:$0xf] %v738
                  %v740 = vld [vmem:[%s598 + $0x1d8] sm:$0xf]
                  %741 = vst [vmem:[%s599 + $0x118] sm:$0xf] %v740
                  %v742 = vld [vmem:[%s598 + $0x1dc] sm:$0xf]
                  %743 = vst [vmem:[%s599 + $0x11c] sm:$0xf] %v742
                  %v744 = vld [vmem:[%s598 + $0x240] sm:$0xf]
                  %745 = vst [vmem:[%s599 + $0x120] sm:$0xf] %v744
                  %v746 = vld [vmem:[%s598 + $0x244] sm:$0xf]
                  %747 = vst [vmem:[%s599 + $0x124] sm:$0xf] %v746
                  %v748 = vld [vmem:[%s598 + $0x248] sm:$0xf]
                  %749 = vst [vmem:[%s599 + $0x128] sm:$0xf] %v748
                  %v750 = vld [vmem:[%s598 + $0x24c] sm:$0xf]
                  %751 = vst [vmem:[%s599 + $0x12c] sm:$0xf] %v750
                  %v752 = vld [vmem:[%s598 + $0x250] sm:$0xf]
                  %753 = vst [vmem:[%s599 + $0x130] sm:$0xf] %v752
                  %v754 = vld [vmem:[%s598 + $0x254] sm:$0xf]
                  %755 = vst [vmem:[%s599 + $0x134] sm:$0xf] %v754
                  %v756 = vld [vmem:[%s598 + $0x258] sm:$0xf]
                  %757 = vst [vmem:[%s599 + $0x138] sm:$0xf] %v756
                  %v758 = vld [vmem:[%s598 + $0x25c] sm:$0xf]
                  %759 = vst [vmem:[%s599 + $0x13c] sm:$0xf] %v758
                  %v760 = vld [vmem:[%s598 + $0x260] sm:$0xf]
                  %761 = vst [vmem:[%s599 + $0x140] sm:$0xf] %v760
                  %v762 = vld [vmem:[%s598 + $0x264] sm:$0xf]
                  %763 = vst [vmem:[%s599 + $0x144] sm:$0xf] %v762
                  %v764 = vld [vmem:[%s598 + $0x268] sm:$0xf]
                  %765 = vst [vmem:[%s599 + $0x148] sm:$0xf] %v764
                  %v766 = vld [vmem:[%s598 + $0x26c] sm:$0xf]
                  %767 = vst [vmem:[%s599 + $0x14c] sm:$0xf] %v766
                  %v768 = vld [vmem:[%s598 + $0x270] sm:$0xf]
                  %769 = vst [vmem:[%s599 + $0x150] sm:$0xf] %v768
                  %v770 = vld [vmem:[%s598 + $0x274] sm:$0xf]
                  %771 = vst [vmem:[%s599 + $0x154] sm:$0xf] %v770
                  %v772 = vld [vmem:[%s598 + $0x278] sm:$0xf]
                  %773 = vst [vmem:[%s599 + $0x158] sm:$0xf] %v772
                  %v774 = vld [vmem:[%s598 + $0x27c] sm:$0xf]
                  %775 = vst [vmem:[%s599 + $0x15c] sm:$0xf] %v774
                  %v776 = vld [vmem:[%s598 + $0x280] sm:$0xf]
                  %777 = vst [vmem:[%s599 + $0x160] sm:$0xf] %v776
                  %v778 = vld [vmem:[%s598 + $0x284] sm:$0xf]
                  %779 = vst [vmem:[%s599 + $0x164] sm:$0xf] %v778
                  %v780 = vld [vmem:[%s598 + $0x288] sm:$0xf]
                  %781 = vst [vmem:[%s599 + $0x168] sm:$0xf] %v780
                  %v782 = vld [vmem:[%s598 + $0x28c] sm:$0xf]
                  %783 = vst [vmem:[%s599 + $0x16c] sm:$0xf] %v782
                  %v784 = vld [vmem:[%s598 + $0x290] sm:$0xf]
                  %785 = vst [vmem:[%s599 + $0x170] sm:$0xf] %v784
                  %v786 = vld [vmem:[%s598 + $0x294] sm:$0xf]
                  %787 = vst [vmem:[%s599 + $0x174] sm:$0xf] %v786
                  %v788 = vld [vmem:[%s598 + $0x298] sm:$0xf]
                  %789 = vst [vmem:[%s599 + $0x178] sm:$0xf] %v788
                  %v790 = vld [vmem:[%s598 + $0x29c] sm:$0xf]
                  %791 = vst [vmem:[%s599 + $0x17c] sm:$0xf] %v790
                  %v792 = vld [vmem:[%s598 + $0x300] sm:$0xf]
                  %793 = vst [vmem:[%s599 + $0x180] sm:$0xf] %v792
                  %v794 = vld [vmem:[%s598 + $0x304] sm:$0xf]
                  %795 = vst [vmem:[%s599 + $0x184] sm:$0xf] %v794
                  %v796 = vld [vmem:[%s598 + $0x308] sm:$0xf]
                  %797 = vst [vmem:[%s599 + $0x188] sm:$0xf] %v796
                  %v798 = vld [vmem:[%s598 + $0x30c] sm:$0xf]
                  %799 = vst [vmem:[%s599 + $0x18c] sm:$0xf] %v798
                  %v800 = vld [vmem:[%s598 + $0x310] sm:$0xf]
                  %801 = vst [vmem:[%s599 + $0x190] sm:$0xf] %v800
                  %v802 = vld [vmem:[%s598 + $0x314] sm:$0xf]
                  %803 = vst [vmem:[%s599 + $0x194] sm:$0xf] %v802
                  %v804 = vld [vmem:[%s598 + $0x318] sm:$0xf]
                  %805 = vst [vmem:[%s599 + $0x198] sm:$0xf] %v804
                  %v806 = vld [vmem:[%s598 + $0x31c] sm:$0xf]
                  %807 = vst [vmem:[%s599 + $0x19c] sm:$0xf] %v806
                  %v808 = vld [vmem:[%s598 + $0x320] sm:$0xf]
                  %809 = vst [vmem:[%s599 + $0x1a0] sm:$0xf] %v808
                  %v810 = vld [vmem:[%s598 + $0x324] sm:$0xf]
                  %811 = vst [vmem:[%s599 + $0x1a4] sm:$0xf] %v810
                  %v812 = vld [vmem:[%s598 + $0x328] sm:$0xf]
                  %813 = vst [vmem:[%s599 + $0x1a8] sm:$0xf] %v812
                  %v814 = vld [vmem:[%s598 + $0x32c] sm:$0xf]
                  %815 = vst [vmem:[%s599 + $0x1ac] sm:$0xf] %v814
                  %v816 = vld [vmem:[%s598 + $0x330] sm:$0xf]
                  %817 = vst [vmem:[%s599 + $0x1b0] sm:$0xf] %v816
                  %v818 = vld [vmem:[%s598 + $0x334] sm:$0xf]
                  %819 = vst [vmem:[%s599 + $0x1b4] sm:$0xf] %v818
                  %v820 = vld [vmem:[%s598 + $0x338] sm:$0xf]
                  %821 = vst [vmem:[%s599 + $0x1b8] sm:$0xf] %v820
                  %v822 = vld [vmem:[%s598 + $0x33c] sm:$0xf]
                  %823 = vst [vmem:[%s599 + $0x1bc] sm:$0xf] %v822
                  %v824 = vld [vmem:[%s598 + $0x340] sm:$0xf]
                  %825 = vst [vmem:[%s599 + $0x1c0] sm:$0xf] %v824
                  %v826 = vld [vmem:[%s598 + $0x344] sm:$0xf]
                  %827 = vst [vmem:[%s599 + $0x1c4] sm:$0xf] %v826
                  %v828 = vld [vmem:[%s598 + $0x348] sm:$0xf]
                  %829 = vst [vmem:[%s599 + $0x1c8] sm:$0xf] %v828
                  %v830 = vld [vmem:[%s598 + $0x34c] sm:$0xf]
                  %831 = vst [vmem:[%s599 + $0x1cc] sm:$0xf] %v830
                  %v832 = vld [vmem:[%s598 + $0x350] sm:$0xf]
                  %833 = vst [vmem:[%s599 + $0x1d0] sm:$0xf] %v832
                  %v834 = vld [vmem:[%s598 + $0x354] sm:$0xf]
                  %835 = vst [vmem:[%s599 + $0x1d4] sm:$0xf] %v834
                  %v836 = vld [vmem:[%s598 + $0x358] sm:$0xf]
                  %837 = vst [vmem:[%s599 + $0x1d8] sm:$0xf] %v836
                  %v838 = vld [vmem:[%s598 + $0x35c] sm:$0xf]
                  %839 = vst [vmem:[%s599 + $0x1dc] sm:$0xf] %v838
                  %v840 = vld [vmem:[%s598 + $0x3c0] sm:$0xf]
                  %841 = vst [vmem:[%s599 + $0x1e0] sm:$0xf] %v840
                  %v842 = vld [vmem:[%s598 + $0x3c4] sm:$0xf]
                  %843 = vst [vmem:[%s599 + $0x1e4] sm:$0xf] %v842
                  %v844 = vld [vmem:[%s598 + $0x3c8] sm:$0xf]
                  %845 = vst [vmem:[%s599 + $0x1e8] sm:$0xf] %v844
                  %v846 = vld [vmem:[%s598 + $0x3cc] sm:$0xf]
                  %847 = vst [vmem:[%s599 + $0x1ec] sm:$0xf] %v846
                  %v848 = vld [vmem:[%s598 + $0x3d0] sm:$0xf]
                  %849 = vst [vmem:[%s599 + $0x1f0] sm:$0xf] %v848
                  %v850 = vld [vmem:[%s598 + $0x3d4] sm:$0xf]
                  %851 = vst [vmem:[%s599 + $0x1f4] sm:$0xf] %v850
                  %v852 = vld [vmem:[%s598 + $0x3d8] sm:$0xf]
                  %853 = vst [vmem:[%s599 + $0x1f8] sm:$0xf] %v852
                  %v854 = vld [vmem:[%s598 + $0x3dc] sm:$0xf]
                  %855 = vst [vmem:[%s599 + $0x1fc] sm:$0xf] %v854
                  %v856 = vld [vmem:[%s598 + $0x3e0] sm:$0xf]
                  %857 = vst [vmem:[%s599 + $0x200] sm:$0xf] %v856
                  %v858 = vld [vmem:[%s598 + $0x3e4] sm:$0xf]
                  %859 = vst [vmem:[%s599 + $0x204] sm:$0xf] %v858
                  %v860 = vld [vmem:[%s598 + $0x3e8] sm:$0xf]
                  %861 = vst [vmem:[%s599 + $0x208] sm:$0xf] %v860
                  %v862 = vld [vmem:[%s598 + $0x3ec] sm:$0xf]
                  %863 = vst [vmem:[%s599 + $0x20c] sm:$0xf] %v862
                  %v864 = vld [vmem:[%s598 + $0x3f0] sm:$0xf]
                  %865 = vst [vmem:[%s599 + $0x210] sm:$0xf] %v864
                  %v866 = vld [vmem:[%s598 + $0x3f4] sm:$0xf]
                  %867 = vst [vmem:[%s599 + $0x214] sm:$0xf] %v866
                  %v868 = vld [vmem:[%s598 + $0x3f8] sm:$0xf]
                  %869 = vst [vmem:[%s599 + $0x218] sm:$0xf] %v868
                  %v870 = vld [vmem:[%s598 + $0x3fc] sm:$0xf]
                  %871 = vst [vmem:[%s599 + $0x21c] sm:$0xf] %v870
                  %v872 = vld [vmem:[%s598 + $0x400] sm:$0xf]
                  %873 = vst [vmem:[%s599 + $0x220] sm:$0xf] %v872
                  %v874 = vld [vmem:[%s598 + $0x404] sm:$0xf]
                  %875 = vst [vmem:[%s599 + $0x224] sm:$0xf] %v874
                  %v876 = vld [vmem:[%s598 + $0x408] sm:$0xf]
                  %877 = vst [vmem:[%s599 + $0x228] sm:$0xf] %v876
                  %v878 = vld [vmem:[%s598 + $0x40c] sm:$0xf]
                  %879 = vst [vmem:[%s599 + $0x22c] sm:$0xf] %v878
                  %v880 = vld [vmem:[%s598 + $0x410] sm:$0xf]
                  %881 = vst [vmem:[%s599 + $0x230] sm:$0xf] %v880
                  %v882 = vld [vmem:[%s598 + $0x414] sm:$0xf]
                  %883 = vst [vmem:[%s599 + $0x234] sm:$0xf] %v882
                  %v884 = vld [vmem:[%s598 + $0x418] sm:$0xf]
                  %885 = vst [vmem:[%s599 + $0x238] sm:$0xf] %v884
                  %v886 = vld [vmem:[%s598 + $0x41c] sm:$0xf]
                  %887 = vst [vmem:[%s599 + $0x23c] sm:$0xf] %v886
                  %v888 = vld [vmem:[%s598 + $0x480] sm:$0xf]
                  %889 = vst [vmem:[%s599 + $0x240] sm:$0xf] %v888
                  %v890 = vld [vmem:[%s598 + $0x484] sm:$0xf]
                  %891 = vst [vmem:[%s599 + $0x244] sm:$0xf] %v890
                  %v892 = vld [vmem:[%s598 + $0x488] sm:$0xf]
                  %893 = vst [vmem:[%s599 + $0x248] sm:$0xf] %v892
                  %v894 = vld [vmem:[%s598 + $0x48c] sm:$0xf]
                  %895 = vst [vmem:[%s599 + $0x24c] sm:$0xf] %v894
                  %v896 = vld [vmem:[%s598 + $0x490] sm:$0xf]
                  %897 = vst [vmem:[%s599 + $0x250] sm:$0xf] %v896
                  %v898 = vld [vmem:[%s598 + $0x494] sm:$0xf]
                  %899 = vst [vmem:[%s599 + $0x254] sm:$0xf] %v898
                  %v900 = vld [vmem:[%s598 + $0x498] sm:$0xf]
                  %901 = vst [vmem:[%s599 + $0x258] sm:$0xf] %v900
                  %v902 = vld [vmem:[%s598 + $0x49c] sm:$0xf]
                  %903 = vst [vmem:[%s599 + $0x25c] sm:$0xf] %v902
                  %v904 = vld [vmem:[%s598 + $0x4a0] sm:$0xf]
                  %905 = vst [vmem:[%s599 + $0x260] sm:$0xf] %v904
                  %v906 = vld [vmem:[%s598 + $0x4a4] sm:$0xf]
                  %907 = vst [vmem:[%s599 + $0x264] sm:$0xf] %v906
                  %v908 = vld [vmem:[%s598 + $0x4a8] sm:$0xf]
                  %909 = vst [vmem:[%s599 + $0x268] sm:$0xf] %v908
                  %v910 = vld [vmem:[%s598 + $0x4ac] sm:$0xf]
                  %911 = vst [vmem:[%s599 + $0x26c] sm:$0xf] %v910
                  %v912 = vld [vmem:[%s598 + $0x4b0] sm:$0xf]
                  %913 = vst [vmem:[%s599 + $0x270] sm:$0xf] %v912
                  %v914 = vld [vmem:[%s598 + $0x4b4] sm:$0xf]
                  %915 = vst [vmem:[%s599 + $0x274] sm:$0xf] %v914
                  %v916 = vld [vmem:[%s598 + $0x4b8] sm:$0xf]
                  %917 = vst [vmem:[%s599 + $0x278] sm:$0xf] %v916
                  %v918 = vld [vmem:[%s598 + $0x4bc] sm:$0xf]
                  %919 = vst [vmem:[%s599 + $0x27c] sm:$0xf] %v918
                  %v920 = vld [vmem:[%s598 + $0x4c0] sm:$0xf]
                  %921 = vst [vmem:[%s599 + $0x280] sm:$0xf] %v920
                  %v922 = vld [vmem:[%s598 + $0x4c4] sm:$0xf]
                  %923 = vst [vmem:[%s599 + $0x284] sm:$0xf] %v922
                  %v924 = vld [vmem:[%s598 + $0x4c8] sm:$0xf]
                  %925 = vst [vmem:[%s599 + $0x288] sm:$0xf] %v924
                  %v926 = vld [vmem:[%s598 + $0x4cc] sm:$0xf]
                  %927 = vst [vmem:[%s599 + $0x28c] sm:$0xf] %v926
                  %v928 = vld [vmem:[%s598 + $0x4d0] sm:$0xf]
                  %929 = vst [vmem:[%s599 + $0x290] sm:$0xf] %v928
                  %v930 = vld [vmem:[%s598 + $0x4d4] sm:$0xf]
                  %931 = vst [vmem:[%s599 + $0x294] sm:$0xf] %v930
                  %v932 = vld [vmem:[%s598 + $0x4d8] sm:$0xf]
                  %933 = vst [vmem:[%s599 + $0x298] sm:$0xf] %v932
                  %v934 = vld [vmem:[%s598 + $0x4dc] sm:$0xf]
                  %935 = vst [vmem:[%s599 + $0x29c] sm:$0xf] %v934
                  %v936 = vld [vmem:[%s598 + $0x540] sm:$0xf]
                  %937 = vst [vmem:[%s599 + $0x2a0] sm:$0xf] %v936
                  %v938 = vld [vmem:[%s598 + $0x544] sm:$0xf]
                  %939 = vst [vmem:[%s599 + $0x2a4] sm:$0xf] %v938
                  %v940 = vld [vmem:[%s598 + $0x548] sm:$0xf]
                  %941 = vst [vmem:[%s599 + $0x2a8] sm:$0xf] %v940
                  %v942 = vld [vmem:[%s598 + $0x54c] sm:$0xf]
                  %943 = vst [vmem:[%s599 + $0x2ac] sm:$0xf] %v942
                  %v944 = vld [vmem:[%s598 + $0x550] sm:$0xf]
                  %945 = vst [vmem:[%s599 + $0x2b0] sm:$0xf] %v944
                  %v946 = vld [vmem:[%s598 + $0x554] sm:$0xf]
                  %947 = vst [vmem:[%s599 + $0x2b4] sm:$0xf] %v946
                  %v948 = vld [vmem:[%s598 + $0x558] sm:$0xf]
                  %949 = vst [vmem:[%s599 + $0x2b8] sm:$0xf] %v948
                  %v950 = vld [vmem:[%s598 + $0x55c] sm:$0xf]
                  %951 = vst [vmem:[%s599 + $0x2bc] sm:$0xf] %v950
                  %v952 = vld [vmem:[%s598 + $0x560] sm:$0xf]
                  %953 = vst [vmem:[%s599 + $0x2c0] sm:$0xf] %v952
                  %v954 = vld [vmem:[%s598 + $0x564] sm:$0xf]
                  %955 = vst [vmem:[%s599 + $0x2c4] sm:$0xf] %v954
                  %v956 = vld [vmem:[%s598 + $0x568] sm:$0xf]
                  %957 = vst [vmem:[%s599 + $0x2c8] sm:$0xf] %v956
                  %v958 = vld [vmem:[%s598 + $0x56c] sm:$0xf]
                  %959 = vst [vmem:[%s599 + $0x2cc] sm:$0xf] %v958
                  %v960 = vld [vmem:[%s598 + $0x570] sm:$0xf]
                  %961 = vst [vmem:[%s599 + $0x2d0] sm:$0xf] %v960
                  %v962 = vld [vmem:[%s598 + $0x574] sm:$0xf]
                  %963 = vst [vmem:[%s599 + $0x2d4] sm:$0xf] %v962
                  %v964 = vld [vmem:[%s598 + $0x578] sm:$0xf]
                  %965 = vst [vmem:[%s599 + $0x2d8] sm:$0xf] %v964
                  %v966 = vld [vmem:[%s598 + $0x57c] sm:$0xf]
                  %967 = vst [vmem:[%s599 + $0x2dc] sm:$0xf] %v966
                  %v968 = vld [vmem:[%s598 + $0x580] sm:$0xf]
                  %969 = vst [vmem:[%s599 + $0x2e0] sm:$0xf] %v968
                  %v970 = vld [vmem:[%s598 + $0x584] sm:$0xf]
                  %971 = vst [vmem:[%s599 + $0x2e4] sm:$0xf] %v970
                  %v972 = vld [vmem:[%s598 + $0x588] sm:$0xf]
                  %973 = vst [vmem:[%s599 + $0x2e8] sm:$0xf] %v972
                  %v974 = vld [vmem:[%s598 + $0x58c] sm:$0xf]
                  %975 = vst [vmem:[%s599 + $0x2ec] sm:$0xf] %v974
                  %v976 = vld [vmem:[%s598 + $0x590] sm:$0xf]
                  %977 = vst [vmem:[%s599 + $0x2f0] sm:$0xf] %v976
                  %v978 = vld [vmem:[%s598 + $0x594] sm:$0xf]
                  %979 = vst [vmem:[%s599 + $0x2f4] sm:$0xf] %v978
                  %v980 = vld [vmem:[%s598 + $0x598] sm:$0xf]
                  %981 = vst [vmem:[%s599 + $0x2f8] sm:$0xf] %v980
                  %v982 = vld [vmem:[%s598 + $0x59c] sm:$0xf]
                  %983 = vst [vmem:[%s599 + $0x2fc] sm:$0xf] %v982
                $region67: #{tpu_custom_call.1} parent=54 // loop_footer
                  %s597 = sadd.s32 1, %s593
                $region68: #{tpu_custom_call.1} parent=54 // loop_footer_branch
                  %592 = sbr.rel target = $region64
                $region69: #{tpu_custom_call.1} parent=54 // loop_exit
                  _
              $region55: #{tpu_custom_call.1} parent=39 // pred_fallthru
                _
            $region40: #{tpu_custom_call.1} parent=35 // pred_fallthru
              _
            // Predicated region
            $region41: #{tpu_custom_call.1} parent=35 // pred_check
              _
            $region42: #{tpu_custom_call.1} parent=35 // pred_check_branch
              %187 = sbr.rel (0) target = $region44
            $region43: #{tpu_custom_call.1} parent=35 // pred_region
              loop: start=0, step=1, limit=1
              $region45: #{tpu_custom_call.1} parent=43 // loop_pre_header
                _
              $region46: #{tpu_custom_call.1} parent=43 // loop_header
                %s190 = sphi 0, %s194
                %p191 = scmp.ge.s32.totalorder %s190, 1
                %s195 = sphi %s181, %s181
                %s196 = sphi %s174, %s174
              $region47: #{tpu_custom_call.1} parent=43 // loop_header_branch
                %193 = sbr.rel (%p191) target = $region51
              $region48: #{tpu_custom_call.1} parent=43 // loop_body
                %v197 = vld [vmem:[%s195] sm:$0xf]
                %198 = vst [vmem:[%s196] sm:$0xf] %v197
                %v199 = vld [vmem:[%s195 + $0x4] sm:$0xf]
                %200 = vst [vmem:[%s196 + $0x4] sm:$0xf] %v199
                %v201 = vld [vmem:[%s195 + $0x8] sm:$0xf]
                %202 = vst [vmem:[%s196 + $0x8] sm:$0xf] %v201
                %v203 = vld [vmem:[%s195 + $0xc] sm:$0xf]
                %204 = vst [vmem:[%s196 + $0xc] sm:$0xf] %v203
                %v205 = vld [vmem:[%s195 + $0x10] sm:$0xf]
                %206 = vst [vmem:[%s196 + $0x10] sm:$0xf] %v205
                %v207 = vld [vmem:[%s195 + $0x14] sm:$0xf]
                %208 = vst [vmem:[%s196 + $0x14] sm:$0xf] %v207
                %v209 = vld [vmem:[%s195 + $0x18] sm:$0xf]
                %210 = vst [vmem:[%s196 + $0x18] sm:$0xf] %v209
                %v211 = vld [vmem:[%s195 + $0x1c] sm:$0xf]
                %212 = vst [vmem:[%s196 + $0x1c] sm:$0xf] %v211
                %v213 = vld [vmem:[%s195 + $0x20] sm:$0xf]
                %214 = vst [vmem:[%s196 + $0x20] sm:$0xf] %v213
                %v215 = vld [vmem:[%s195 + $0x24] sm:$0xf]
                %216 = vst [vmem:[%s196 + $0x24] sm:$0xf] %v215
                %v217 = vld [vmem:[%s195 + $0x28] sm:$0xf]
                %218 = vst [vmem:[%s196 + $0x28] sm:$0xf] %v217
                %v219 = vld [vmem:[%s195 + $0x2c] sm:$0xf]
                %220 = vst [vmem:[%s196 + $0x2c] sm:$0xf] %v219
                %v221 = vld [vmem:[%s195 + $0x30] sm:$0xf]
                %222 = vst [vmem:[%s196 + $0x30] sm:$0xf] %v221
                %v223 = vld [vmem:[%s195 + $0x34] sm:$0xf]
                %224 = vst [vmem:[%s196 + $0x34] sm:$0xf] %v223
                %v225 = vld [vmem:[%s195 + $0x38] sm:$0xf]
                %226 = vst [vmem:[%s196 + $0x38] sm:$0xf] %v225
                %v227 = vld [vmem:[%s195 + $0x3c] sm:$0xf]
                %228 = vst [vmem:[%s196 + $0x3c] sm:$0xf] %v227
                %v229 = vld [vmem:[%s195 + $0x40] sm:$0xf]
                %230 = vst [vmem:[%s196 + $0x40] sm:$0xf] %v229
                %v231 = vld [vmem:[%s195 + $0x44] sm:$0xf]
                %232 = vst [vmem:[%s196 + $0x44] sm:$0xf] %v231
                %v233 = vld [vmem:[%s195 + $0x48] sm:$0xf]
                %234 = vst [vmem:[%s196 + $0x48] sm:$0xf] %v233
                %v235 = vld [vmem:[%s195 + $0x4c] sm:$0xf]
                %236 = vst [vmem:[%s196 + $0x4c] sm:$0xf] %v235
                %v237 = vld [vmem:[%s195 + $0x50] sm:$0xf]
                %238 = vst [vmem:[%s196 + $0x50] sm:$0xf] %v237
                %v239 = vld [vmem:[%s195 + $0x54] sm:$0xf]
                %240 = vst [vmem:[%s196 + $0x54] sm:$0xf] %v239
                %v241 = vld [vmem:[%s195 + $0x58] sm:$0xf]
                %242 = vst [vmem:[%s196 + $0x58] sm:$0xf] %v241
                %v243 = vld [vmem:[%s195 + $0x5c] sm:$0xf]
                %244 = vst [vmem:[%s196 + $0x5c] sm:$0xf] %v243
                %v245 = vld [vmem:[%s195 + $0xc0] sm:$0xf]
                %246 = vst [vmem:[%s196 + $0x60] sm:$0xf] %v245
                %v247 = vld [vmem:[%s195 + $0xc4] sm:$0xf]
                %248 = vst [vmem:[%s196 + $0x64] sm:$0xf] %v247
                %v249 = vld [vmem:[%s195 + $0xc8] sm:$0xf]
                %250 = vst [vmem:[%s196 + $0x68] sm:$0xf] %v249
                %v251 = vld [vmem:[%s195 + $0xcc] sm:$0xf]
                %252 = vst [vmem:[%s196 + $0x6c] sm:$0xf] %v251
                %v253 = vld [vmem:[%s195 + $0xd0] sm:$0xf]
                %254 = vst [vmem:[%s196 + $0x70] sm:$0xf] %v253
                %v255 = vld [vmem:[%s195 + $0xd4] sm:$0xf]
                %256 = vst [vmem:[%s196 + $0x74] sm:$0xf] %v255
                %v257 = vld [vmem:[%s195 + $0xd8] sm:$0xf]
                %258 = vst [vmem:[%s196 + $0x78] sm:$0xf] %v257
                %v259 = vld [vmem:[%s195 + $0xdc] sm:$0xf]
                %260 = vst [vmem:[%s196 + $0x7c] sm:$0xf] %v259
                %v261 = vld [vmem:[%s195 + $0xe0] sm:$0xf]
                %262 = vst [vmem:[%s196 + $0x80] sm:$0xf] %v261
                %v263 = vld [vmem:[%s195 + $0xe4] sm:$0xf]
                %264 = vst [vmem:[%s196 + $0x84] sm:$0xf] %v263
                %v265 = vld [vmem:[%s195 + $0xe8] sm:$0xf]
                %266 = vst [vmem:[%s196 + $0x88] sm:$0xf] %v265
                %v267 = vld [vmem:[%s195 + $0xec] sm:$0xf]
                %268 = vst [vmem:[%s196 + $0x8c] sm:$0xf] %v267
                %v269 = vld [vmem:[%s195 + $0xf0] sm:$0xf]
                %270 = vst [vmem:[%s196 + $0x90] sm:$0xf] %v269
                %v271 = vld [vmem:[%s195 + $0xf4] sm:$0xf]
                %272 = vst [vmem:[%s196 + $0x94] sm:$0xf] %v271
                %v273 = vld [vmem:[%s195 + $0xf8] sm:$0xf]
                %274 = vst [vmem:[%s196 + $0x98] sm:$0xf] %v273
                %v275 = vld [vmem:[%s195 + $0xfc] sm:$0xf]
                %276 = vst [vmem:[%s196 + $0x9c] sm:$0xf] %v275
                %v277 = vld [vmem:[%s195 + $0x100] sm:$0xf]
                %278 = vst [vmem:[%s196 + $0xa0] sm:$0xf] %v277
                %v279 = vld [vmem:[%s195 + $0x104] sm:$0xf]
                %280 = vst [vmem:[%s196 + $0xa4] sm:$0xf] %v279
                %v281 = vld [vmem:[%s195 + $0x108] sm:$0xf]
                %282 = vst [vmem:[%s196 + $0xa8] sm:$0xf] %v281
                %v283 = vld [vmem:[%s195 + $0x10c] sm:$0xf]
                %284 = vst [vmem:[%s196 + $0xac] sm:$0xf] %v283
                %v285 = vld [vmem:[%s195 + $0x110] sm:$0xf]
                %286 = vst [vmem:[%s196 + $0xb0] sm:$0xf] %v285
                %v287 = vld [vmem:[%s195 + $0x114] sm:$0xf]
                %288 = vst [vmem:[%s196 + $0xb4] sm:$0xf] %v287
                %v289 = vld [vmem:[%s195 + $0x118] sm:$0xf]
                %290 = vst [vmem:[%s196 + $0xb8] sm:$0xf] %v289
                %v291 = vld [vmem:[%s195 + $0x11c] sm:$0xf]
                %292 = vst [vmem:[%s196 + $0xbc] sm:$0xf] %v291
                %v293 = vld [vmem:[%s195 + $0x180] sm:$0xf]
                %294 = vst [vmem:[%s196 + $0xc0] sm:$0xf] %v293
                %v295 = vld [vmem:[%s195 + $0x184] sm:$0xf]
                %296 = vst [vmem:[%s196 + $0xc4] sm:$0xf] %v295
                %v297 = vld [vmem:[%s195 + $0x188] sm:$0xf]
                %298 = vst [vmem:[%s196 + $0xc8] sm:$0xf] %v297
                %v299 = vld [vmem:[%s195 + $0x18c] sm:$0xf]
                %300 = vst [vmem:[%s196 + $0xcc] sm:$0xf] %v299
                %v301 = vld [vmem:[%s195 + $0x190] sm:$0xf]
                %302 = vst [vmem:[%s196 + $0xd0] sm:$0xf] %v301
                %v303 = vld [vmem:[%s195 + $0x194] sm:$0xf]
                %304 = vst [vmem:[%s196 + $0xd4] sm:$0xf] %v303
                %v305 = vld [vmem:[%s195 + $0x198] sm:$0xf]
                %306 = vst [vmem:[%s196 + $0xd8] sm:$0xf] %v305
                %v307 = vld [vmem:[%s195 + $0x19c] sm:$0xf]
                %308 = vst [vmem:[%s196 + $0xdc] sm:$0xf] %v307
                %v309 = vld [vmem:[%s195 + $0x1a0] sm:$0xf]
                %310 = vst [vmem:[%s196 + $0xe0] sm:$0xf] %v309
                %v311 = vld [vmem:[%s195 + $0x1a4] sm:$0xf]
                %312 = vst [vmem:[%s196 + $0xe4] sm:$0xf] %v311
                %v313 = vld [vmem:[%s195 + $0x1a8] sm:$0xf]
                %314 = vst [vmem:[%s196 + $0xe8] sm:$0xf] %v313
                %v315 = vld [vmem:[%s195 + $0x1ac] sm:$0xf]
                %316 = vst [vmem:[%s196 + $0xec] sm:$0xf] %v315
                %v317 = vld [vmem:[%s195 + $0x1b0] sm:$0xf]
                %318 = vst [vmem:[%s196 + $0xf0] sm:$0xf] %v317
                %v319 = vld [vmem:[%s195 + $0x1b4] sm:$0xf]
                %320 = vst [vmem:[%s196 + $0xf4] sm:$0xf] %v319
                %v321 = vld [vmem:[%s195 + $0x1b8] sm:$0xf]
                %322 = vst [vmem:[%s196 + $0xf8] sm:$0xf] %v321
                %v323 = vld [vmem:[%s195 + $0x1bc] sm:$0xf]
                %324 = vst [vmem:[%s196 + $0xfc] sm:$0xf] %v323
                %v325 = vld [vmem:[%s195 + $0x1c0] sm:$0xf]
                %326 = vst [vmem:[%s196 + $0x100] sm:$0xf] %v325
                %v327 = vld [vmem:[%s195 + $0x1c4] sm:$0xf]
                %328 = vst [vmem:[%s196 + $0x104] sm:$0xf] %v327
                %v329 = vld [vmem:[%s195 + $0x1c8] sm:$0xf]
                %330 = vst [vmem:[%s196 + $0x108] sm:$0xf] %v329
                %v331 = vld [vmem:[%s195 + $0x1cc] sm:$0xf]
                %332 = vst [vmem:[%s196 + $0x10c] sm:$0xf] %v331
                %v333 = vld [vmem:[%s195 + $0x1d0] sm:$0xf]
                %334 = vst [vmem:[%s196 + $0x110] sm:$0xf] %v333
                %v335 = vld [vmem:[%s195 + $0x1d4] sm:$0xf]
                %336 = vst [vmem:[%s196 + $0x114] sm:$0xf] %v335
                %v337 = vld [vmem:[%s195 + $0x1d8] sm:$0xf]
                %338 = vst [vmem:[%s196 + $0x118] sm:$0xf] %v337
                %v339 = vld [vmem:[%s195 + $0x1dc] sm:$0xf]
                %340 = vst [vmem:[%s196 + $0x11c] sm:$0xf] %v339
                %v341 = vld [vmem:[%s195 + $0x240] sm:$0xf]
                %342 = vst [vmem:[%s196 + $0x120] sm:$0xf] %v341
                %v343 = vld [vmem:[%s195 + $0x244] sm:$0xf]
                %344 = vst [vmem:[%s196 + $0x124] sm:$0xf] %v343
                %v345 = vld [vmem:[%s195 + $0x248] sm:$0xf]
                %346 = vst [vmem:[%s196 + $0x128] sm:$0xf] %v345
                %v347 = vld [vmem:[%s195 + $0x24c] sm:$0xf]
                %348 = vst [vmem:[%s196 + $0x12c] sm:$0xf] %v347
                %v349 = vld [vmem:[%s195 + $0x250] sm:$0xf]
                %350 = vst [vmem:[%s196 + $0x130] sm:$0xf] %v349
                %v351 = vld [vmem:[%s195 + $0x254] sm:$0xf]
                %352 = vst [vmem:[%s196 + $0x134] sm:$0xf] %v351
                %v353 = vld [vmem:[%s195 + $0x258] sm:$0xf]
                %354 = vst [vmem:[%s196 + $0x138] sm:$0xf] %v353
                %v355 = vld [vmem:[%s195 + $0x25c] sm:$0xf]
                %356 = vst [vmem:[%s196 + $0x13c] sm:$0xf] %v355
                %v357 = vld [vmem:[%s195 + $0x260] sm:$0xf]
                %358 = vst [vmem:[%s196 + $0x140] sm:$0xf] %v357
                %v359 = vld [vmem:[%s195 + $0x264] sm:$0xf]
                %360 = vst [vmem:[%s196 + $0x144] sm:$0xf] %v359
                %v361 = vld [vmem:[%s195 + $0x268] sm:$0xf]
                %362 = vst [vmem:[%s196 + $0x148] sm:$0xf] %v361
                %v363 = vld [vmem:[%s195 + $0x26c] sm:$0xf]
                %364 = vst [vmem:[%s196 + $0x14c] sm:$0xf] %v363
                %v365 = vld [vmem:[%s195 + $0x270] sm:$0xf]
                %366 = vst [vmem:[%s196 + $0x150] sm:$0xf] %v365
                %v367 = vld [vmem:[%s195 + $0x274] sm:$0xf]
                %368 = vst [vmem:[%s196 + $0x154] sm:$0xf] %v367
                %v369 = vld [vmem:[%s195 + $0x278] sm:$0xf]
                %370 = vst [vmem:[%s196 + $0x158] sm:$0xf] %v369
                %v371 = vld [vmem:[%s195 + $0x27c] sm:$0xf]
                %372 = vst [vmem:[%s196 + $0x15c] sm:$0xf] %v371
                %v373 = vld [vmem:[%s195 + $0x280] sm:$0xf]
                %374 = vst [vmem:[%s196 + $0x160] sm:$0xf] %v373
                %v375 = vld [vmem:[%s195 + $0x284] sm:$0xf]
                %376 = vst [vmem:[%s196 + $0x164] sm:$0xf] %v375
                %v377 = vld [vmem:[%s195 + $0x288] sm:$0xf]
                %378 = vst [vmem:[%s196 + $0x168] sm:$0xf] %v377
                %v379 = vld [vmem:[%s195 + $0x28c] sm:$0xf]
                %380 = vst [vmem:[%s196 + $0x16c] sm:$0xf] %v379
                %v381 = vld [vmem:[%s195 + $0x290] sm:$0xf]
                %382 = vst [vmem:[%s196 + $0x170] sm:$0xf] %v381
                %v383 = vld [vmem:[%s195 + $0x294] sm:$0xf]
                %384 = vst [vmem:[%s196 + $0x174] sm:$0xf] %v383
                %v385 = vld [vmem:[%s195 + $0x298] sm:$0xf]
                %386 = vst [vmem:[%s196 + $0x178] sm:$0xf] %v385
                %v387 = vld [vmem:[%s195 + $0x29c] sm:$0xf]
                %388 = vst [vmem:[%s196 + $0x17c] sm:$0xf] %v387
                %v389 = vld [vmem:[%s195 + $0x300] sm:$0xf]
                %390 = vst [vmem:[%s196 + $0x180] sm:$0xf] %v389
                %v391 = vld [vmem:[%s195 + $0x304] sm:$0xf]
                %392 = vst [vmem:[%s196 + $0x184] sm:$0xf] %v391
                %v393 = vld [vmem:[%s195 + $0x308] sm:$0xf]
                %394 = vst [vmem:[%s196 + $0x188] sm:$0xf] %v393
                %v395 = vld [vmem:[%s195 + $0x30c] sm:$0xf]
                %396 = vst [vmem:[%s196 + $0x18c] sm:$0xf] %v395
                %v397 = vld [vmem:[%s195 + $0x310] sm:$0xf]
                %398 = vst [vmem:[%s196 + $0x190] sm:$0xf] %v397
                %v399 = vld [vmem:[%s195 + $0x314] sm:$0xf]
                %400 = vst [vmem:[%s196 + $0x194] sm:$0xf] %v399
                %v401 = vld [vmem:[%s195 + $0x318] sm:$0xf]
                %402 = vst [vmem:[%s196 + $0x198] sm:$0xf] %v401
                %v403 = vld [vmem:[%s195 + $0x31c] sm:$0xf]
                %404 = vst [vmem:[%s196 + $0x19c] sm:$0xf] %v403
                %v405 = vld [vmem:[%s195 + $0x320] sm:$0xf]
                %406 = vst [vmem:[%s196 + $0x1a0] sm:$0xf] %v405
                %v407 = vld [vmem:[%s195 + $0x324] sm:$0xf]
                %408 = vst [vmem:[%s196 + $0x1a4] sm:$0xf] %v407
                %v409 = vld [vmem:[%s195 + $0x328] sm:$0xf]
                %410 = vst [vmem:[%s196 + $0x1a8] sm:$0xf] %v409
                %v411 = vld [vmem:[%s195 + $0x32c] sm:$0xf]
                %412 = vst [vmem:[%s196 + $0x1ac] sm:$0xf] %v411
                %v413 = vld [vmem:[%s195 + $0x330] sm:$0xf]
                %414 = vst [vmem:[%s196 + $0x1b0] sm:$0xf] %v413
                %v415 = vld [vmem:[%s195 + $0x334] sm:$0xf]
                %416 = vst [vmem:[%s196 + $0x1b4] sm:$0xf] %v415
                %v417 = vld [vmem:[%s195 + $0x338] sm:$0xf]
                %418 = vst [vmem:[%s196 + $0x1b8] sm:$0xf] %v417
                %v419 = vld [vmem:[%s195 + $0x33c] sm:$0xf]
                %420 = vst [vmem:[%s196 + $0x1bc] sm:$0xf] %v419
                %v421 = vld [vmem:[%s195 + $0x340] sm:$0xf]
                %422 = vst [vmem:[%s196 + $0x1c0] sm:$0xf] %v421
                %v423 = vld [vmem:[%s195 + $0x344] sm:$0xf]
                %424 = vst [vmem:[%s196 + $0x1c4] sm:$0xf] %v423
                %v425 = vld [vmem:[%s195 + $0x348] sm:$0xf]
                %426 = vst [vmem:[%s196 + $0x1c8] sm:$0xf] %v425
                %v427 = vld [vmem:[%s195 + $0x34c] sm:$0xf]
                %428 = vst [vmem:[%s196 + $0x1cc] sm:$0xf] %v427
                %v429 = vld [vmem:[%s195 + $0x350] sm:$0xf]
                %430 = vst [vmem:[%s196 + $0x1d0] sm:$0xf] %v429
                %v431 = vld [vmem:[%s195 + $0x354] sm:$0xf]
                %432 = vst [vmem:[%s196 + $0x1d4] sm:$0xf] %v431
                %v433 = vld [vmem:[%s195 + $0x358] sm:$0xf]
                %434 = vst [vmem:[%s196 + $0x1d8] sm:$0xf] %v433
                %v435 = vld [vmem:[%s195 + $0x35c] sm:$0xf]
                %436 = vst [vmem:[%s196 + $0x1dc] sm:$0xf] %v435
                %v437 = vld [vmem:[%s195 + $0x3c0] sm:$0xf]
                %438 = vst [vmem:[%s196 + $0x1e0] sm:$0xf] %v437
                %v439 = vld [vmem:[%s195 + $0x3c4] sm:$0xf]
                %440 = vst [vmem:[%s196 + $0x1e4] sm:$0xf] %v439
                %v441 = vld [vmem:[%s195 + $0x3c8] sm:$0xf]
                %442 = vst [vmem:[%s196 + $0x1e8] sm:$0xf] %v441
                %v443 = vld [vmem:[%s195 + $0x3cc] sm:$0xf]
                %444 = vst [vmem:[%s196 + $0x1ec] sm:$0xf] %v443
                %v445 = vld [vmem:[%s195 + $0x3d0] sm:$0xf]
                %446 = vst [vmem:[%s196 + $0x1f0] sm:$0xf] %v445
                %v447 = vld [vmem:[%s195 + $0x3d4] sm:$0xf]
                %448 = vst [vmem:[%s196 + $0x1f4] sm:$0xf] %v447
                %v449 = vld [vmem:[%s195 + $0x3d8] sm:$0xf]
                %450 = vst [vmem:[%s196 + $0x1f8] sm:$0xf] %v449
                %v451 = vld [vmem:[%s195 + $0x3dc] sm:$0xf]
                %452 = vst [vmem:[%s196 + $0x1fc] sm:$0xf] %v451
                %v453 = vld [vmem:[%s195 + $0x3e0] sm:$0xf]
                %454 = vst [vmem:[%s196 + $0x200] sm:$0xf] %v453
                %v455 = vld [vmem:[%s195 + $0x3e4] sm:$0xf]
                %456 = vst [vmem:[%s196 + $0x204] sm:$0xf] %v455
                %v457 = vld [vmem:[%s195 + $0x3e8] sm:$0xf]
                %458 = vst [vmem:[%s196 + $0x208] sm:$0xf] %v457
                %v459 = vld [vmem:[%s195 + $0x3ec] sm:$0xf]
                %460 = vst [vmem:[%s196 + $0x20c] sm:$0xf] %v459
                %v461 = vld [vmem:[%s195 + $0x3f0] sm:$0xf]
                %462 = vst [vmem:[%s196 + $0x210] sm:$0xf] %v461
                %v463 = vld [vmem:[%s195 + $0x3f4] sm:$0xf]
                %464 = vst [vmem:[%s196 + $0x214] sm:$0xf] %v463
                %v465 = vld [vmem:[%s195 + $0x3f8] sm:$0xf]
                %466 = vst [vmem:[%s196 + $0x218] sm:$0xf] %v465
                %v467 = vld [vmem:[%s195 + $0x3fc] sm:$0xf]
                %468 = vst [vmem:[%s196 + $0x21c] sm:$0xf] %v467
                %v469 = vld [vmem:[%s195 + $0x400] sm:$0xf]
                %470 = vst [vmem:[%s196 + $0x220] sm:$0xf] %v469
                %v471 = vld [vmem:[%s195 + $0x404] sm:$0xf]
                %472 = vst [vmem:[%s196 + $0x224] sm:$0xf] %v471
                %v473 = vld [vmem:[%s195 + $0x408] sm:$0xf]
                %474 = vst [vmem:[%s196 + $0x228] sm:$0xf] %v473
                %v475 = vld [vmem:[%s195 + $0x40c] sm:$0xf]
                %476 = vst [vmem:[%s196 + $0x22c] sm:$0xf] %v475
                %v477 = vld [vmem:[%s195 + $0x410] sm:$0xf]
                %478 = vst [vmem:[%s196 + $0x230] sm:$0xf] %v477
                %v479 = vld [vmem:[%s195 + $0x414] sm:$0xf]
                %480 = vst [vmem:[%s196 + $0x234] sm:$0xf] %v479
                %v481 = vld [vmem:[%s195 + $0x418] sm:$0xf]
                %482 = vst [vmem:[%s196 + $0x238] sm:$0xf] %v481
                %v483 = vld [vmem:[%s195 + $0x41c] sm:$0xf]
                %484 = vst [vmem:[%s196 + $0x23c] sm:$0xf] %v483
                %v485 = vld [vmem:[%s195 + $0x480] sm:$0xf]
                %486 = vst [vmem:[%s196 + $0x240] sm:$0xf] %v485
                %v487 = vld [vmem:[%s195 + $0x484] sm:$0xf]
                %488 = vst [vmem:[%s196 + $0x244] sm:$0xf] %v487
                %v489 = vld [vmem:[%s195 + $0x488] sm:$0xf]
                %490 = vst [vmem:[%s196 + $0x248] sm:$0xf] %v489
                %v491 = vld [vmem:[%s195 + $0x48c] sm:$0xf]
                %492 = vst [vmem:[%s196 + $0x24c] sm:$0xf] %v491
                %v493 = vld [vmem:[%s195 + $0x490] sm:$0xf]
                %494 = vst [vmem:[%s196 + $0x250] sm:$0xf] %v493
                %v495 = vld [vmem:[%s195 + $0x494] sm:$0xf]
                %496 = vst [vmem:[%s196 + $0x254] sm:$0xf] %v495
                %v497 = vld [vmem:[%s195 + $0x498] sm:$0xf]
                %498 = vst [vmem:[%s196 + $0x258] sm:$0xf] %v497
                %v499 = vld [vmem:[%s195 + $0x49c] sm:$0xf]
                %500 = vst [vmem:[%s196 + $0x25c] sm:$0xf] %v499
                %v501 = vld [vmem:[%s195 + $0x4a0] sm:$0xf]
                %502 = vst [vmem:[%s196 + $0x260] sm:$0xf] %v501
                %v503 = vld [vmem:[%s195 + $0x4a4] sm:$0xf]
                %504 = vst [vmem:[%s196 + $0x264] sm:$0xf] %v503
                %v505 = vld [vmem:[%s195 + $0x4a8] sm:$0xf]
                %506 = vst [vmem:[%s196 + $0x268] sm:$0xf] %v505
                %v507 = vld [vmem:[%s195 + $0x4ac] sm:$0xf]
                %508 = vst [vmem:[%s196 + $0x26c] sm:$0xf] %v507
                %v509 = vld [vmem:[%s195 + $0x4b0] sm:$0xf]
                %510 = vst [vmem:[%s196 + $0x270] sm:$0xf] %v509
                %v511 = vld [vmem:[%s195 + $0x4b4] sm:$0xf]
                %512 = vst [vmem:[%s196 + $0x274] sm:$0xf] %v511
                %v513 = vld [vmem:[%s195 + $0x4b8] sm:$0xf]
                %514 = vst [vmem:[%s196 + $0x278] sm:$0xf] %v513
                %v515 = vld [vmem:[%s195 + $0x4bc] sm:$0xf]
                %516 = vst [vmem:[%s196 + $0x27c] sm:$0xf] %v515
                %v517 = vld [vmem:[%s195 + $0x4c0] sm:$0xf]
                %518 = vst [vmem:[%s196 + $0x280] sm:$0xf] %v517
                %v519 = vld [vmem:[%s195 + $0x4c4] sm:$0xf]
                %520 = vst [vmem:[%s196 + $0x284] sm:$0xf] %v519
                %v521 = vld [vmem:[%s195 + $0x4c8] sm:$0xf]
                %522 = vst [vmem:[%s196 + $0x288] sm:$0xf] %v521
                %v523 = vld [vmem:[%s195 + $0x4cc] sm:$0xf]
                %524 = vst [vmem:[%s196 + $0x28c] sm:$0xf] %v523
                %v525 = vld [vmem:[%s195 + $0x4d0] sm:$0xf]
                %526 = vst [vmem:[%s196 + $0x290] sm:$0xf] %v525
                %v527 = vld [vmem:[%s195 + $0x4d4] sm:$0xf]
                %528 = vst [vmem:[%s196 + $0x294] sm:$0xf] %v527
                %v529 = vld [vmem:[%s195 + $0x4d8] sm:$0xf]
                %530 = vst [vmem:[%s196 + $0x298] sm:$0xf] %v529
                %v531 = vld [vmem:[%s195 + $0x4dc] sm:$0xf]
                %532 = vst [vmem:[%s196 + $0x29c] sm:$0xf] %v531
                %v533 = vld [vmem:[%s195 + $0x540] sm:$0xf]
                %534 = vst [vmem:[%s196 + $0x2a0] sm:$0xf] %v533
                %v535 = vld [vmem:[%s195 + $0x544] sm:$0xf]
                %536 = vst [vmem:[%s196 + $0x2a4] sm:$0xf] %v535
                %v537 = vld [vmem:[%s195 + $0x548] sm:$0xf]
                %538 = vst [vmem:[%s196 + $0x2a8] sm:$0xf] %v537
                %v539 = vld [vmem:[%s195 + $0x54c] sm:$0xf]
                %540 = vst [vmem:[%s196 + $0x2ac] sm:$0xf] %v539
                %v541 = vld [vmem:[%s195 + $0x550] sm:$0xf]
                %542 = vst [vmem:[%s196 + $0x2b0] sm:$0xf] %v541
                %v543 = vld [vmem:[%s195 + $0x554] sm:$0xf]
                %544 = vst [vmem:[%s196 + $0x2b4] sm:$0xf] %v543
                %v545 = vld [vmem:[%s195 + $0x558] sm:$0xf]
                %546 = vst [vmem:[%s196 + $0x2b8] sm:$0xf] %v545
                %v547 = vld [vmem:[%s195 + $0x55c] sm:$0xf]
                %548 = vst [vmem:[%s196 + $0x2bc] sm:$0xf] %v547
                %v549 = vld [vmem:[%s195 + $0x560] sm:$0xf]
                %550 = vst [vmem:[%s196 + $0x2c0] sm:$0xf] %v549
                %v551 = vld [vmem:[%s195 + $0x564] sm:$0xf]
                %552 = vst [vmem:[%s196 + $0x2c4] sm:$0xf] %v551
                %v553 = vld [vmem:[%s195 + $0x568] sm:$0xf]
                %554 = vst [vmem:[%s196 + $0x2c8] sm:$0xf] %v553
                %v555 = vld [vmem:[%s195 + $0x56c] sm:$0xf]
                %556 = vst [vmem:[%s196 + $0x2cc] sm:$0xf] %v555
                %v557 = vld [vmem:[%s195 + $0x570] sm:$0xf]
                %558 = vst [vmem:[%s196 + $0x2d0] sm:$0xf] %v557
                %v559 = vld [vmem:[%s195 + $0x574] sm:$0xf]
                %560 = vst [vmem:[%s196 + $0x2d4] sm:$0xf] %v559
                %v561 = vld [vmem:[%s195 + $0x578] sm:$0xf]
                %562 = vst [vmem:[%s196 + $0x2d8] sm:$0xf] %v561
                %v563 = vld [vmem:[%s195 + $0x57c] sm:$0xf]
                %564 = vst [vmem:[%s196 + $0x2dc] sm:$0xf] %v563
                %v565 = vld [vmem:[%s195 + $0x580] sm:$0xf]
                %566 = vst [vmem:[%s196 + $0x2e0] sm:$0xf] %v565
                %v567 = vld [vmem:[%s195 + $0x584] sm:$0xf]
                %568 = vst [vmem:[%s196 + $0x2e4] sm:$0xf] %v567
                %v569 = vld [vmem:[%s195 + $0x588] sm:$0xf]
                %570 = vst [vmem:[%s196 + $0x2e8] sm:$0xf] %v569
                %v571 = vld [vmem:[%s195 + $0x58c] sm:$0xf]
                %572 = vst [vmem:[%s196 + $0x2ec] sm:$0xf] %v571
                %v573 = vld [vmem:[%s195 + $0x590] sm:$0xf]
                %574 = vst [vmem:[%s196 + $0x2f0] sm:$0xf] %v573
                %v575 = vld [vmem:[%s195 + $0x594] sm:$0xf]
                %576 = vst [vmem:[%s196 + $0x2f4] sm:$0xf] %v575
                %v577 = vld [vmem:[%s195 + $0x598] sm:$0xf]
                %578 = vst [vmem:[%s196 + $0x2f8] sm:$0xf] %v577
                %v579 = vld [vmem:[%s195 + $0x59c] sm:$0xf]
                %580 = vst [vmem:[%s196 + $0x2fc] sm:$0xf] %v579
              $region49: #{tpu_custom_call.1} parent=43 // loop_footer
                %s194 = sadd.s32 1, %s190
              $region50: #{tpu_custom_call.1} parent=43 // loop_footer_branch
                %189 = sbr.rel target = $region46
              $region51: #{tpu_custom_call.1} parent=43 // loop_exit
                _
            $region44: #{tpu_custom_call.1} parent=35 // pred_fallthru
              _
          $region36: #{tpu_custom_call.1} parent=31 // pred_fallthru
            _
          %984 = vnop
        $region32: #{tpu_custom_call.1} parent=27 // pred_fallthru
          _
      $region28: #{tpu_custom_call.1} parent=5 // pred_fallthru
        _
      %p985 = scmp.le.s32.totalorder 1, %s11
      %p986 = scmp.lt.s32.totalorder %s11, 3
      %p987 = pnand %p985, %p986
      %p988 = pneg %p987
      // Predicated region
      $region70: #{tpu_custom_call.1} parent=5 // pred_check
        _
      $region71: #{tpu_custom_call.1} parent=5 // pred_check_branch
        %990 = sbr.rel (%p987) target = $region73
      $region72: #{tpu_custom_call.1} parent=5 // pred_region
        %s991 = ssub.s32 %s11, 1
        %s992 = sand.u32 %s38, 1
        %s993 = sand.u32 %s38, 1
        %s994 = smul.addr %s993, 768
        %s995 = scalar_lea.vmem [#allocation3], %s994
        // Predicated region
        $region74: #{tpu_custom_call.1} parent=72 // pred_check
          %p996 = pneg %p51
        $region75: #{tpu_custom_call.1} parent=72 // pred_check_branch
          %998 = sbr.rel (%p996) target = $region77
        $region76: #{tpu_custom_call.1} parent=72 // pred_region
          _
        $region77: #{tpu_custom_call.1} parent=72 // pred_fallthru
          _
        %s999 = sand.u32 %s38, 1
        %s1000 = sand.u32 %s38, 1
        %s1001 = smul.addr %s1000, 768
        %s1002 = scalar_lea.vmem [#allocation3], %s1001
        %p1003 = pneg %p51
        %p1004 = pneg %p48
        %p1005 = pneg %p72
        %p1006 = pneg %p69
        %p1007 = pneg %p93
        %p1008 = pneg %p90
        %p1009 = pneg %p114
        %p1010 = pneg %p111
        %p1011 = pneg %p140
        %p1012 = pneg %p137
        %s1013 = smul.u32 8, %s20
        %s1014 = smul.u32 8, %s21
        %p1016 = scmp.eq.s32.totalorder %s21, 0
        // Predicated region
        $region78: #{tpu_custom_call.1} parent=72 // pred_check
          %p1017 = pneg %p1016
        $region79: #{tpu_custom_call.1} parent=72 // pred_check_branch
          %1019 = sbr.rel (%p1017) target = $region81
        $region80: #{tpu_custom_call.1} parent=72 // pred_region
          %1020 = vst [vmem:[#allocation2] sm:$0xff] 0.0
        $region81: #{tpu_custom_call.1} parent=72 // pred_fallthru
          _
        %v1021 = vld [vmem:[%s995] sm:$0xf]
        %v1022 = vld [vmem:[%s995 + $0x4] sm:$0xf]
        %v1023 = vld [vmem:[%s995 + $0xc] sm:$0xf]
        %v1024 = vld [vmem:[%s995 + $0x10] sm:$0xf]
        %v1025 = vld [vmem:[%s995 + $0x18] sm:$0xf]
        %v1026 = vld [vmem:[%s995 + $0x1c] sm:$0xf]
        %v1027 = vld [vmem:[%s995 + $0x24] sm:$0xf]
        %v1028 = vld [vmem:[%s995 + $0x28] sm:$0xf]
        %v1029 = vld [vmem:[%s995 + $0x30] sm:$0xf]
        %v1030 = vld [vmem:[%s995 + $0x34] sm:$0xf]
        %v1031 = vld [vmem:[%s995 + $0x3c] sm:$0xf]
        %v1032 = vld [vmem:[%s995 + $0x40] sm:$0xf]
        %v1033 = vld [vmem:[%s995 + $0x48] sm:$0xf]
        %v1034 = vld [vmem:[%s995 + $0x4c] sm:$0xf]
        %v1035 = vld [vmem:[%s995 + $0x54] sm:$0xf]
        %v1036 = vld [vmem:[%s995 + $0x58] sm:$0xf]
        %v1037 = vld [vmem:[%s995 + $0x60] sm:$0xf]
        %v1038 = vld [vmem:[%s995 + $0x64] sm:$0xf]
        %v1039 = vld [vmem:[%s995 + $0x6c] sm:$0xf]
        %v1040 = vld [vmem:[%s995 + $0x70] sm:$0xf]
        %v1041 = vld [vmem:[%s995 + $0x78] sm:$0xf]
        %v1042 = vld [vmem:[%s995 + $0x7c] sm:$0xf]
        %v1043 = vld [vmem:[%s995 + $0x84] sm:$0xf]
        %v1044 = vld [vmem:[%s995 + $0x88] sm:$0xf]
        %v1045 = vld [vmem:[%s995 + $0x90] sm:$0xf]
        %v1046 = vld [vmem:[%s995 + $0x94] sm:$0xf]
        %v1047 = vld [vmem:[%s995 + $0x9c] sm:$0xf]
        %v1048 = vld [vmem:[%s995 + $0xa0] sm:$0xf]
        %v1049 = vld [vmem:[%s995 + $0xa8] sm:$0xf]
        %v1050 = vld [vmem:[%s995 + $0xac] sm:$0xf]
        %v1051 = vld [vmem:[%s995 + $0xb4] sm:$0xf]
        %v1052 = vld [vmem:[%s995 + $0xb8] sm:$0xf]
        %v1053 = vld [vmem:[%s995 + $0xc0] sm:$0xf]
        %v1054 = vld [vmem:[%s995 + $0xc4] sm:$0xf]
        %v1055 = vld [vmem:[%s995 + $0xcc] sm:$0xf]
        %v1056 = vld [vmem:[%s995 + $0xd0] sm:$0xf]
        %v1057 = vld [vmem:[%s995 + $0xd8] sm:$0xf]
        %v1058 = vld [vmem:[%s995 + $0xdc] sm:$0xf]
        %v1059 = vld [vmem:[%s995 + $0xe4] sm:$0xf]
        %v1060 = vld [vmem:[%s995 + $0xe8] sm:$0xf]
        %v1061 = vld [vmem:[%s995 + $0xf0] sm:$0xf]
        %v1062 = vld [vmem:[%s995 + $0xf4] sm:$0xf]
        %v1063 = vld [vmem:[%s995 + $0xfc] sm:$0xf]
        %v1064 = vld [vmem:[%s995 + $0x100] sm:$0xf]
        %v1065 = vld [vmem:[%s995 + $0x108] sm:$0xf]
        %v1066 = vld [vmem:[%s995 + $0x10c] sm:$0xf]
        %v1067 = vld [vmem:[%s995 + $0x114] sm:$0xf]
        %v1068 = vld [vmem:[%s995 + $0x118] sm:$0xf]
        %v1069 = vld [vmem:[%s995 + $0x120] sm:$0xf]
        %v1070 = vld [vmem:[%s995 + $0x124] sm:$0xf]
        %v1071 = vld [vmem:[%s995 + $0x12c] sm:$0xf]
        %v1072 = vld [vmem:[%s995 + $0x130] sm:$0xf]
        %v1073 = vld [vmem:[%s995 + $0x138] sm:$0xf]
        %v1074 = vld [vmem:[%s995 + $0x13c] sm:$0xf]
        %v1075 = vld [vmem:[%s995 + $0x144] sm:$0xf]
        %v1076 = vld [vmem:[%s995 + $0x148] sm:$0xf]
        %v1077 = vld [vmem:[%s995 + $0x150] sm:$0xf]
        %v1078 = vld [vmem:[%s995 + $0x154] sm:$0xf]
        %v1079 = vld [vmem:[%s995 + $0x15c] sm:$0xf]
        %v1080 = vld [vmem:[%s995 + $0x160] sm:$0xf]
        %v1081 = vld [vmem:[%s995 + $0x168] sm:$0xf]
        %v1082 = vld [vmem:[%s995 + $0x16c] sm:$0xf]
        %v1083 = vld [vmem:[%s995 + $0x174] sm:$0xf]
        %v1084 = vld [vmem:[%s995 + $0x178] sm:$0xf]
        %v1085 = vld [vmem:[%s995 + $0x180] sm:$0xf]
        %v1086 = vld [vmem:[%s995 + $0x184] sm:$0xf]
        %v1087 = vld [vmem:[%s995 + $0x18c] sm:$0xf]
        %v1088 = vld [vmem:[%s995 + $0x190] sm:$0xf]
        %v1089 = vld [vmem:[%s995 + $0x198] sm:$0xf]
        %v1090 = vld [vmem:[%s995 + $0x19c] sm:$0xf]
        %v1091 = vld [vmem:[%s995 + $0x1a4] sm:$0xf]
        %v1092 = vld [vmem:[%s995 + $0x1a8] sm:$0xf]
        %v1093 = vld [vmem:[%s995 + $0x1b0] sm:$0xf]
        %v1094 = vld [vmem:[%s995 + $0x1b4] sm:$0xf]
        %v1095 = vld [vmem:[%s995 + $0x1bc] sm:$0xf]
        %v1096 = vld [vmem:[%s995 + $0x1c0] sm:$0xf]
        %v1097 = vld [vmem:[%s995 + $0x1c8] sm:$0xf]
        %v1098 = vld [vmem:[%s995 + $0x1cc] sm:$0xf]
        %v1099 = vld [vmem:[%s995 + $0x1d4] sm:$0xf]
        %v1100 = vld [vmem:[%s995 + $0x1d8] sm:$0xf]
        %v1101 = vld [vmem:[%s995 + $0x1e0] sm:$0xf]
        %v1102 = vld [vmem:[%s995 + $0x1e4] sm:$0xf]
        %v1103 = vld [vmem:[%s995 + $0x1ec] sm:$0xf]
        %v1104 = vld [vmem:[%s995 + $0x1f0] sm:$0xf]
        %v1105 = vld [vmem:[%s995 + $0x1f8] sm:$0xf]
        %v1106 = vld [vmem:[%s995 + $0x1fc] sm:$0xf]
        %v1107 = vld [vmem:[%s995 + $0x204] sm:$0xf]
        %v1108 = vld [vmem:[%s995 + $0x208] sm:$0xf]
        %v1109 = vld [vmem:[%s995 + $0x210] sm:$0xf]
        %v1110 = vld [vmem:[%s995 + $0x214] sm:$0xf]
        %v1111 = vld [vmem:[%s995 + $0x21c] sm:$0xf]
        %v1112 = vld [vmem:[%s995 + $0x220] sm:$0xf]
        %v1113 = vld [vmem:[%s995 + $0x228] sm:$0xf]
        %v1114 = vld [vmem:[%s995 + $0x22c] sm:$0xf]
        %v1115 = vld [vmem:[%s995 + $0x234] sm:$0xf]
        %v1116 = vld [vmem:[%s995 + $0x238] sm:$0xf]
        %v1117 = vld [vmem:[%s995 + $0x240] sm:$0xf]
        %v1118 = vld [vmem:[%s995 + $0x244] sm:$0xf]
        %v1119 = vld [vmem:[%s995 + $0x24c] sm:$0xf]
        %v1120 = vld [vmem:[%s995 + $0x250] sm:$0xf]
        %v1121 = vld [vmem:[%s995 + $0x258] sm:$0xf]
        %v1122 = vld [vmem:[%s995 + $0x25c] sm:$0xf]
        %v1123 = vld [vmem:[%s995 + $0x264] sm:$0xf]
        %v1124 = vld [vmem:[%s995 + $0x268] sm:$0xf]
        %v1125 = vld [vmem:[%s995 + $0x270] sm:$0xf]
        %v1126 = vld [vmem:[%s995 + $0x274] sm:$0xf]
        %v1127 = vld [vmem:[%s995 + $0x27c] sm:$0xf]
        %v1128 = vld [vmem:[%s995 + $0x280] sm:$0xf]
        %v1129 = vld [vmem:[%s995 + $0x288] sm:$0xf]
        %v1130 = vld [vmem:[%s995 + $0x28c] sm:$0xf]
        %v1131 = vld [vmem:[%s995 + $0x294] sm:$0xf]
        %v1132 = vld [vmem:[%s995 + $0x298] sm:$0xf]
        %v1133 = vld [vmem:[%s995 + $0x2a0] sm:$0xf]
        %v1134 = vld [vmem:[%s995 + $0x2a4] sm:$0xf]
        %v1135 = vld [vmem:[%s995 + $0x2ac] sm:$0xf]
        %v1136 = vld [vmem:[%s995 + $0x2b0] sm:$0xf]
        %v1137 = vld [vmem:[%s995 + $0x2b8] sm:$0xf]
        %v1138 = vld [vmem:[%s995 + $0x2bc] sm:$0xf]
        %v1139 = vld [vmem:[%s995 + $0x2c4] sm:$0xf]
        %v1140 = vld [vmem:[%s995 + $0x2c8] sm:$0xf]
        %v1141 = vld [vmem:[%s995 + $0x2d0] sm:$0xf]
        %v1142 = vld [vmem:[%s995 + $0x2d4] sm:$0xf]
        %v1143 = vld [vmem:[%s995 + $0x2dc] sm:$0xf]
        %v1144 = vld [vmem:[%s995 + $0x2e0] sm:$0xf]
        %v1145 = vld [vmem:[%s995 + $0x2e8] sm:$0xf]
        %v1146 = vld [vmem:[%s995 + $0x2ec] sm:$0xf]
        %v1147 = vld [vmem:[%s995 + $0x2f4] sm:$0xf]
        %v1148 = vld [vmem:[%s995 + $0x2f8] sm:$0xf]
        %v1149 = vld [vmem:[%s1] sm:$0xf]
        %v1150 = vld [vmem:[%s1 + $0x4] sm:$0x1]
        %v1151 = vld [vmem:[%s995 + $0x8] sm:$0x1]
        %v1152 = vld [vmem:[%s995 + $0x14] sm:$0x1]
        %v1153 = vld [vmem:[%s995 + $0x20] sm:$0x1]
        %v1154 = vld [vmem:[%s995 + $0x2c] sm:$0x1]
        %v1155 = vld [vmem:[%s995 + $0x38] sm:$0x1]
        %v1156 = vld [vmem:[%s995 + $0x44] sm:$0x1]
        %v1157 = vld [vmem:[%s995 + $0x50] sm:$0x1]
        %v1158 = vld [vmem:[%s995 + $0x5c] sm:$0x1]
        %v1159 = vld [vmem:[%s995 + $0x68] sm:$0x1]
        %v1160 = vld [vmem:[%s995 + $0x74] sm:$0x1]
        %v1161 = vld [vmem:[%s995 + $0x80] sm:$0x1]
        %v1162 = vld [vmem:[%s995 + $0x8c] sm:$0x1]
        %v1163 = vld [vmem:[%s995 + $0x98] sm:$0x1]
        %v1164 = vld [vmem:[%s995 + $0xa4] sm:$0x1]
        %v1165 = vld [vmem:[%s995 + $0xb0] sm:$0x1]
        %v1166 = vld [vmem:[%s995 + $0xbc] sm:$0x1]
        %v1167 = vld [vmem:[%s995 + $0xc8] sm:$0x1]
        %v1168 = vld [vmem:[%s995 + $0xd4] sm:$0x1]
        %v1169 = vld [vmem:[%s995 + $0xe0] sm:$0x1]
        %v1170 = vld [vmem:[%s995 + $0xec] sm:$0x1]
        %v1171 = vld [vmem:[%s995 + $0xf8] sm:$0x1]
        %v1172 = vld [vmem:[%s995 + $0x104] sm:$0x1]
        %v1173 = vld [vmem:[%s995 + $0x110] sm:$0x1]
        %v1174 = vld [vmem:[%s995 + $0x11c] sm:$0x1]
        %v1175 = vld [vmem:[%s995 + $0x128] sm:$0x1]
        %v1176 = vld [vmem:[%s995 + $0x134] sm:$0x1]
        %v1177 = vld [vmem:[%s995 + $0x140] sm:$0x1]
        %v1178 = vld [vmem:[%s995 + $0x14c] sm:$0x1]
        %v1179 = vld [vmem:[%s995 + $0x158] sm:$0x1]
        %v1180 = vld [vmem:[%s995 + $0x164] sm:$0x1]
        %v1181 = vld [vmem:[%s995 + $0x170] sm:$0x1]
        %v1182 = vld [vmem:[%s995 + $0x17c] sm:$0x1]
        %v1183 = vld [vmem:[%s995 + $0x188] sm:$0x1]
        %v1184 = vld [vmem:[%s995 + $0x194] sm:$0x1]
        %v1185 = vld [vmem:[%s995 + $0x1a0] sm:$0x1]
        %v1186 = vld [vmem:[%s995 + $0x1ac] sm:$0x1]
        %v1187 = vld [vmem:[%s995 + $0x1b8] sm:$0x1]
        %v1188 = vld [vmem:[%s995 + $0x1c4] sm:$0x1]
        %v1189 = vld [vmem:[%s995 + $0x1d0] sm:$0x1]
        %v1190 = vld [vmem:[%s995 + $0x1dc] sm:$0x1]
        %v1191 = vld [vmem:[%s995 + $0x1e8] sm:$0x1]
        %v1192 = vld [vmem:[%s995 + $0x1f4] sm:$0x1]
        %v1193 = vld [vmem:[%s995 + $0x200] sm:$0x1]
        %v1194 = vld [vmem:[%s995 + $0x20c] sm:$0x1]
        %v1195 = vld [vmem:[%s995 + $0x218] sm:$0x1]
        %v1196 = vld [vmem:[%s995 + $0x224] sm:$0x1]
        %v1197 = vld [vmem:[%s995 + $0x230] sm:$0x1]
        %v1198 = vld [vmem:[%s995 + $0x23c] sm:$0x1]
        %v1199 = vld [vmem:[%s995 + $0x248] sm:$0x1]
        %v1200 = vld [vmem:[%s995 + $0x254] sm:$0x1]
        %v1201 = vld [vmem:[%s995 + $0x260] sm:$0x1]
        %v1202 = vld [vmem:[%s995 + $0x26c] sm:$0x1]
        %v1203 = vld [vmem:[%s995 + $0x278] sm:$0x1]
        %v1204 = vld [vmem:[%s995 + $0x284] sm:$0x1]
        %v1205 = vld [vmem:[%s995 + $0x290] sm:$0x1]
        %v1206 = vld [vmem:[%s995 + $0x29c] sm:$0x1]
        %v1207 = vld [vmem:[%s995 + $0x2a8] sm:$0x1]
        %v1208 = vld [vmem:[%s995 + $0x2b4] sm:$0x1]
        %v1209 = vld [vmem:[%s995 + $0x2c0] sm:$0x1]
        %v1210 = vld [vmem:[%s995 + $0x2cc] sm:$0x1]
        %v1211 = vld [vmem:[%s995 + $0x2d8] sm:$0x1]
        %v1212 = vld [vmem:[%s995 + $0x2e4] sm:$0x1]
        %v1213 = vld [vmem:[%s995 + $0x2f0] sm:$0x1]
        %v1214 = vld [vmem:[%s995 + $0x2fc] sm:$0x1]
        %vm1215 = vsmask.f32 3328
        %vm1216 = vsmask.f32 7440
        %vm1217 = vmor %vm1215, %vm1216
        %v1219 = vshrl.u32 %v1021, 16
        %v1221 = vrot.slane %v1219, 4
        %v1222 = vshll.u32 %v1021, 16
        %v1224 = vrot.slane %v1222, 5
        %v1225 = vor.u32 %v1221, %v1224
        %v1226 = vrot.slane %v1225, 4
        %v1228 = vshll.u32 %v1022, 16
        %v1230 = vrot.slane %v1228, 5
        %v1231 = vsel %vm1217, %v1226, %v1230
        %v1232 = vshrl.u32 %v1022, 16
        %v1234 = vrot.slane %v1232, 4
        %v1235 = vor.u32 %v1234, %v1230
        %v1236 = vrot.slane %v1235, 4
        %v1238 = vshll.u32 %v1151, 16
        %v1240 = vrot.slane %v1238, 5
        %v1241 = vsel %vm1217, %v1236, %v1240
        %v1243 = vshrl.u32 %v1023, 16
        %v1245 = vrot.slane %v1243, 4
        %v1246 = vshll.u32 %v1023, 16
        %v1248 = vrot.slane %v1246, 5
        %v1249 = vor.u32 %v1245, %v1248
        %v1250 = vrot.slane %v1249, 4
        %v1252 = vshll.u32 %v1024, 16
        %v1254 = vrot.slane %v1252, 5
        %v1255 = vsel %vm1217, %v1250, %v1254
        %v1256 = vshrl.u32 %v1024, 16
        %v1258 = vrot.slane %v1256, 4
        %v1259 = vor.u32 %v1258, %v1254
        %v1260 = vrot.slane %v1259, 4
        %v1262 = vshll.u32 %v1152, 16
        %v1264 = vrot.slane %v1262, 5
        %v1265 = vsel %vm1217, %v1260, %v1264
        %v1267 = vshrl.u32 %v1025, 16
        %v1269 = vrot.slane %v1267, 4
        %v1270 = vshll.u32 %v1025, 16
        %v1272 = vrot.slane %v1270, 5
        %v1273 = vor.u32 %v1269, %v1272
        %v1274 = vrot.slane %v1273, 4
        %v1276 = vshll.u32 %v1026, 16
        %v1278 = vrot.slane %v1276, 5
        %v1279 = vsel %vm1217, %v1274, %v1278
        %v1280 = vshrl.u32 %v1026, 16
        %v1282 = vrot.slane %v1280, 4
        %v1283 = vor.u32 %v1282, %v1278
        %v1284 = vrot.slane %v1283, 4
        %v1286 = vshll.u32 %v1153, 16
        %v1288 = vrot.slane %v1286, 5
        %v1289 = vsel %vm1217, %v1284, %v1288
        %v1291 = vshrl.u32 %v1027, 16
        %v1293 = vrot.slane %v1291, 4
        %v1294 = vshll.u32 %v1027, 16
        %v1296 = vrot.slane %v1294, 5
        %v1297 = vor.u32 %v1293, %v1296
        %v1298 = vrot.slane %v1297, 4
        %v1300 = vshll.u32 %v1028, 16
        %v1302 = vrot.slane %v1300, 5
        %v1303 = vsel %vm1217, %v1298, %v1302
        %v1304 = vshrl.u32 %v1028, 16
        %v1306 = vrot.slane %v1304, 4
        %v1307 = vor.u32 %v1306, %v1302
        %v1308 = vrot.slane %v1307, 4
        %v1310 = vshll.u32 %v1154, 16
        %v1312 = vrot.slane %v1310, 5
        %v1313 = vsel %vm1217, %v1308, %v1312
        %v1315 = vshrl.u32 %v1029, 16
        %v1317 = vrot.slane %v1315, 4
        %v1318 = vshll.u32 %v1029, 16
        %v1320 = vrot.slane %v1318, 5
        %v1321 = vor.u32 %v1317, %v1320
        %v1322 = vrot.slane %v1321, 4
        %v1324 = vshll.u32 %v1030, 16
        %v1326 = vrot.slane %v1324, 5
        %v1327 = vsel %vm1217, %v1322, %v1326
        %v1328 = vshrl.u32 %v1030, 16
        %v1330 = vrot.slane %v1328, 4
        %v1331 = vor.u32 %v1330, %v1326
        %v1332 = vrot.slane %v1331, 4
        %v1334 = vshll.u32 %v1155, 16
        %v1336 = vrot.slane %v1334, 5
        %v1337 = vsel %vm1217, %v1332, %v1336
        %v1339 = vshrl.u32 %v1031, 16
        %v1341 = vrot.slane %v1339, 4
        %v1342 = vshll.u32 %v1031, 16
        %v1344 = vrot.slane %v1342, 5
        %v1345 = vor.u32 %v1341, %v1344
        %v1346 = vrot.slane %v1345, 4
        %v1348 = vshll.u32 %v1032, 16
        %v1350 = vrot.slane %v1348, 5
        %v1351 = vsel %vm1217, %v1346, %v1350
        %v1352 = vshrl.u32 %v1032, 16
        %v1354 = vrot.slane %v1352, 4
        %v1355 = vor.u32 %v1354, %v1350
        %v1356 = vrot.slane %v1355, 4
        %v1358 = vshll.u32 %v1156, 16
        %v1360 = vrot.slane %v1358, 5
        %v1361 = vsel %vm1217, %v1356, %v1360
        %v1363 = vshrl.u32 %v1033, 16
        %v1365 = vrot.slane %v1363, 4
        %v1366 = vshll.u32 %v1033, 16
        %v1368 = vrot.slane %v1366, 5
        %v1369 = vor.u32 %v1365, %v1368
        %v1370 = vrot.slane %v1369, 4
        %v1372 = vshll.u32 %v1034, 16
        %v1374 = vrot.slane %v1372, 5
        %v1375 = vsel %vm1217, %v1370, %v1374
        %v1376 = vshrl.u32 %v1034, 16
        %v1378 = vrot.slane %v1376, 4
        %v1379 = vor.u32 %v1378, %v1374
        %v1380 = vrot.slane %v1379, 4
        %v1382 = vshll.u32 %v1157, 16
        %v1384 = vrot.slane %v1382, 5
        %v1385 = vsel %vm1217, %v1380, %v1384
        %v1387 = vshrl.u32 %v1035, 16
        %v1389 = vrot.slane %v1387, 4
        %v1390 = vshll.u32 %v1035, 16
        %v1392 = vrot.slane %v1390, 5
        %v1393 = vor.u32 %v1389, %v1392
        %v1394 = vrot.slane %v1393, 4
        %v1396 = vshll.u32 %v1036, 16
        %v1398 = vrot.slane %v1396, 5
        %v1399 = vsel %vm1217, %v1394, %v1398
        %v1400 = vshrl.u32 %v1036, 16
        %v1402 = vrot.slane %v1400, 4
        %v1403 = vor.u32 %v1402, %v1398
        %v1404 = vrot.slane %v1403, 4
        %v1406 = vshll.u32 %v1158, 16
        %v1408 = vrot.slane %v1406, 5
        %v1409 = vsel %vm1217, %v1404, %v1408
        %v1411 = vshrl.u32 %v1037, 16
        %v1413 = vrot.slane %v1411, 4
        %v1414 = vshll.u32 %v1037, 16
        %v1416 = vrot.slane %v1414, 5
        %v1417 = vor.u32 %v1413, %v1416
        %v1418 = vrot.slane %v1417, 4
        %v1420 = vshll.u32 %v1038, 16
        %v1422 = vrot.slane %v1420, 5
        %v1423 = vsel %vm1217, %v1418, %v1422
        %v1424 = vshrl.u32 %v1038, 16
        %v1426 = vrot.slane %v1424, 4
        %v1427 = vor.u32 %v1426, %v1422
        %v1428 = vrot.slane %v1427, 4
        %v1430 = vshll.u32 %v1159, 16
        %v1432 = vrot.slane %v1430, 5
        %v1433 = vsel %vm1217, %v1428, %v1432
        %v1435 = vshrl.u32 %v1039, 16
        %v1437 = vrot.slane %v1435, 4
        %v1438 = vshll.u32 %v1039, 16
        %v1440 = vrot.slane %v1438, 5
        %v1441 = vor.u32 %v1437, %v1440
        %v1442 = vrot.slane %v1441, 4
        %v1444 = vshll.u32 %v1040, 16
        %v1446 = vrot.slane %v1444, 5
        %v1447 = vsel %vm1217, %v1442, %v1446
        %v1448 = vshrl.u32 %v1040, 16
        %v1450 = vrot.slane %v1448, 4
        %v1451 = vor.u32 %v1450, %v1446
        %v1452 = vrot.slane %v1451, 4
        %v1454 = vshll.u32 %v1160, 16
        %v1456 = vrot.slane %v1454, 5
        %v1457 = vsel %vm1217, %v1452, %v1456
        %v1459 = vshrl.u32 %v1041, 16
        %v1461 = vrot.slane %v1459, 4
        %v1462 = vshll.u32 %v1041, 16
        %v1464 = vrot.slane %v1462, 5
        %v1465 = vor.u32 %v1461, %v1464
        %v1466 = vrot.slane %v1465, 4
        %v1468 = vshll.u32 %v1042, 16
        %v1470 = vrot.slane %v1468, 5
        %v1471 = vsel %vm1217, %v1466, %v1470
        %v1472 = vshrl.u32 %v1042, 16
        %v1474 = vrot.slane %v1472, 4
        %v1475 = vor.u32 %v1474, %v1470
        %v1476 = vrot.slane %v1475, 4
        %v1478 = vshll.u32 %v1161, 16
        %v1480 = vrot.slane %v1478, 5
        %v1481 = vsel %vm1217, %v1476, %v1480
        %v1483 = vshrl.u32 %v1043, 16
        %v1485 = vrot.slane %v1483, 4
        %v1486 = vshll.u32 %v1043, 16
        %v1488 = vrot.slane %v1486, 5
        %v1489 = vor.u32 %v1485, %v1488
        %v1490 = vrot.slane %v1489, 4
        %v1492 = vshll.u32 %v1044, 16
        %v1494 = vrot.slane %v1492, 5
        %v1495 = vsel %vm1217, %v1490, %v1494
        %v1496 = vshrl.u32 %v1044, 16
        %v1498 = vrot.slane %v1496, 4
        %v1499 = vor.u32 %v1498, %v1494
        %v1500 = vrot.slane %v1499, 4
        %v1502 = vshll.u32 %v1162, 16
        %v1504 = vrot.slane %v1502, 5
        %v1505 = vsel %vm1217, %v1500, %v1504
        %v1507 = vshrl.u32 %v1045, 16
        %v1509 = vrot.slane %v1507, 4
        %v1510 = vshll.u32 %v1045, 16
        %v1512 = vrot.slane %v1510, 5
        %v1513 = vor.u32 %v1509, %v1512
        %v1514 = vrot.slane %v1513, 4
        %v1516 = vshll.u32 %v1046, 16
        %v1518 = vrot.slane %v1516, 5
        %v1519 = vsel %vm1217, %v1514, %v1518
        %v1520 = vshrl.u32 %v1046, 16
        %v1522 = vrot.slane %v1520, 4
        %v1523 = vor.u32 %v1522, %v1518
        %v1524 = vrot.slane %v1523, 4
        %v1526 = vshll.u32 %v1163, 16
        %v1528 = vrot.slane %v1526, 5
        %v1529 = vsel %vm1217, %v1524, %v1528
        %v1531 = vshrl.u32 %v1047, 16
        %v1533 = vrot.slane %v1531, 4
        %v1534 = vshll.u32 %v1047, 16
        %v1536 = vrot.slane %v1534, 5
        %v1537 = vor.u32 %v1533, %v1536
        %v1538 = vrot.slane %v1537, 4
        %v1540 = vshll.u32 %v1048, 16
        %v1542 = vrot.slane %v1540, 5
        %v1543 = vsel %vm1217, %v1538, %v1542
        %v1544 = vshrl.u32 %v1048, 16
        %v1546 = vrot.slane %v1544, 4
        %v1547 = vor.u32 %v1546, %v1542
        %v1548 = vrot.slane %v1547, 4
        %v1550 = vshll.u32 %v1164, 16
        %v1552 = vrot.slane %v1550, 5
        %v1553 = vsel %vm1217, %v1548, %v1552
        %v1555 = vshrl.u32 %v1049, 16
        %v1557 = vrot.slane %v1555, 4
        %v1558 = vshll.u32 %v1049, 16
        %v1560 = vrot.slane %v1558, 5
        %v1561 = vor.u32 %v1557, %v1560
        %v1562 = vrot.slane %v1561, 4
        %v1564 = vshll.u32 %v1050, 16
        %v1566 = vrot.slane %v1564, 5
        %v1567 = vsel %vm1217, %v1562, %v1566
        %v1568 = vshrl.u32 %v1050, 16
        %v1570 = vrot.slane %v1568, 4
        %v1571 = vor.u32 %v1570, %v1566
        %v1572 = vrot.slane %v1571, 4
        %v1574 = vshll.u32 %v1165, 16
        %v1576 = vrot.slane %v1574, 5
        %v1577 = vsel %vm1217, %v1572, %v1576
        %v1579 = vshrl.u32 %v1051, 16
        %v1581 = vrot.slane %v1579, 4
        %v1582 = vshll.u32 %v1051, 16
        %v1584 = vrot.slane %v1582, 5
        %v1585 = vor.u32 %v1581, %v1584
        %v1586 = vrot.slane %v1585, 4
        %v1588 = vshll.u32 %v1052, 16
        %v1590 = vrot.slane %v1588, 5
        %v1591 = vsel %vm1217, %v1586, %v1590
        %v1592 = vshrl.u32 %v1052, 16
        %v1594 = vrot.slane %v1592, 4
        %v1595 = vor.u32 %v1594, %v1590
        %v1596 = vrot.slane %v1595, 4
        %v1598 = vshll.u32 %v1166, 16
        %v1600 = vrot.slane %v1598, 5
        %v1601 = vsel %vm1217, %v1596, %v1600
        %v1603 = vshrl.u32 %v1053, 16
        %v1605 = vrot.slane %v1603, 4
        %v1606 = vshll.u32 %v1053, 16
        %v1608 = vrot.slane %v1606, 5
        %v1609 = vor.u32 %v1605, %v1608
        %v1610 = vrot.slane %v1609, 4
        %v1612 = vshll.u32 %v1054, 16
        %v1614 = vrot.slane %v1612, 5
        %v1615 = vsel %vm1217, %v1610, %v1614
        %v1616 = vshrl.u32 %v1054, 16
        %v1618 = vrot.slane %v1616, 4
        %v1619 = vor.u32 %v1618, %v1614
        %v1620 = vrot.slane %v1619, 4
        %v1622 = vshll.u32 %v1167, 16
        %v1624 = vrot.slane %v1622, 5
        %v1625 = vsel %vm1217, %v1620, %v1624
        %v1627 = vshrl.u32 %v1055, 16
        %v1629 = vrot.slane %v1627, 4
        %v1630 = vshll.u32 %v1055, 16
        %v1632 = vrot.slane %v1630, 5
        %v1633 = vor.u32 %v1629, %v1632
        %v1634 = vrot.slane %v1633, 4
        %v1636 = vshll.u32 %v1056, 16
        %v1638 = vrot.slane %v1636, 5
        %v1639 = vsel %vm1217, %v1634, %v1638
        %v1640 = vshrl.u32 %v1056, 16
        %v1642 = vrot.slane %v1640, 4
        %v1643 = vor.u32 %v1642, %v1638
        %v1644 = vrot.slane %v1643, 4
        %v1646 = vshll.u32 %v1168, 16
        %v1648 = vrot.slane %v1646, 5
        %v1649 = vsel %vm1217, %v1644, %v1648
        %v1651 = vshrl.u32 %v1057, 16
        %v1653 = vrot.slane %v1651, 4
        %v1654 = vshll.u32 %v1057, 16
        %v1656 = vrot.slane %v1654, 5
        %v1657 = vor.u32 %v1653, %v1656
        %v1658 = vrot.slane %v1657, 4
        %v1660 = vshll.u32 %v1058, 16
        %v1662 = vrot.slane %v1660, 5
        %v1663 = vsel %vm1217, %v1658, %v1662
        %v1664 = vshrl.u32 %v1058, 16
        %v1666 = vrot.slane %v1664, 4
        %v1667 = vor.u32 %v1666, %v1662
        %v1668 = vrot.slane %v1667, 4
        %v1670 = vshll.u32 %v1169, 16
        %v1672 = vrot.slane %v1670, 5
        %v1673 = vsel %vm1217, %v1668, %v1672
        %v1675 = vshrl.u32 %v1059, 16
        %v1677 = vrot.slane %v1675, 4
        %v1678 = vshll.u32 %v1059, 16
        %v1680 = vrot.slane %v1678, 5
        %v1681 = vor.u32 %v1677, %v1680
        %v1682 = vrot.slane %v1681, 4
        %v1684 = vshll.u32 %v1060, 16
        %v1686 = vrot.slane %v1684, 5
        %v1687 = vsel %vm1217, %v1682, %v1686
        %v1688 = vshrl.u32 %v1060, 16
        %v1690 = vrot.slane %v1688, 4
        %v1691 = vor.u32 %v1690, %v1686
        %v1692 = vrot.slane %v1691, 4
        %v1694 = vshll.u32 %v1170, 16
        %v1696 = vrot.slane %v1694, 5
        %v1697 = vsel %vm1217, %v1692, %v1696
        %v1699 = vshrl.u32 %v1061, 16
        %v1701 = vrot.slane %v1699, 4
        %v1702 = vshll.u32 %v1061, 16
        %v1704 = vrot.slane %v1702, 5
        %v1705 = vor.u32 %v1701, %v1704
        %v1706 = vrot.slane %v1705, 4
        %v1708 = vshll.u32 %v1062, 16
        %v1710 = vrot.slane %v1708, 5
        %v1711 = vsel %vm1217, %v1706, %v1710
        %v1712 = vshrl.u32 %v1062, 16
        %v1714 = vrot.slane %v1712, 4
        %v1715 = vor.u32 %v1714, %v1710
        %v1716 = vrot.slane %v1715, 4
        %v1718 = vshll.u32 %v1171, 16
        %v1720 = vrot.slane %v1718, 5
        %v1721 = vsel %vm1217, %v1716, %v1720
        %v1723 = vshrl.u32 %v1063, 16
        %v1725 = vrot.slane %v1723, 4
        %v1726 = vshll.u32 %v1063, 16
        %v1728 = vrot.slane %v1726, 5
        %v1729 = vor.u32 %v1725, %v1728
        %v1730 = vrot.slane %v1729, 4
        %v1732 = vshll.u32 %v1064, 16
        %v1734 = vrot.slane %v1732, 5
        %v1735 = vsel %vm1217, %v1730, %v1734
        %v1736 = vshrl.u32 %v1064, 16
        %v1738 = vrot.slane %v1736, 4
        %v1739 = vor.u32 %v1738, %v1734
        %v1740 = vrot.slane %v1739, 4
        %v1742 = vshll.u32 %v1172, 16
        %v1744 = vrot.slane %v1742, 5
        %v1745 = vsel %vm1217, %v1740, %v1744
        %v1747 = vshrl.u32 %v1065, 16
        %v1749 = vrot.slane %v1747, 4
        %v1750 = vshll.u32 %v1065, 16
        %v1752 = vrot.slane %v1750, 5
        %v1753 = vor.u32 %v1749, %v1752
        %v1754 = vrot.slane %v1753, 4
        %v1756 = vshll.u32 %v1066, 16
        %v1758 = vrot.slane %v1756, 5
        %v1759 = vsel %vm1217, %v1754, %v1758
        %v1760 = vshrl.u32 %v1066, 16
        %v1762 = vrot.slane %v1760, 4
        %v1763 = vor.u32 %v1762, %v1758
        %v1764 = vrot.slane %v1763, 4
        %v1766 = vshll.u32 %v1173, 16
        %v1768 = vrot.slane %v1766, 5
        %v1769 = vsel %vm1217, %v1764, %v1768
        %v1771 = vshrl.u32 %v1067, 16
        %v1773 = vrot.slane %v1771, 4
        %v1774 = vshll.u32 %v1067, 16
        %v1776 = vrot.slane %v1774, 5
        %v1777 = vor.u32 %v1773, %v1776
        %v1778 = vrot.slane %v1777, 4
        %v1780 = vshll.u32 %v1068, 16
        %v1782 = vrot.slane %v1780, 5
        %v1783 = vsel %vm1217, %v1778, %v1782
        %v1784 = vshrl.u32 %v1068, 16
        %v1786 = vrot.slane %v1784, 4
        %v1787 = vor.u32 %v1786, %v1782
        %v1788 = vrot.slane %v1787, 4
        %v1790 = vshll.u32 %v1174, 16
        %v1792 = vrot.slane %v1790, 5
        %v1793 = vsel %vm1217, %v1788, %v1792
        %v1795 = vshrl.u32 %v1069, 16
        %v1797 = vrot.slane %v1795, 4
        %v1798 = vshll.u32 %v1069, 16
        %v1800 = vrot.slane %v1798, 5
        %v1801 = vor.u32 %v1797, %v1800
        %v1802 = vrot.slane %v1801, 4
        %v1804 = vshll.u32 %v1070, 16
        %v1806 = vrot.slane %v1804, 5
        %v1807 = vsel %vm1217, %v1802, %v1806
        %v1808 = vshrl.u32 %v1070, 16
        %v1810 = vrot.slane %v1808, 4
        %v1811 = vor.u32 %v1810, %v1806
        %v1812 = vrot.slane %v1811, 4
        %v1814 = vshll.u32 %v1175, 16
        %v1816 = vrot.slane %v1814, 5
        %v1817 = vsel %vm1217, %v1812, %v1816
        %v1819 = vshrl.u32 %v1071, 16
        %v1821 = vrot.slane %v1819, 4
        %v1822 = vshll.u32 %v1071, 16
        %v1824 = vrot.slane %v1822, 5
        %v1825 = vor.u32 %v1821, %v1824
        %v1826 = vrot.slane %v1825, 4
        %v1828 = vshll.u32 %v1072, 16
        %v1830 = vrot.slane %v1828, 5
        %v1831 = vsel %vm1217, %v1826, %v1830
        %v1832 = vshrl.u32 %v1072, 16
        %v1834 = vrot.slane %v1832, 4
        %v1835 = vor.u32 %v1834, %v1830
        %v1836 = vrot.slane %v1835, 4
        %v1838 = vshll.u32 %v1176, 16
        %v1840 = vrot.slane %v1838, 5
        %v1841 = vsel %vm1217, %v1836, %v1840
        %v1843 = vshrl.u32 %v1073, 16
        %v1845 = vrot.slane %v1843, 4
        %v1846 = vshll.u32 %v1073, 16
        %v1848 = vrot.slane %v1846, 5
        %v1849 = vor.u32 %v1845, %v1848
        %v1850 = vrot.slane %v1849, 4
        %v1852 = vshll.u32 %v1074, 16
        %v1854 = vrot.slane %v1852, 5
        %v1855 = vsel %vm1217, %v1850, %v1854
        %v1856 = vshrl.u32 %v1074, 16
        %v1858 = vrot.slane %v1856, 4
        %v1859 = vor.u32 %v1858, %v1854
        %v1860 = vrot.slane %v1859, 4
        %v1862 = vshll.u32 %v1177, 16
        %v1864 = vrot.slane %v1862, 5
        %v1865 = vsel %vm1217, %v1860, %v1864
        %v1867 = vshrl.u32 %v1075, 16
        %v1869 = vrot.slane %v1867, 4
        %v1870 = vshll.u32 %v1075, 16
        %v1872 = vrot.slane %v1870, 5
        %v1873 = vor.u32 %v1869, %v1872
        %v1874 = vrot.slane %v1873, 4
        %v1876 = vshll.u32 %v1076, 16
        %v1878 = vrot.slane %v1876, 5
        %v1879 = vsel %vm1217, %v1874, %v1878
        %v1880 = vshrl.u32 %v1076, 16
        %v1882 = vrot.slane %v1880, 4
        %v1883 = vor.u32 %v1882, %v1878
        %v1884 = vrot.slane %v1883, 4
        %v1886 = vshll.u32 %v1178, 16
        %v1888 = vrot.slane %v1886, 5
        %v1889 = vsel %vm1217, %v1884, %v1888
        %v1891 = vshrl.u32 %v1077, 16
        %v1893 = vrot.slane %v1891, 4
        %v1894 = vshll.u32 %v1077, 16
        %v1896 = vrot.slane %v1894, 5
        %v1897 = vor.u32 %v1893, %v1896
        %v1898 = vrot.slane %v1897, 4
        %v1900 = vshll.u32 %v1078, 16
        %v1902 = vrot.slane %v1900, 5
        %v1903 = vsel %vm1217, %v1898, %v1902
        %v1904 = vshrl.u32 %v1078, 16
        %v1906 = vrot.slane %v1904, 4
        %v1907 = vor.u32 %v1906, %v1902
        %v1908 = vrot.slane %v1907, 4
        %v1910 = vshll.u32 %v1179, 16
        %v1912 = vrot.slane %v1910, 5
        %v1913 = vsel %vm1217, %v1908, %v1912
        %v1915 = vshrl.u32 %v1079, 16
        %v1917 = vrot.slane %v1915, 4
        %v1918 = vshll.u32 %v1079, 16
        %v1920 = vrot.slane %v1918, 5
        %v1921 = vor.u32 %v1917, %v1920
        %v1922 = vrot.slane %v1921, 4
        %v1924 = vshll.u32 %v1080, 16
        %v1926 = vrot.slane %v1924, 5
        %v1927 = vsel %vm1217, %v1922, %v1926
        %v1928 = vshrl.u32 %v1080, 16
        %v1930 = vrot.slane %v1928, 4
        %v1931 = vor.u32 %v1930, %v1926
        %v1932 = vrot.slane %v1931, 4
        %v1934 = vshll.u32 %v1180, 16
        %v1936 = vrot.slane %v1934, 5
        %v1937 = vsel %vm1217, %v1932, %v1936
        %v1939 = vshrl.u32 %v1081, 16
        %v1941 = vrot.slane %v1939, 4
        %v1942 = vshll.u32 %v1081, 16
        %v1944 = vrot.slane %v1942, 5
        %v1945 = vor.u32 %v1941, %v1944
        %v1946 = vrot.slane %v1945, 4
        %v1948 = vshll.u32 %v1082, 16
        %v1950 = vrot.slane %v1948, 5
        %v1951 = vsel %vm1217, %v1946, %v1950
        %v1952 = vshrl.u32 %v1082, 16
        %v1954 = vrot.slane %v1952, 4
        %v1955 = vor.u32 %v1954, %v1950
        %v1956 = vrot.slane %v1955, 4
        %v1958 = vshll.u32 %v1181, 16
        %v1960 = vrot.slane %v1958, 5
        %v1961 = vsel %vm1217, %v1956, %v1960
        %v1963 = vshrl.u32 %v1083, 16
        %v1965 = vrot.slane %v1963, 4
        %v1966 = vshll.u32 %v1083, 16
        %v1968 = vrot.slane %v1966, 5
        %v1969 = vor.u32 %v1965, %v1968
        %v1970 = vrot.slane %v1969, 4
        %v1972 = vshll.u32 %v1084, 16
        %v1974 = vrot.slane %v1972, 5
        %v1975 = vsel %vm1217, %v1970, %v1974
        %v1976 = vshrl.u32 %v1084, 16
        %v1978 = vrot.slane %v1976, 4
        %v1979 = vor.u32 %v1978, %v1974
        %v1980 = vrot.slane %v1979, 4
        %v1982 = vshll.u32 %v1182, 16
        %v1984 = vrot.slane %v1982, 5
        %v1985 = vsel %vm1217, %v1980, %v1984
        %v1987 = vshrl.u32 %v1085, 16
        %v1989 = vrot.slane %v1987, 4
        %v1990 = vshll.u32 %v1085, 16
        %v1992 = vrot.slane %v1990, 5
        %v1993 = vor.u32 %v1989, %v1992
        %v1994 = vrot.slane %v1993, 4
        %v1996 = vshll.u32 %v1086, 16
        %v1998 = vrot.slane %v1996, 5
        %v1999 = vsel %vm1217, %v1994, %v1998
        %v2000 = vshrl.u32 %v1086, 16
        %v2002 = vrot.slane %v2000, 4
        %v2003 = vor.u32 %v2002, %v1998
        %v2004 = vrot.slane %v2003, 4
        %v2006 = vshll.u32 %v1183, 16
        %v2008 = vrot.slane %v2006, 5
        %v2009 = vsel %vm1217, %v2004, %v2008
        %v2011 = vshrl.u32 %v1087, 16
        %v2013 = vrot.slane %v2011, 4
        %v2014 = vshll.u32 %v1087, 16
        %v2016 = vrot.slane %v2014, 5
        %v2017 = vor.u32 %v2013, %v2016
        %v2018 = vrot.slane %v2017, 4
        %v2020 = vshll.u32 %v1088, 16
        %v2022 = vrot.slane %v2020, 5
        %v2023 = vsel %vm1217, %v2018, %v2022
        %v2024 = vshrl.u32 %v1088, 16
        %v2026 = vrot.slane %v2024, 4
        %v2027 = vor.u32 %v2026, %v2022
        %v2028 = vrot.slane %v2027, 4
        %v2030 = vshll.u32 %v1184, 16
        %v2032 = vrot.slane %v2030, 5
        %v2033 = vsel %vm1217, %v2028, %v2032
        %v2035 = vshrl.u32 %v1089, 16
        %v2037 = vrot.slane %v2035, 4
        %v2038 = vshll.u32 %v1089, 16
        %v2040 = vrot.slane %v2038, 5
        %v2041 = vor.u32 %v2037, %v2040
        %v2042 = vrot.slane %v2041, 4
        %v2044 = vshll.u32 %v1090, 16
        %v2046 = vrot.slane %v2044, 5
        %v2047 = vsel %vm1217, %v2042, %v2046
        %v2048 = vshrl.u32 %v1090, 16
        %v2050 = vrot.slane %v2048, 4
        %v2051 = vor.u32 %v2050, %v2046
        %v2052 = vrot.slane %v2051, 4
        %v2054 = vshll.u32 %v1185, 16
        %v2056 = vrot.slane %v2054, 5
        %v2057 = vsel %vm1217, %v2052, %v2056
        %v2059 = vshrl.u32 %v1091, 16
        %v2061 = vrot.slane %v2059, 4
        %v2062 = vshll.u32 %v1091, 16
        %v2064 = vrot.slane %v2062, 5
        %v2065 = vor.u32 %v2061, %v2064
        %v2066 = vrot.slane %v2065, 4
        %v2068 = vshll.u32 %v1092, 16
        %v2070 = vrot.slane %v2068, 5
        %v2071 = vsel %vm1217, %v2066, %v2070
        %v2072 = vshrl.u32 %v1092, 16
        %v2074 = vrot.slane %v2072, 4
        %v2075 = vor.u32 %v2074, %v2070
        %v2076 = vrot.slane %v2075, 4
        %v2078 = vshll.u32 %v1186, 16
        %v2080 = vrot.slane %v2078, 5
        %v2081 = vsel %vm1217, %v2076, %v2080
        %v2083 = vshrl.u32 %v1093, 16
        %v2085 = vrot.slane %v2083, 4
        %v2086 = vshll.u32 %v1093, 16
        %v2088 = vrot.slane %v2086, 5
        %v2089 = vor.u32 %v2085, %v2088
        %v2090 = vrot.slane %v2089, 4
        %v2092 = vshll.u32 %v1094, 16
        %v2094 = vrot.slane %v2092, 5
        %v2095 = vsel %vm1217, %v2090, %v2094
        %v2096 = vshrl.u32 %v1094, 16
        %v2098 = vrot.slane %v2096, 4
        %v2099 = vor.u32 %v2098, %v2094
        %v2100 = vrot.slane %v2099, 4
        %v2102 = vshll.u32 %v1187, 16
        %v2104 = vrot.slane %v2102, 5
        %v2105 = vsel %vm1217, %v2100, %v2104
        %v2107 = vshrl.u32 %v1095, 16
        %v2109 = vrot.slane %v2107, 4
        %v2110 = vshll.u32 %v1095, 16
        %v2112 = vrot.slane %v2110, 5
        %v2113 = vor.u32 %v2109, %v2112
        %v2114 = vrot.slane %v2113, 4
        %v2116 = vshll.u32 %v1096, 16
        %v2118 = vrot.slane %v2116, 5
        %v2119 = vsel %vm1217, %v2114, %v2118
        %v2120 = vshrl.u32 %v1096, 16
        %v2122 = vrot.slane %v2120, 4
        %v2123 = vor.u32 %v2122, %v2118
        %v2124 = vrot.slane %v2123, 4
        %v2126 = vshll.u32 %v1188, 16
        %v2128 = vrot.slane %v2126, 5
        %v2129 = vsel %vm1217, %v2124, %v2128
        %v2131 = vshrl.u32 %v1097, 16
        %v2133 = vrot.slane %v2131, 4
        %v2134 = vshll.u32 %v1097, 16
        %v2136 = vrot.slane %v2134, 5
        %v2137 = vor.u32 %v2133, %v2136
        %v2138 = vrot.slane %v2137, 4
        %v2140 = vshll.u32 %v1098, 16
        %v2142 = vrot.slane %v2140, 5
        %v2143 = vsel %vm1217, %v2138, %v2142
        %v2144 = vshrl.u32 %v1098, 16
        %v2146 = vrot.slane %v2144, 4
        %v2147 = vor.u32 %v2146, %v2142
        %v2148 = vrot.slane %v2147, 4
        %v2150 = vshll.u32 %v1189, 16
        %v2152 = vrot.slane %v2150, 5
        %v2153 = vsel %vm1217, %v2148, %v2152
        %v2155 = vshrl.u32 %v1099, 16
        %v2157 = vrot.slane %v2155, 4
        %v2158 = vshll.u32 %v1099, 16
        %v2160 = vrot.slane %v2158, 5
        %v2161 = vor.u32 %v2157, %v2160
        %v2162 = vrot.slane %v2161, 4
        %v2164 = vshll.u32 %v1100, 16
        %v2166 = vrot.slane %v2164, 5
        %v2167 = vsel %vm1217, %v2162, %v2166
        %v2168 = vshrl.u32 %v1100, 16
        %v2170 = vrot.slane %v2168, 4
        %v2171 = vor.u32 %v2170, %v2166
        %v2172 = vrot.slane %v2171, 4
        %v2174 = vshll.u32 %v1190, 16
        %v2176 = vrot.slane %v2174, 5
        %v2177 = vsel %vm1217, %v2172, %v2176
        %v2179 = vshrl.u32 %v1101, 16
        %v2181 = vrot.slane %v2179, 4
        %v2182 = vshll.u32 %v1101, 16
        %v2184 = vrot.slane %v2182, 5
        %v2185 = vor.u32 %v2181, %v2184
        %v2186 = vrot.slane %v2185, 4
        %v2188 = vshll.u32 %v1102, 16
        %v2190 = vrot.slane %v2188, 5
        %v2191 = vsel %vm1217, %v2186, %v2190
        %v2192 = vshrl.u32 %v1102, 16
        %v2194 = vrot.slane %v2192, 4
        %v2195 = vor.u32 %v2194, %v2190
        %v2196 = vrot.slane %v2195, 4
        %v2198 = vshll.u32 %v1191, 16
        %v2200 = vrot.slane %v2198, 5
        %v2201 = vsel %vm1217, %v2196, %v2200
        %v2203 = vshrl.u32 %v1103, 16
        %v2205 = vrot.slane %v2203, 4
        %v2206 = vshll.u32 %v1103, 16
        %v2208 = vrot.slane %v2206, 5
        %v2209 = vor.u32 %v2205, %v2208
        %v2210 = vrot.slane %v2209, 4
        %v2212 = vshll.u32 %v1104, 16
        %v2214 = vrot.slane %v2212, 5
        %v2215 = vsel %vm1217, %v2210, %v2214
        %v2216 = vshrl.u32 %v1104, 16
        %v2218 = vrot.slane %v2216, 4
        %v2219 = vor.u32 %v2218, %v2214
        %v2220 = vrot.slane %v2219, 4
        %v2222 = vshll.u32 %v1192, 16
        %v2224 = vrot.slane %v2222, 5
        %v2225 = vsel %vm1217, %v2220, %v2224
        %v2227 = vshrl.u32 %v1105, 16
        %v2229 = vrot.slane %v2227, 4
        %v2230 = vshll.u32 %v1105, 16
        %v2232 = vrot.slane %v2230, 5
        %v2233 = vor.u32 %v2229, %v2232
        %v2234 = vrot.slane %v2233, 4
        %v2236 = vshll.u32 %v1106, 16
        %v2238 = vrot.slane %v2236, 5
        %v2239 = vsel %vm1217, %v2234, %v2238
        %v2240 = vshrl.u32 %v1106, 16
        %v2242 = vrot.slane %v2240, 4
        %v2243 = vor.u32 %v2242, %v2238
        %v2244 = vrot.slane %v2243, 4
        %v2246 = vshll.u32 %v1193, 16
        %v2248 = vrot.slane %v2246, 5
        %v2249 = vsel %vm1217, %v2244, %v2248
        %v2251 = vshrl.u32 %v1107, 16
        %v2253 = vrot.slane %v2251, 4
        %v2254 = vshll.u32 %v1107, 16
        %v2256 = vrot.slane %v2254, 5
        %v2257 = vor.u32 %v2253, %v2256
        %v2258 = vrot.slane %v2257, 4
        %v2260 = vshll.u32 %v1108, 16
        %v2262 = vrot.slane %v2260, 5
        %v2263 = vsel %vm1217, %v2258, %v2262
        %v2264 = vshrl.u32 %v1108, 16
        %v2266 = vrot.slane %v2264, 4
        %v2267 = vor.u32 %v2266, %v2262
        %v2268 = vrot.slane %v2267, 4
        %v2270 = vshll.u32 %v1194, 16
        %v2272 = vrot.slane %v2270, 5
        %v2273 = vsel %vm1217, %v2268, %v2272
        %v2275 = vshrl.u32 %v1109, 16
        %v2277 = vrot.slane %v2275, 4
        %v2278 = vshll.u32 %v1109, 16
        %v2280 = vrot.slane %v2278, 5
        %v2281 = vor.u32 %v2277, %v2280
        %v2282 = vrot.slane %v2281, 4
        %v2284 = vshll.u32 %v1110, 16
        %v2286 = vrot.slane %v2284, 5
        %v2287 = vsel %vm1217, %v2282, %v2286
        %v2288 = vshrl.u32 %v1110, 16
        %v2290 = vrot.slane %v2288, 4
        %v2291 = vor.u32 %v2290, %v2286
        %v2292 = vrot.slane %v2291, 4
        %v2294 = vshll.u32 %v1195, 16
        %v2296 = vrot.slane %v2294, 5
        %v2297 = vsel %vm1217, %v2292, %v2296
        %v2299 = vshrl.u32 %v1111, 16
        %v2301 = vrot.slane %v2299, 4
        %v2302 = vshll.u32 %v1111, 16
        %v2304 = vrot.slane %v2302, 5
        %v2305 = vor.u32 %v2301, %v2304
        %v2306 = vrot.slane %v2305, 4
        %v2308 = vshll.u32 %v1112, 16
        %v2310 = vrot.slane %v2308, 5
        %v2311 = vsel %vm1217, %v2306, %v2310
        %v2312 = vshrl.u32 %v1112, 16
        %v2314 = vrot.slane %v2312, 4
        %v2315 = vor.u32 %v2314, %v2310
        %v2316 = vrot.slane %v2315, 4
        %v2318 = vshll.u32 %v1196, 16
        %v2320 = vrot.slane %v2318, 5
        %v2321 = vsel %vm1217, %v2316, %v2320
        %v2323 = vshrl.u32 %v1113, 16
        %v2325 = vrot.slane %v2323, 4
        %v2326 = vshll.u32 %v1113, 16
        %v2328 = vrot.slane %v2326, 5
        %v2329 = vor.u32 %v2325, %v2328
        %v2330 = vrot.slane %v2329, 4
        %v2332 = vshll.u32 %v1114, 16
        %v2334 = vrot.slane %v2332, 5
        %v2335 = vsel %vm1217, %v2330, %v2334
        %v2336 = vshrl.u32 %v1114, 16
        %v2338 = vrot.slane %v2336, 4
        %v2339 = vor.u32 %v2338, %v2334
        %v2340 = vrot.slane %v2339, 4
        %v2342 = vshll.u32 %v1197, 16
        %v2344 = vrot.slane %v2342, 5
        %v2345 = vsel %vm1217, %v2340, %v2344
        %v2347 = vshrl.u32 %v1115, 16
        %v2349 = vrot.slane %v2347, 4
        %v2350 = vshll.u32 %v1115, 16
        %v2352 = vrot.slane %v2350, 5
        %v2353 = vor.u32 %v2349, %v2352
        %v2354 = vrot.slane %v2353, 4
        %v2356 = vshll.u32 %v1116, 16
        %v2358 = vrot.slane %v2356, 5
        %v2359 = vsel %vm1217, %v2354, %v2358
        %v2360 = vshrl.u32 %v1116, 16
        %v2362 = vrot.slane %v2360, 4
        %v2363 = vor.u32 %v2362, %v2358
        %v2364 = vrot.slane %v2363, 4
        %v2366 = vshll.u32 %v1198, 16
        %v2368 = vrot.slane %v2366, 5
        %v2369 = vsel %vm1217, %v2364, %v2368
        %v2371 = vshrl.u32 %v1117, 16
        %v2373 = vrot.slane %v2371, 4
        %v2374 = vshll.u32 %v1117, 16
        %v2376 = vrot.slane %v2374, 5
        %v2377 = vor.u32 %v2373, %v2376
        %v2378 = vrot.slane %v2377, 4
        %v2380 = vshll.u32 %v1118, 16
        %v2382 = vrot.slane %v2380, 5
        %v2383 = vsel %vm1217, %v2378, %v2382
        %v2384 = vshrl.u32 %v1118, 16
        %v2386 = vrot.slane %v2384, 4
        %v2387 = vor.u32 %v2386, %v2382
        %v2388 = vrot.slane %v2387, 4
        %v2390 = vshll.u32 %v1199, 16
        %v2392 = vrot.slane %v2390, 5
        %v2393 = vsel %vm1217, %v2388, %v2392
        %v2395 = vshrl.u32 %v1119, 16
        %v2397 = vrot.slane %v2395, 4
        %v2398 = vshll.u32 %v1119, 16
        %v2400 = vrot.slane %v2398, 5
        %v2401 = vor.u32 %v2397, %v2400
        %v2402 = vrot.slane %v2401, 4
        %v2404 = vshll.u32 %v1120, 16
        %v2406 = vrot.slane %v2404, 5
        %v2407 = vsel %vm1217, %v2402, %v2406
        %v2408 = vshrl.u32 %v1120, 16
        %v2410 = vrot.slane %v2408, 4
        %v2411 = vor.u32 %v2410, %v2406
        %v2412 = vrot.slane %v2411, 4
        %v2414 = vshll.u32 %v1200, 16
        %v2416 = vrot.slane %v2414, 5
        %v2417 = vsel %vm1217, %v2412, %v2416
        %v2419 = vshrl.u32 %v1121, 16
        %v2421 = vrot.slane %v2419, 4
        %v2422 = vshll.u32 %v1121, 16
        %v2424 = vrot.slane %v2422, 5
        %v2425 = vor.u32 %v2421, %v2424
        %v2426 = vrot.slane %v2425, 4
        %v2428 = vshll.u32 %v1122, 16
        %v2430 = vrot.slane %v2428, 5
        %v2431 = vsel %vm1217, %v2426, %v2430
        %v2432 = vshrl.u32 %v1122, 16
        %v2434 = vrot.slane %v2432, 4
        %v2435 = vor.u32 %v2434, %v2430
        %v2436 = vrot.slane %v2435, 4
        %v2438 = vshll.u32 %v1201, 16
        %v2440 = vrot.slane %v2438, 5
        %v2441 = vsel %vm1217, %v2436, %v2440
        %v2443 = vshrl.u32 %v1123, 16
        %v2445 = vrot.slane %v2443, 4
        %v2446 = vshll.u32 %v1123, 16
        %v2448 = vrot.slane %v2446, 5
        %v2449 = vor.u32 %v2445, %v2448
        %v2450 = vrot.slane %v2449, 4
        %v2452 = vshll.u32 %v1124, 16
        %v2454 = vrot.slane %v2452, 5
        %v2455 = vsel %vm1217, %v2450, %v2454
        %v2456 = vshrl.u32 %v1124, 16
        %v2458 = vrot.slane %v2456, 4
        %v2459 = vor.u32 %v2458, %v2454
        %v2460 = vrot.slane %v2459, 4
        %v2462 = vshll.u32 %v1202, 16
        %v2464 = vrot.slane %v2462, 5
        %v2465 = vsel %vm1217, %v2460, %v2464
        %v2467 = vshrl.u32 %v1125, 16
        %v2469 = vrot.slane %v2467, 4
        %v2470 = vshll.u32 %v1125, 16
        %v2472 = vrot.slane %v2470, 5
        %v2473 = vor.u32 %v2469, %v2472
        %v2474 = vrot.slane %v2473, 4
        %v2476 = vshll.u32 %v1126, 16
        %v2478 = vrot.slane %v2476, 5
        %v2479 = vsel %vm1217, %v2474, %v2478
        %v2480 = vshrl.u32 %v1126, 16
        %v2482 = vrot.slane %v2480, 4
        %v2483 = vor.u32 %v2482, %v2478
        %v2484 = vrot.slane %v2483, 4
        %v2486 = vshll.u32 %v1203, 16
        %v2488 = vrot.slane %v2486, 5
        %v2489 = vsel %vm1217, %v2484, %v2488
        %v2491 = vshrl.u32 %v1127, 16
        %v2493 = vrot.slane %v2491, 4
        %v2494 = vshll.u32 %v1127, 16
        %v2496 = vrot.slane %v2494, 5
        %v2497 = vor.u32 %v2493, %v2496
        %v2498 = vrot.slane %v2497, 4
        %v2500 = vshll.u32 %v1128, 16
        %v2502 = vrot.slane %v2500, 5
        %v2503 = vsel %vm1217, %v2498, %v2502
        %v2504 = vshrl.u32 %v1128, 16
        %v2506 = vrot.slane %v2504, 4
        %v2507 = vor.u32 %v2506, %v2502
        %v2508 = vrot.slane %v2507, 4
        %v2510 = vshll.u32 %v1204, 16
        %v2512 = vrot.slane %v2510, 5
        %v2513 = vsel %vm1217, %v2508, %v2512
        %v2515 = vshrl.u32 %v1129, 16
        %v2517 = vrot.slane %v2515, 4
        %v2518 = vshll.u32 %v1129, 16
        %v2520 = vrot.slane %v2518, 5
        %v2521 = vor.u32 %v2517, %v2520
        %v2522 = vrot.slane %v2521, 4
        %v2524 = vshll.u32 %v1130, 16
        %v2526 = vrot.slane %v2524, 5
        %v2527 = vsel %vm1217, %v2522, %v2526
        %v2528 = vshrl.u32 %v1130, 16
        %v2530 = vrot.slane %v2528, 4
        %v2531 = vor.u32 %v2530, %v2526
        %v2532 = vrot.slane %v2531, 4
        %v2534 = vshll.u32 %v1205, 16
        %v2536 = vrot.slane %v2534, 5
        %v2537 = vsel %vm1217, %v2532, %v2536
        %v2539 = vshrl.u32 %v1131, 16
        %v2541 = vrot.slane %v2539, 4
        %v2542 = vshll.u32 %v1131, 16
        %v2544 = vrot.slane %v2542, 5
        %v2545 = vor.u32 %v2541, %v2544
        %v2546 = vrot.slane %v2545, 4
        %v2548 = vshll.u32 %v1132, 16
        %v2550 = vrot.slane %v2548, 5
        %v2551 = vsel %vm1217, %v2546, %v2550
        %v2552 = vshrl.u32 %v1132, 16
        %v2554 = vrot.slane %v2552, 4
        %v2555 = vor.u32 %v2554, %v2550
        %v2556 = vrot.slane %v2555, 4
        %v2558 = vshll.u32 %v1206, 16
        %v2560 = vrot.slane %v2558, 5
        %v2561 = vsel %vm1217, %v2556, %v2560
        %v2563 = vshrl.u32 %v1133, 16
        %v2565 = vrot.slane %v2563, 4
        %v2566 = vshll.u32 %v1133, 16
        %v2568 = vrot.slane %v2566, 5
        %v2569 = vor.u32 %v2565, %v2568
        %v2570 = vrot.slane %v2569, 4
        %v2572 = vshll.u32 %v1134, 16
        %v2574 = vrot.slane %v2572, 5
        %v2575 = vsel %vm1217, %v2570, %v2574
        %v2576 = vshrl.u32 %v1134, 16
        %v2578 = vrot.slane %v2576, 4
        %v2579 = vor.u32 %v2578, %v2574
        %v2580 = vrot.slane %v2579, 4
        %v2582 = vshll.u32 %v1207, 16
        %v2584 = vrot.slane %v2582, 5
        %v2585 = vsel %vm1217, %v2580, %v2584
        %v2587 = vshrl.u32 %v1135, 16
        %v2589 = vrot.slane %v2587, 4
        %v2590 = vshll.u32 %v1135, 16
        %v2592 = vrot.slane %v2590, 5
        %v2593 = vor.u32 %v2589, %v2592
        %v2594 = vrot.slane %v2593, 4
        %v2596 = vshll.u32 %v1136, 16
        %v2598 = vrot.slane %v2596, 5
        %v2599 = vsel %vm1217, %v2594, %v2598
        %v2600 = vshrl.u32 %v1136, 16
        %v2602 = vrot.slane %v2600, 4
        %v2603 = vor.u32 %v2602, %v2598
        %v2604 = vrot.slane %v2603, 4
        %v2606 = vshll.u32 %v1208, 16
        %v2608 = vrot.slane %v2606, 5
        %v2609 = vsel %vm1217, %v2604, %v2608
        %v2611 = vshrl.u32 %v1137, 16
        %v2613 = vrot.slane %v2611, 4
        %v2614 = vshll.u32 %v1137, 16
        %v2616 = vrot.slane %v2614, 5
        %v2617 = vor.u32 %v2613, %v2616
        %v2618 = vrot.slane %v2617, 4
        %v2620 = vshll.u32 %v1138, 16
        %v2622 = vrot.slane %v2620, 5
        %v2623 = vsel %vm1217, %v2618, %v2622
        %v2624 = vshrl.u32 %v1138, 16
        %v2626 = vrot.slane %v2624, 4
        %v2627 = vor.u32 %v2626, %v2622
        %v2628 = vrot.slane %v2627, 4
        %v2630 = vshll.u32 %v1209, 16
        %v2632 = vrot.slane %v2630, 5
        %v2633 = vsel %vm1217, %v2628, %v2632
        %v2635 = vshrl.u32 %v1139, 16
        %v2637 = vrot.slane %v2635, 4
        %v2638 = vshll.u32 %v1139, 16
        %v2640 = vrot.slane %v2638, 5
        %v2641 = vor.u32 %v2637, %v2640
        %v2642 = vrot.slane %v2641, 4
        %v2644 = vshll.u32 %v1140, 16
        %v2646 = vrot.slane %v2644, 5
        %v2647 = vsel %vm1217, %v2642, %v2646
        %v2648 = vshrl.u32 %v1140, 16
        %v2650 = vrot.slane %v2648, 4
        %v2651 = vor.u32 %v2650, %v2646
        %v2652 = vrot.slane %v2651, 4
        %v2654 = vshll.u32 %v1210, 16
        %v2656 = vrot.slane %v2654, 5
        %v2657 = vsel %vm1217, %v2652, %v2656
        %v2659 = vshrl.u32 %v1141, 16
        %v2661 = vrot.slane %v2659, 4
        %v2662 = vshll.u32 %v1141, 16
        %v2664 = vrot.slane %v2662, 5
        %v2665 = vor.u32 %v2661, %v2664
        %v2666 = vrot.slane %v2665, 4
        %v2668 = vshll.u32 %v1142, 16
        %v2670 = vrot.slane %v2668, 5
        %v2671 = vsel %vm1217, %v2666, %v2670
        %v2672 = vshrl.u32 %v1142, 16
        %v2674 = vrot.slane %v2672, 4
        %v2675 = vor.u32 %v2674, %v2670
        %v2676 = vrot.slane %v2675, 4
        %v2678 = vshll.u32 %v1211, 16
        %v2680 = vrot.slane %v2678, 5
        %v2681 = vsel %vm1217, %v2676, %v2680
        %v2683 = vshrl.u32 %v1143, 16
        %v2685 = vrot.slane %v2683, 4
        %v2686 = vshll.u32 %v1143, 16
        %v2688 = vrot.slane %v2686, 5
        %v2689 = vor.u32 %v2685, %v2688
        %v2690 = vrot.slane %v2689, 4
        %v2692 = vshll.u32 %v1144, 16
        %v2694 = vrot.slane %v2692, 5
        %v2695 = vsel %vm1217, %v2690, %v2694
        %v2696 = vshrl.u32 %v1144, 16
        %v2698 = vrot.slane %v2696, 4
        %v2699 = vor.u32 %v2698, %v2694
        %v2700 = vrot.slane %v2699, 4
        %v2702 = vshll.u32 %v1212, 16
        %v2704 = vrot.slane %v2702, 5
        %v2705 = vsel %vm1217, %v2700, %v2704
        %v2707 = vshrl.u32 %v1145, 16
        %v2709 = vrot.slane %v2707, 4
        %v2710 = vshll.u32 %v1145, 16
        %v2712 = vrot.slane %v2710, 5
        %v2713 = vor.u32 %v2709, %v2712
        %v2714 = vrot.slane %v2713, 4
        %v2716 = vshll.u32 %v1146, 16
        %v2718 = vrot.slane %v2716, 5
        %v2719 = vsel %vm1217, %v2714, %v2718
        %v2720 = vshrl.u32 %v1146, 16
        %v2722 = vrot.slane %v2720, 4
        %v2723 = vor.u32 %v2722, %v2718
        %v2724 = vrot.slane %v2723, 4
        %v2726 = vshll.u32 %v1213, 16
        %v2728 = vrot.slane %v2726, 5
        %v2729 = vsel %vm1217, %v2724, %v2728
        %v2731 = vshrl.u32 %v1147, 16
        %v2733 = vrot.slane %v2731, 4
        %v2734 = vshll.u32 %v1147, 16
        %v2736 = vrot.slane %v2734, 5
        %v2737 = vor.u32 %v2733, %v2736
        %v2738 = vrot.slane %v2737, 4
        %v2740 = vshll.u32 %v1148, 16
        %v2742 = vrot.slane %v2740, 5
        %v2743 = vsel %vm1217, %v2738, %v2742
        %v2744 = vshrl.u32 %v1148, 16
        %v2746 = vrot.slane %v2744, 4
        %v2747 = vor.u32 %v2746, %v2742
        %v2748 = vrot.slane %v2747, 4
        %v2750 = vshll.u32 %v1214, 16
        %v2752 = vrot.slane %v2750, 5
        %v2753 = vsel %vm1217, %v2748, %v2752
        %s2754 = scalar_lea.vmem %s1, 8
        %v2755 = vld [vmem:[%s2754] sm:$0xf]
        %v2756 = vld [vmem:[%s2754 + $0x4] sm:$0x1]
        %v2757 = vunpack.c.l.b16 %v1231
        %v2758 = vunpack.c.l.b16 %v1241
        %v2759 = vunpack.c.l.b16 %v1255
        %v2760 = vunpack.c.l.b16 %v1265
        %v2761 = vunpack.c.l.b16 %v1279
        %v2762 = vunpack.c.l.b16 %v1289
        %v2763 = vunpack.c.l.b16 %v1303
        %v2764 = vunpack.c.l.b16 %v1313
        %v2765 = vunpack.c.l.b16 %v1327
        %v2766 = vunpack.c.l.b16 %v1337
        %v2767 = vunpack.c.l.b16 %v1351
        %v2768 = vunpack.c.l.b16 %v1361
        %v2769 = vunpack.c.l.b16 %v1375
        %v2770 = vunpack.c.l.b16 %v1385
        %v2771 = vunpack.c.l.b16 %v1399
        %v2772 = vunpack.c.l.b16 %v1409
        %v2773 = vunpack.c.l.b16 %v1423
        %v2774 = vunpack.c.l.b16 %v1433
        %v2775 = vunpack.c.l.b16 %v1447
        %v2776 = vunpack.c.l.b16 %v1457
        %v2777 = vunpack.c.l.b16 %v1471
        %v2778 = vunpack.c.l.b16 %v1481
        %v2779 = vunpack.c.l.b16 %v1495
        %v2780 = vunpack.c.l.b16 %v1505
        %v2781 = vunpack.c.l.b16 %v1519
        %v2782 = vunpack.c.l.b16 %v1529
        %v2783 = vunpack.c.l.b16 %v1543
        %v2784 = vunpack.c.l.b16 %v1553
        %v2785 = vunpack.c.l.b16 %v1567
        %v2786 = vunpack.c.l.b16 %v1577
        %v2787 = vunpack.c.l.b16 %v1591
        %v2788 = vunpack.c.l.b16 %v1601
        %v2789 = vunpack.c.l.b16 %v1615
        %v2790 = vunpack.c.l.b16 %v1625
        %v2791 = vunpack.c.l.b16 %v1639
        %v2792 = vunpack.c.l.b16 %v1649
        %v2793 = vunpack.c.l.b16 %v1663
        %v2794 = vunpack.c.l.b16 %v1673
        %v2795 = vunpack.c.l.b16 %v1687
        %v2796 = vunpack.c.l.b16 %v1697
        %v2797 = vunpack.c.l.b16 %v1711
        %v2798 = vunpack.c.l.b16 %v1721
        %v2799 = vunpack.c.l.b16 %v1735
        %v2800 = vunpack.c.l.b16 %v1745
        %v2801 = vunpack.c.l.b16 %v1759
        %v2802 = vunpack.c.l.b16 %v1769
        %v2803 = vunpack.c.l.b16 %v1783
        %v2804 = vunpack.c.l.b16 %v1793
        %v2805 = vunpack.c.l.b16 %v1807
        %v2806 = vunpack.c.l.b16 %v1817
        %v2807 = vunpack.c.l.b16 %v1831
        %v2808 = vunpack.c.l.b16 %v1841
        %v2809 = vunpack.c.l.b16 %v1855
        %v2810 = vunpack.c.l.b16 %v1865
        %v2811 = vunpack.c.l.b16 %v1879
        %v2812 = vunpack.c.l.b16 %v1889
        %v2813 = vunpack.c.l.b16 %v1903
        %v2814 = vunpack.c.l.b16 %v1913
        %v2815 = vunpack.c.l.b16 %v1927
        %v2816 = vunpack.c.l.b16 %v1937
        %v2817 = vunpack.c.l.b16 %v1951
        %v2818 = vunpack.c.l.b16 %v1961
        %v2819 = vunpack.c.l.b16 %v1975
        %v2820 = vunpack.c.l.b16 %v1985
        %v2821 = vunpack.c.l.b16 %v1999
        %v2822 = vunpack.c.l.b16 %v2009
        %v2823 = vunpack.c.l.b16 %v2023
        %v2824 = vunpack.c.l.b16 %v2033
        %v2825 = vunpack.c.l.b16 %v2047
        %v2826 = vunpack.c.l.b16 %v2057
        %v2827 = vunpack.c.l.b16 %v2071
        %v2828 = vunpack.c.l.b16 %v2081
        %v2829 = vunpack.c.l.b16 %v2095
        %v2830 = vunpack.c.l.b16 %v2105
        %v2831 = vunpack.c.l.b16 %v2119
        %v2832 = vunpack.c.l.b16 %v2129
        %v2833 = vunpack.c.l.b16 %v2143
        %v2834 = vunpack.c.l.b16 %v2153
        %v2835 = vunpack.c.l.b16 %v2167
        %v2836 = vunpack.c.l.b16 %v2177
        %v2837 = vunpack.c.l.b16 %v2191
        %v2838 = vunpack.c.l.b16 %v2201
        %v2839 = vunpack.c.l.b16 %v2215
        %v2840 = vunpack.c.l.b16 %v2225
        %v2841 = vunpack.c.l.b16 %v2239
        %v2842 = vunpack.c.l.b16 %v2249
        %v2843 = vunpack.c.l.b16 %v2263
        %v2844 = vunpack.c.l.b16 %v2273
        %v2845 = vunpack.c.l.b16 %v2287
        %v2846 = vunpack.c.l.b16 %v2297
        %v2847 = vunpack.c.l.b16 %v2311
        %v2848 = vunpack.c.l.b16 %v2321
        %v2849 = vunpack.c.l.b16 %v2335
        %v2850 = vunpack.c.l.b16 %v2345
        %v2851 = vunpack.c.l.b16 %v2359
        %v2852 = vunpack.c.l.b16 %v2369
        %v2853 = vunpack.c.l.b16 %v2383
        %v2854 = vunpack.c.l.b16 %v2393
        %v2855 = vunpack.c.l.b16 %v2407
        %v2856 = vunpack.c.l.b16 %v2417
        %v2857 = vunpack.c.l.b16 %v2431
        %v2858 = vunpack.c.l.b16 %v2441
        %v2859 = vunpack.c.l.b16 %v2455
        %v2860 = vunpack.c.l.b16 %v2465
        %v2861 = vunpack.c.l.b16 %v2479
        %v2862 = vunpack.c.l.b16 %v2489
        %v2863 = vunpack.c.l.b16 %v2503
        %v2864 = vunpack.c.l.b16 %v2513
        %v2865 = vunpack.c.l.b16 %v2527
        %v2866 = vunpack.c.l.b16 %v2537
        %v2867 = vunpack.c.l.b16 %v2551
        %v2868 = vunpack.c.l.b16 %v2561
        %v2869 = vunpack.c.l.b16 %v2575
        %v2870 = vunpack.c.l.b16 %v2585
        %v2871 = vunpack.c.l.b16 %v2599
        %v2872 = vunpack.c.l.b16 %v2609
        %v2873 = vunpack.c.l.b16 %v2623
        %v2874 = vunpack.c.l.b16 %v2633
        %v2875 = vunpack.c.l.b16 %v2647
        %v2876 = vunpack.c.l.b16 %v2657
        %v2877 = vunpack.c.l.b16 %v2671
        %v2878 = vunpack.c.l.b16 %v2681
        %v2879 = vunpack.c.l.b16 %v2695
        %v2880 = vunpack.c.l.b16 %v2705
        %v2881 = vunpack.c.l.b16 %v2719
        %v2882 = vunpack.c.l.b16 %v2729
        %v2883 = vunpack.c.l.b16 %v2743
        %v2884 = vunpack.c.l.b16 %v2753
        %v2885 = vpack.c.b16 %v2758, %v2757
        %v2886 = vpack.c.b16 %v2760, %v2759
        %v2887 = vpack.c.b16 %v2762, %v2761
        %v2888 = vpack.c.b16 %v2764, %v2763
        %v2889 = vpack.c.b16 %v2766, %v2765
        %v2890 = vpack.c.b16 %v2768, %v2767
        %v2891 = vpack.c.b16 %v2770, %v2769
        %v2892 = vpack.c.b16 %v2772, %v2771
        %v2893 = vpack.c.b16 %v2774, %v2773
        %v2894 = vpack.c.b16 %v2776, %v2775
        %v2895 = vpack.c.b16 %v2778, %v2777
        %v2896 = vpack.c.b16 %v2780, %v2779
        %v2897 = vpack.c.b16 %v2782, %v2781
        %v2898 = vpack.c.b16 %v2784, %v2783
        %v2899 = vpack.c.b16 %v2786, %v2785
        %v2900 = vpack.c.b16 %v2788, %v2787
        %v2901 = vpack.c.b16 %v2790, %v2789
        %v2902 = vpack.c.b16 %v2792, %v2791
        %v2903 = vpack.c.b16 %v2794, %v2793
        %v2904 = vpack.c.b16 %v2796, %v2795
        %v2905 = vpack.c.b16 %v2798, %v2797
        %v2906 = vpack.c.b16 %v2800, %v2799
        %v2907 = vpack.c.b16 %v2802, %v2801
        %v2908 = vpack.c.b16 %v2804, %v2803
        %v2909 = vpack.c.b16 %v2806, %v2805
        %v2910 = vpack.c.b16 %v2808, %v2807
        %v2911 = vpack.c.b16 %v2810, %v2809
        %v2912 = vpack.c.b16 %v2812, %v2811
        %v2913 = vpack.c.b16 %v2814, %v2813
        %v2914 = vpack.c.b16 %v2816, %v2815
        %v2915 = vpack.c.b16 %v2818, %v2817
        %v2916 = vpack.c.b16 %v2820, %v2819
        %v2917 = vpack.c.b16 %v2822, %v2821
        %v2918 = vpack.c.b16 %v2824, %v2823
        %v2919 = vpack.c.b16 %v2826, %v2825
        %v2920 = vpack.c.b16 %v2828, %v2827
        %v2921 = vpack.c.b16 %v2830, %v2829
        %v2922 = vpack.c.b16 %v2832, %v2831
        %v2923 = vpack.c.b16 %v2834, %v2833
        %v2924 = vpack.c.b16 %v2836, %v2835
        %v2925 = vpack.c.b16 %v2838, %v2837
        %v2926 = vpack.c.b16 %v2840, %v2839
        %v2927 = vpack.c.b16 %v2842, %v2841
        %v2928 = vpack.c.b16 %v2844, %v2843
        %v2929 = vpack.c.b16 %v2846, %v2845
        %v2930 = vpack.c.b16 %v2848, %v2847
        %v2931 = vpack.c.b16 %v2850, %v2849
        %v2932 = vpack.c.b16 %v2852, %v2851
        %v2933 = vpack.c.b16 %v2854, %v2853
        %v2934 = vpack.c.b16 %v2856, %v2855
        %v2935 = vpack.c.b16 %v2858, %v2857
        %v2936 = vpack.c.b16 %v2860, %v2859
        %v2937 = vpack.c.b16 %v2862, %v2861
        %v2938 = vpack.c.b16 %v2864, %v2863
        %v2939 = vpack.c.b16 %v2866, %v2865
        %v2940 = vpack.c.b16 %v2868, %v2867
        %v2941 = vpack.c.b16 %v2870, %v2869
        %v2942 = vpack.c.b16 %v2872, %v2871
        %v2943 = vpack.c.b16 %v2874, %v2873
        %v2944 = vpack.c.b16 %v2876, %v2875
        %v2945 = vpack.c.b16 %v2878, %v2877
        %v2946 = vpack.c.b16 %v2880, %v2879
        %v2947 = vpack.c.b16 %v2882, %v2881
        %v2948 = vpack.c.b16 %v2884, %v2883
        %v2951 = vunpack.c.l.b16 %v2755
        %v2952 = vunpack.c.l.b16 %v2756
        %v2953 = vpack.c.b16 %v2952, %v2951
        %vm2954 = vcmask 72704
        %v2956 = vsel %vm2954, %v2885, 0
        %v2959 = vsel %vm2954, %v2886, 0
        %v2962 = vsel %vm2954, %v2887, 0
        %v2965 = vsel %vm2954, %v2888, 0
        %v2968 = vsel %vm2954, %v2889, 0
        %v2971 = vsel %vm2954, %v2890, 0
        %v2974 = vsel %vm2954, %v2891, 0
        %v2977 = vsel %vm2954, %v2892, 0
        %v2980 = vsel %vm2954, %v2893, 0
        %v2983 = vsel %vm2954, %v2894, 0
        %v2986 = vsel %vm2954, %v2895, 0
        %v2989 = vsel %vm2954, %v2896, 0
        %v2992 = vsel %vm2954, %v2897, 0
        %v2995 = vsel %vm2954, %v2898, 0
        %v2998 = vsel %vm2954, %v2899, 0
        %v3001 = vsel %vm2954, %v2900, 0
        %v3004 = vsel %vm2954, %v2901, 0
        %v3007 = vsel %vm2954, %v2902, 0
        %v3010 = vsel %vm2954, %v2903, 0
        %v3013 = vsel %vm2954, %v2904, 0
        %v3016 = vsel %vm2954, %v2905, 0
        %v3019 = vsel %vm2954, %v2906, 0
        %v3022 = vsel %vm2954, %v2907, 0
        %v3025 = vsel %vm2954, %v2908, 0
        %v3028 = vsel %vm2954, %v2909, 0
        %v3031 = vsel %vm2954, %v2910, 0
        %v3034 = vsel %vm2954, %v2911, 0
        %v3037 = vsel %vm2954, %v2912, 0
        %v3040 = vsel %vm2954, %v2913, 0
        %v3043 = vsel %vm2954, %v2914, 0
        %v3046 = vsel %vm2954, %v2915, 0
        %v3049 = vsel %vm2954, %v2916, 0
        %v3052 = vsel %vm2954, %v2917, 0
        %v3055 = vsel %vm2954, %v2918, 0
        %v3058 = vsel %vm2954, %v2919, 0
        %v3061 = vsel %vm2954, %v2920, 0
        %v3064 = vsel %vm2954, %v2921, 0
        %v3067 = vsel %vm2954, %v2922, 0
        %v3070 = vsel %vm2954, %v2923, 0
        %v3073 = vsel %vm2954, %v2924, 0
        %v3076 = vsel %vm2954, %v2925, 0
        %v3079 = vsel %vm2954, %v2926, 0
        %v3082 = vsel %vm2954, %v2927, 0
        %v3085 = vsel %vm2954, %v2928, 0
        %v3088 = vsel %vm2954, %v2929, 0
        %v3091 = vsel %vm2954, %v2930, 0
        %v3094 = vsel %vm2954, %v2931, 0
        %v3097 = vsel %vm2954, %v2932, 0
        %v3100 = vsel %vm2954, %v2933, 0
        %v3103 = vsel %vm2954, %v2934, 0
        %v3106 = vsel %vm2954, %v2935, 0
        %v3109 = vsel %vm2954, %v2936, 0
        %v3112 = vsel %vm2954, %v2937, 0
        %v3115 = vsel %vm2954, %v2938, 0
        %v3118 = vsel %vm2954, %v2939, 0
        %v3121 = vsel %vm2954, %v2940, 0
        %v3124 = vsel %vm2954, %v2941, 0
        %v3127 = vsel %vm2954, %v2942, 0
        %v3130 = vsel %vm2954, %v2943, 0
        %v3133 = vsel %vm2954, %v2944, 0
        %v3136 = vsel %vm2954, %v2945, 0
        %v3139 = vsel %vm2954, %v2946, 0
        %v3142 = vsel %vm2954, %v2947, 0
        %v3145 = vsel %vm2954, %v2948, 0
        %vm3147 = vcmask 1043456
        %vm3148 = vcmask 1044480
        %v3149 = vsel %vm3147, 4294967295, 65535
        %v3150 = vsel %vm3148, %v3149, 0
        %v3152 = vand.u32 %v2953, %v3150
        %3154 = vmatprep.subr.bf16.mxu0 0
        %3155 = vmatpush1.bf16.msra.mxu0 %v3152
        %3156 = vmatprep.subr.bf16.mxu0 0
        %3157 = vmatpush1.bf16.msra.mxu0 0
        %3158 = vmatprep.subr.bf16.mxu0 0
        %3159 = vmatpush1.bf16.msra.mxu0 0
        %3160 = vmatprep.subr.bf16.mxu0 0
        %3161 = vmatpush1.bf16.msra.mxu0 0
        %3162 = vmatprep.subr.bf16.mxu0 0
        %3163 = vmatpush1.bf16.msra.mxu0 0
        %3164 = vmatprep.subr.bf16.mxu0 0
        %3165 = vmatpush1.bf16.msra.mxu0 0
        %3166 = vmatprep.subr.bf16.mxu0 0
        %3167 = vmatpush1.bf16.msra.mxu0 0
        %3168 = vmatprep.subr.bf16.mxu0 0
        %3169 = vmatpush1.bf16.msra.mxu0 0
        %3170 = vmatprep.subr.bf16.mxu0 0
        %3171 = vmatpush1.bf16.msra.mxu0 0
        %3172 = vmatprep.subr.bf16.mxu0 0
        %3173 = vmatpush1.bf16.msra.mxu0 0
        %3174 = vmatprep.subr.bf16.mxu0 0
        %3175 = vmatpush1.bf16.msra.mxu0 0
        %3176 = vmatprep.subr.bf16.mxu0 0
        %3177 = vmatpush1.bf16.msra.mxu0 0
        %3178 = vmatprep.subr.bf16.mxu0 0
        %3179 = vmatpush1.bf16.msra.mxu0 0
        %3180 = vmatprep.subr.bf16.mxu0 0
        %3181 = vmatpush1.bf16.msra.mxu0 0
        %3182 = vmatprep.subr.bf16.mxu0 0
        %3183 = vmatpush1.bf16.msra.mxu0 0
        %3184 = vmatprep.subr.bf16.mxu0 0
        %3185 = vmatpush1.bf16.msra.mxu0 0
        %3186 = vmatprep.mubr.bf16.mxu0 0
        %3187 = vmatmul.mubr.bf16.gmra.mrb[0].mxu0 %v2956
        %v3188 = vpop.f32.mrb[0].mxu0
        %v3189 = vadd.f32 0.0, %v3188
        %v3190 = vpop.f32.mrb[0].mxu0
        %v3191 = vpop.f32.mrb[0].mxu0
        %v3192 = vadd.f32 0.0, %v3191
        %v3193 = vpop.f32.mrb[0].mxu0
        %3194 = vmatprep.mubr.bf16.mxu0 0
        %3195 = vmatmul.mubr.bf16.gmra.mrb[0].mxu0 %v2959
        %v3196 = vpop.f32.mrb[0].mxu0
        %v3197 = vadd.f32 0.0, %v3196
        %v3198 = vpop.f32.mrb[0].mxu0
        %v3199 = vpop.f32.mrb[0].mxu0
        %v3200 = vadd.f32 0.0, %v3199
        %v3201 = vpop.f32.mrb[0].mxu0
        %3202 = vmatprep.mubr.bf16.mxu0 0
        %3203 = vmatmul.mubr.bf16.gmra.mrb[0].mxu0 %v2962
        %v3204 = vpop.f32.mrb[0].mxu0
        %v3205 = vadd.f32 0.0, %v3204
        %v3206 = vpop.f32.mrb[0].mxu0
        %v3207 = vpop.f32.mrb[0].mxu0
        %v3208 = vadd.f32 0.0, %v3207
        %v3209 = vpop.f32.mrb[0].mxu0
        %3210 = vmatprep.mubr.bf16.mxu0 0
        %3211 = vmatmul.mubr.bf16.gmra.mrb[0].mxu0 %v2965
        %v3212 = vpop.f32.mrb[0].mxu0
        %v3213 = vadd.f32 0.0, %v3212
        %v3214 = vpop.f32.mrb[0].mxu0
        %v3215 = vpop.f32.mrb[0].mxu0
        %v3216 = vadd.f32 0.0, %v3215
        %v3217 = vpop.f32.mrb[0].mxu0
        %3218 = vmatprep.mubr.bf16.mxu0 0
        %3219 = vmatmul.mubr.bf16.gmra.mrb[0].mxu0 %v2968
        %v3220 = vpop.f32.mrb[0].mxu0
        %v3221 = vadd.f32 0.0, %v3220
        %v3222 = vpop.f32.mrb[0].mxu0
        %v3223 = vpop.f32.mrb[0].mxu0
        %v3224 = vadd.f32 0.0, %v3223
        %v3225 = vpop.f32.mrb[0].mxu0
        %3226 = vmatprep.mubr.bf16.mxu0 0
        %3227 = vmatmul.mubr.bf16.gmra.mrb[0].mxu0 %v2971
        %v3228 = vpop.f32.mrb[0].mxu0
        %v3229 = vadd.f32 0.0, %v3228
        %v3230 = vpop.f32.mrb[0].mxu0
        %v3231 = vpop.f32.mrb[0].mxu0
        %v3232 = vadd.f32 0.0, %v3231
        %v3233 = vpop.f32.mrb[0].mxu0
        %3234 = vmatprep.mubr.bf16.mxu0 0
        %3235 = vmatmul.mubr.bf16.gmra.mrb[0].mxu0 %v2974
        %v3236 = vpop.f32.mrb[0].mxu0
        %v3237 = vadd.f32 0.0, %v3236
        %v3238 = vpop.f32.mrb[0].mxu0
        %v3239 = vpop.f32.mrb[0].mxu0
        %v3240 = vadd.f32 0.0, %v3239
        %v3241 = vpop.f32.mrb[0].mxu0
        %3242 = vmatprep.mubr.bf16.mxu0 0
        %3243 = vmatmul.mubr.bf16.gmra.mrb[0].mxu0 %v2977
        %v3244 = vpop.f32.mrb[0].mxu0
        %v3245 = vadd.f32 0.0, %v3244
        %v3246 = vpop.f32.mrb[0].mxu0
        %v3247 = vpop.f32.mrb[0].mxu0
        %v3248 = vadd.f32 0.0, %v3247
        %v3249 = vpop.f32.mrb[0].mxu0
        %3250 = vmatprep.mubr.bf16.mxu0 0
        %3251 = vmatmul.mubr.bf16.gmra.mrb[0].mxu0 %v2980
        %v3252 = vpop.f32.mrb[0].mxu0
        %v3253 = vadd.f32 0.0, %v3252
        %v3254 = vpop.f32.mrb[0].mxu0
        %v3255 = vpop.f32.mrb[0].mxu0
        %v3256 = vadd.f32 0.0, %v3255
        %v3257 = vpop.f32.mrb[0].mxu0
        %3258 = vmatprep.mubr.bf16.mxu0 0
        %3259 = vmatmul.mubr.bf16.gmra.mrb[0].mxu0 %v2983
        %v3260 = vpop.f32.mrb[0].mxu0
        %v3261 = vadd.f32 0.0, %v3260
        %v3262 = vpop.f32.mrb[0].mxu0
        %v3263 = vpop.f32.mrb[0].mxu0
        %v3264 = vadd.f32 0.0, %v3263
        %v3265 = vpop.f32.mrb[0].mxu0
        %3266 = vmatprep.mubr.bf16.mxu0 0
        %3267 = vmatmul.mubr.bf16.gmra.mrb[0].mxu0 %v2986
        %v3268 = vpop.f32.mrb[0].mxu0
        %v3269 = vadd.f32 0.0, %v3268
        %v3270 = vpop.f32.mrb[0].mxu0
        %v3271 = vpop.f32.mrb[0].mxu0
        %v3272 = vadd.f32 0.0, %v3271
        %v3273 = vpop.f32.mrb[0].mxu0
        %3274 = vmatprep.mubr.bf16.mxu0 0
        %3275 = vmatmul.mubr.bf16.gmra.mrb[0].mxu0 %v2989
        %v3276 = vpop.f32.mrb[0].mxu0
        %v3277 = vadd.f32 0.0, %v3276
        %v3278 = vpop.f32.mrb[0].mxu0
        %v3279 = vpop.f32.mrb[0].mxu0
        %v3280 = vadd.f32 0.0, %v3279
        %v3281 = vpop.f32.mrb[0].mxu0
        %3282 = vmatprep.mubr.bf16.mxu0 0
        %3283 = vmatmul.mubr.bf16.gmra.mrb[0].mxu0 %v2992
        %v3284 = vpop.f32.mrb[0].mxu0
        %v3285 = vadd.f32 0.0, %v3284
        %v3286 = vpop.f32.mrb[0].mxu0
        %v3287 = vpop.f32.mrb[0].mxu0
        %v3288 = vadd.f32 0.0, %v3287
        %v3289 = vpop.f32.mrb[0].mxu0
        %3290 = vmatprep.mubr.bf16.mxu0 0
        %3291 = vmatmul.mubr.bf16.gmra.mrb[0].mxu0 %v2995
        %v3292 = vpop.f32.mrb[0].mxu0
        %v3293 = vadd.f32 0.0, %v3292
        %v3294 = vpop.f32.mrb[0].mxu0
        %v3295 = vpop.f32.mrb[0].mxu0
        %v3296 = vadd.f32 0.0, %v3295
        %v3297 = vpop.f32.mrb[0].mxu0
        %3298 = vmatprep.mubr.bf16.mxu0 0
        %3299 = vmatmul.mubr.bf16.gmra.mrb[0].mxu0 %v2998
        %v3300 = vpop.f32.mrb[0].mxu0
        %v3301 = vadd.f32 0.0, %v3300
        %v3302 = vpop.f32.mrb[0].mxu0
        %v3303 = vpop.f32.mrb[0].mxu0
        %v3304 = vadd.f32 0.0, %v3303
        %v3305 = vpop.f32.mrb[0].mxu0
        %3306 = vmatprep.mubr.bf16.mxu0 0
        %3307 = vmatmul.mubr.bf16.gmra.mrb[0].mxu0 %v3001
        %v3308 = vpop.f32.mrb[0].mxu0
        %v3309 = vadd.f32 0.0, %v3308
        %v3310 = vpop.f32.mrb[0].mxu0
        %v3311 = vpop.f32.mrb[0].mxu0
        %v3312 = vadd.f32 0.0, %v3311
        %v3313 = vpop.f32.mrb[0].mxu0
        %3314 = vmatprep.mubr.bf16.mxu0 0
        %3315 = vmatmul.mubr.bf16.gmra.mrb[0].mxu0 %v3004
        %v3316 = vpop.f32.mrb[0].mxu0
        %v3317 = vadd.f32 0.0, %v3316
        %v3318 = vpop.f32.mrb[0].mxu0
        %v3319 = vpop.f32.mrb[0].mxu0
        %v3320 = vadd.f32 0.0, %v3319
        %v3321 = vpop.f32.mrb[0].mxu0
        %3322 = vmatprep.mubr.bf16.mxu0 0
        %3323 = vmatmul.mubr.bf16.gmra.mrb[0].mxu0 %v3007
        %v3324 = vpop.f32.mrb[0].mxu0
        %v3325 = vadd.f32 0.0, %v3324
        %v3326 = vpop.f32.mrb[0].mxu0
        %v3327 = vpop.f32.mrb[0].mxu0
        %v3328 = vadd.f32 0.0, %v3327
        %v3329 = vpop.f32.mrb[0].mxu0
        %3330 = vmatprep.mubr.bf16.mxu0 0
        %3331 = vmatmul.mubr.bf16.gmra.mrb[0].mxu0 %v3010
        %v3332 = vpop.f32.mrb[0].mxu0
        %v3333 = vadd.f32 0.0, %v3332
        %v3334 = vpop.f32.mrb[0].mxu0
        %v3335 = vpop.f32.mrb[0].mxu0
        %v3336 = vadd.f32 0.0, %v3335
        %v3337 = vpop.f32.mrb[0].mxu0
        %3338 = vmatprep.mubr.bf16.mxu0 0
        %3339 = vmatmul.mubr.bf16.gmra.mrb[0].mxu0 %v3013
        %v3340 = vpop.f32.mrb[0].mxu0
        %v3341 = vadd.f32 0.0, %v3340
        %v3342 = vpop.f32.mrb[0].mxu0
        %v3343 = vpop.f32.mrb[0].mxu0
        %v3344 = vadd.f32 0.0, %v3343
        %v3345 = vpop.f32.mrb[0].mxu0
        %3346 = vmatprep.mubr.bf16.mxu0 0
        %3347 = vmatmul.mubr.bf16.gmra.mrb[0].mxu0 %v3016
        %v3348 = vpop.f32.mrb[0].mxu0
        %v3349 = vadd.f32 0.0, %v3348
        %v3350 = vpop.f32.mrb[0].mxu0
        %v3351 = vpop.f32.mrb[0].mxu0
        %v3352 = vadd.f32 0.0, %v3351
        %v3353 = vpop.f32.mrb[0].mxu0
        %3354 = vmatprep.mubr.bf16.mxu0 0
        %3355 = vmatmul.mubr.bf16.gmra.mrb[0].mxu0 %v3019
        %v3356 = vpop.f32.mrb[0].mxu0
        %v3357 = vadd.f32 0.0, %v3356
        %v3358 = vpop.f32.mrb[0].mxu0
        %v3359 = vpop.f32.mrb[0].mxu0
        %v3360 = vadd.f32 0.0, %v3359
        %v3361 = vpop.f32.mrb[0].mxu0
        %3362 = vmatprep.mubr.bf16.mxu0 0
        %3363 = vmatmul.mubr.bf16.gmra.mrb[0].mxu0 %v3022
        %v3364 = vpop.f32.mrb[0].mxu0
        %v3365 = vadd.f32 0.0, %v3364
        %v3366 = vpop.f32.mrb[0].mxu0
        %v3367 = vpop.f32.mrb[0].mxu0
        %v3368 = vadd.f32 0.0, %v3367
        %v3369 = vpop.f32.mrb[0].mxu0
        %3370 = vmatprep.mubr.bf16.mxu0 0
        %3371 = vmatmul.mubr.bf16.gmra.mrb[0].mxu0 %v3025
        %v3372 = vpop.f32.mrb[0].mxu0
        %v3373 = vadd.f32 0.0, %v3372
        %v3374 = vpop.f32.mrb[0].mxu0
        %v3375 = vpop.f32.mrb[0].mxu0
        %v3376 = vadd.f32 0.0, %v3375
        %v3377 = vpop.f32.mrb[0].mxu0
        %3378 = vmatprep.mubr.bf16.mxu0 0
        %3379 = vmatmul.mubr.bf16.gmra.mrb[0].mxu0 %v3028
        %v3380 = vpop.f32.mrb[0].mxu0
        %v3381 = vadd.f32 0.0, %v3380
        %v3382 = vpop.f32.mrb[0].mxu0
        %v3383 = vpop.f32.mrb[0].mxu0
        %v3384 = vadd.f32 0.0, %v3383
        %v3385 = vpop.f32.mrb[0].mxu0
        %3386 = vmatprep.mubr.bf16.mxu0 0
        %3387 = vmatmul.mubr.bf16.gmra.mrb[0].mxu0 %v3031
        %v3388 = vpop.f32.mrb[0].mxu0
        %v3389 = vadd.f32 0.0, %v3388
        %v3390 = vpop.f32.mrb[0].mxu0
        %v3391 = vpop.f32.mrb[0].mxu0
        %v3392 = vadd.f32 0.0, %v3391
        %v3393 = vpop.f32.mrb[0].mxu0
        %3394 = vmatprep.mubr.bf16.mxu0 0
        %3395 = vmatmul.mubr.bf16.gmra.mrb[0].mxu0 %v3034
        %v3396 = vpop.f32.mrb[0].mxu0
        %v3397 = vadd.f32 0.0, %v3396
        %v3398 = vpop.f32.mrb[0].mxu0
        %v3399 = vpop.f32.mrb[0].mxu0
        %v3400 = vadd.f32 0.0, %v3399
        %v3401 = vpop.f32.mrb[0].mxu0
        %3402 = vmatprep.mubr.bf16.mxu0 0
        %3403 = vmatmul.mubr.bf16.gmra.mrb[0].mxu0 %v3037
        %v3404 = vpop.f32.mrb[0].mxu0
        %v3405 = vadd.f32 0.0, %v3404
        %v3406 = vpop.f32.mrb[0].mxu0
        %v3407 = vpop.f32.mrb[0].mxu0
        %v3408 = vadd.f32 0.0, %v3407
        %v3409 = vpop.f32.mrb[0].mxu0
        %3410 = vmatprep.mubr.bf16.mxu0 0
        %3411 = vmatmul.mubr.bf16.gmra.mrb[0].mxu0 %v3040
        %v3412 = vpop.f32.mrb[0].mxu0
        %v3413 = vadd.f32 0.0, %v3412
        %v3414 = vpop.f32.mrb[0].mxu0
        %v3415 = vpop.f32.mrb[0].mxu0
        %v3416 = vadd.f32 0.0, %v3415
        %v3417 = vpop.f32.mrb[0].mxu0
        %3418 = vmatprep.mubr.bf16.mxu0 0
        %3419 = vmatmul.mubr.bf16.gmra.mrb[0].mxu0 %v3043
        %v3420 = vpop.f32.mrb[0].mxu0
        %v3421 = vadd.f32 0.0, %v3420
        %v3422 = vpop.f32.mrb[0].mxu0
        %v3423 = vpop.f32.mrb[0].mxu0
        %v3424 = vadd.f32 0.0, %v3423
        %v3425 = vpop.f32.mrb[0].mxu0
        %3426 = vmatprep.mubr.bf16.mxu0 0
        %3427 = vmatmul.mubr.bf16.gmra.mrb[0].mxu0 %v3046
        %v3428 = vpop.f32.mrb[0].mxu0
        %v3429 = vadd.f32 0.0, %v3428
        %v3430 = vpop.f32.mrb[0].mxu0
        %v3431 = vpop.f32.mrb[0].mxu0
        %v3432 = vadd.f32 0.0, %v3431
        %v3433 = vpop.f32.mrb[0].mxu0
        %3434 = vmatprep.mubr.bf16.mxu0 0
        %3435 = vmatmul.mubr.bf16.gmra.mrb[0].mxu0 %v3049
        %v3436 = vpop.f32.mrb[0].mxu0
        %v3437 = vadd.f32 0.0, %v3436
        %v3438 = vpop.f32.mrb[0].mxu0
        %v3439 = vpop.f32.mrb[0].mxu0
        %v3440 = vadd.f32 0.0, %v3439
        %v3441 = vpop.f32.mrb[0].mxu0
        %3442 = vmatprep.mubr.bf16.mxu0 0
        %3443 = vmatmul.mubr.bf16.gmra.mrb[0].mxu0 %v3052
        %v3444 = vpop.f32.mrb[0].mxu0
        %v3445 = vadd.f32 0.0, %v3444
        %v3446 = vpop.f32.mrb[0].mxu0
        %v3447 = vpop.f32.mrb[0].mxu0
        %v3448 = vadd.f32 0.0, %v3447
        %v3449 = vpop.f32.mrb[0].mxu0
        %3450 = vmatprep.mubr.bf16.mxu0 0
        %3451 = vmatmul.mubr.bf16.gmra.mrb[0].mxu0 %v3055
        %v3452 = vpop.f32.mrb[0].mxu0
        %v3453 = vadd.f32 0.0, %v3452
        %v3454 = vpop.f32.mrb[0].mxu0
        %v3455 = vpop.f32.mrb[0].mxu0
        %v3456 = vadd.f32 0.0, %v3455
        %v3457 = vpop.f32.mrb[0].mxu0
        %3458 = vmatprep.mubr.bf16.mxu0 0
        %3459 = vmatmul.mubr.bf16.gmra.mrb[0].mxu0 %v3058
        %v3460 = vpop.f32.mrb[0].mxu0
        %v3461 = vadd.f32 0.0, %v3460
        %v3462 = vpop.f32.mrb[0].mxu0
        %v3463 = vpop.f32.mrb[0].mxu0
        %v3464 = vadd.f32 0.0, %v3463
        %v3465 = vpop.f32.mrb[0].mxu0
        %3466 = vmatprep.mubr.bf16.mxu0 0
        %3467 = vmatmul.mubr.bf16.gmra.mrb[0].mxu0 %v3061
        %v3468 = vpop.f32.mrb[0].mxu0
        %v3469 = vadd.f32 0.0, %v3468
        %v3470 = vpop.f32.mrb[0].mxu0
        %v3471 = vpop.f32.mrb[0].mxu0
        %v3472 = vadd.f32 0.0, %v3471
        %v3473 = vpop.f32.mrb[0].mxu0
        %3474 = vmatprep.mubr.bf16.mxu0 0
        %3475 = vmatmul.mubr.bf16.gmra.mrb[0].mxu0 %v3064
        %v3476 = vpop.f32.mrb[0].mxu0
        %v3477 = vadd.f32 0.0, %v3476
        %v3478 = vpop.f32.mrb[0].mxu0
        %v3479 = vpop.f32.mrb[0].mxu0
        %v3480 = vadd.f32 0.0, %v3479
        %v3481 = vpop.f32.mrb[0].mxu0
        %3482 = vmatprep.mubr.bf16.mxu0 0
        %3483 = vmatmul.mubr.bf16.gmra.mrb[0].mxu0 %v3067
        %v3484 = vpop.f32.mrb[0].mxu0
        %v3485 = vadd.f32 0.0, %v3484
        %v3486 = vpop.f32.mrb[0].mxu0
        %v3487 = vpop.f32.mrb[0].mxu0
        %v3488 = vadd.f32 0.0, %v3487
        %v3489 = vpop.f32.mrb[0].mxu0
        %3490 = vmatprep.mubr.bf16.mxu0 0
        %3491 = vmatmul.mubr.bf16.gmra.mrb[0].mxu0 %v3070
        %v3492 = vpop.f32.mrb[0].mxu0
        %v3493 = vadd.f32 0.0, %v3492
        %v3494 = vpop.f32.mrb[0].mxu0
        %v3495 = vpop.f32.mrb[0].mxu0
        %v3496 = vadd.f32 0.0, %v3495
        %v3497 = vpop.f32.mrb[0].mxu0
        %3498 = vmatprep.mubr.bf16.mxu0 0
        %3499 = vmatmul.mubr.bf16.gmra.mrb[0].mxu0 %v3073
        %v3500 = vpop.f32.mrb[0].mxu0
        %v3501 = vadd.f32 0.0, %v3500
        %v3502 = vpop.f32.mrb[0].mxu0
        %v3503 = vpop.f32.mrb[0].mxu0
        %v3504 = vadd.f32 0.0, %v3503
        %v3505 = vpop.f32.mrb[0].mxu0
        %3506 = vmatprep.mubr.bf16.mxu0 0
        %3507 = vmatmul.mubr.bf16.gmra.mrb[0].mxu0 %v3076
        %v3508 = vpop.f32.mrb[0].mxu0
        %v3509 = vadd.f32 0.0, %v3508
        %v3510 = vpop.f32.mrb[0].mxu0
        %v3511 = vpop.f32.mrb[0].mxu0
        %v3512 = vadd.f32 0.0, %v3511
        %v3513 = vpop.f32.mrb[0].mxu0
        %3514 = vmatprep.mubr.bf16.mxu0 0
        %3515 = vmatmul.mubr.bf16.gmra.mrb[0].mxu0 %v3079
        %v3516 = vpop.f32.mrb[0].mxu0
        %v3517 = vadd.f32 0.0, %v3516
        %v3518 = vpop.f32.mrb[0].mxu0
        %v3519 = vpop.f32.mrb[0].mxu0
        %v3520 = vadd.f32 0.0, %v3519
        %v3521 = vpop.f32.mrb[0].mxu0
        %3522 = vmatprep.mubr.bf16.mxu0 0
        %3523 = vmatmul.mubr.bf16.gmra.mrb[0].mxu0 %v3082
        %v3524 = vpop.f32.mrb[0].mxu0
        %v3525 = vadd.f32 0.0, %v3524
        %v3526 = vpop.f32.mrb[0].mxu0
        %v3527 = vpop.f32.mrb[0].mxu0
        %v3528 = vadd.f32 0.0, %v3527
        %v3529 = vpop.f32.mrb[0].mxu0
        %3530 = vmatprep.mubr.bf16.mxu0 0
        %3531 = vmatmul.mubr.bf16.gmra.mrb[0].mxu0 %v3085
        %v3532 = vpop.f32.mrb[0].mxu0
        %v3533 = vadd.f32 0.0, %v3532
        %v3534 = vpop.f32.mrb[0].mxu0
        %v3535 = vpop.f32.mrb[0].mxu0
        %v3536 = vadd.f32 0.0, %v3535
        %v3537 = vpop.f32.mrb[0].mxu0
        %3538 = vmatprep.mubr.bf16.mxu0 0
        %3539 = vmatmul.mubr.bf16.gmra.mrb[0].mxu0 %v3088
        %v3540 = vpop.f32.mrb[0].mxu0
        %v3541 = vadd.f32 0.0, %v3540
        %v3542 = vpop.f32.mrb[0].mxu0
        %v3543 = vpop.f32.mrb[0].mxu0
        %v3544 = vadd.f32 0.0, %v3543
        %v3545 = vpop.f32.mrb[0].mxu0
        %3546 = vmatprep.mubr.bf16.mxu0 0
        %3547 = vmatmul.mubr.bf16.gmra.mrb[0].mxu0 %v3091
        %v3548 = vpop.f32.mrb[0].mxu0
        %v3549 = vadd.f32 0.0, %v3548
        %v3550 = vpop.f32.mrb[0].mxu0
        %v3551 = vpop.f32.mrb[0].mxu0
        %v3552 = vadd.f32 0.0, %v3551
        %v3553 = vpop.f32.mrb[0].mxu0
        %3554 = vmatprep.mubr.bf16.mxu0 0
        %3555 = vmatmul.mubr.bf16.gmra.mrb[0].mxu0 %v3094
        %v3556 = vpop.f32.mrb[0].mxu0
        %v3557 = vadd.f32 0.0, %v3556
        %v3558 = vpop.f32.mrb[0].mxu0
        %v3559 = vpop.f32.mrb[0].mxu0
        %v3560 = vadd.f32 0.0, %v3559
        %v3561 = vpop.f32.mrb[0].mxu0
        %3562 = vmatprep.mubr.bf16.mxu0 0
        %3563 = vmatmul.mubr.bf16.gmra.mrb[0].mxu0 %v3097
        %v3564 = vpop.f32.mrb[0].mxu0
        %v3565 = vadd.f32 0.0, %v3564
        %v3566 = vpop.f32.mrb[0].mxu0
        %v3567 = vpop.f32.mrb[0].mxu0
        %v3568 = vadd.f32 0.0, %v3567
        %v3569 = vpop.f32.mrb[0].mxu0
        %3570 = vmatprep.mubr.bf16.mxu0 0
        %3571 = vmatmul.mubr.bf16.gmra.mrb[0].mxu0 %v3100
        %v3572 = vpop.f32.mrb[0].mxu0
        %v3573 = vadd.f32 0.0, %v3572
        %v3574 = vpop.f32.mrb[0].mxu0
        %v3575 = vpop.f32.mrb[0].mxu0
        %v3576 = vadd.f32 0.0, %v3575
        %v3577 = vpop.f32.mrb[0].mxu0
        %3578 = vmatprep.mubr.bf16.mxu0 0
        %3579 = vmatmul.mubr.bf16.gmra.mrb[0].mxu0 %v3103
        %v3580 = vpop.f32.mrb[0].mxu0
        %v3581 = vadd.f32 0.0, %v3580
        %v3582 = vpop.f32.mrb[0].mxu0
        %v3583 = vpop.f32.mrb[0].mxu0
        %v3584 = vadd.f32 0.0, %v3583
        %v3585 = vpop.f32.mrb[0].mxu0
        %3586 = vmatprep.mubr.bf16.mxu0 0
        %3587 = vmatmul.mubr.bf16.gmra.mrb[0].mxu0 %v3106
        %v3588 = vpop.f32.mrb[0].mxu0
        %v3589 = vadd.f32 0.0, %v3588
        %v3590 = vpop.f32.mrb[0].mxu0
        %v3591 = vpop.f32.mrb[0].mxu0
        %v3592 = vadd.f32 0.0, %v3591
        %v3593 = vpop.f32.mrb[0].mxu0
        %3594 = vmatprep.mubr.bf16.mxu0 0
        %3595 = vmatmul.mubr.bf16.gmra.mrb[0].mxu0 %v3109
        %v3596 = vpop.f32.mrb[0].mxu0
        %v3597 = vadd.f32 0.0, %v3596
        %v3598 = vpop.f32.mrb[0].mxu0
        %v3599 = vpop.f32.mrb[0].mxu0
        %v3600 = vadd.f32 0.0, %v3599
        %v3601 = vpop.f32.mrb[0].mxu0
        %3602 = vmatprep.mubr.bf16.mxu0 0
        %3603 = vmatmul.mubr.bf16.gmra.mrb[0].mxu0 %v3112
        %v3604 = vpop.f32.mrb[0].mxu0
        %v3605 = vadd.f32 0.0, %v3604
        %v3606 = vpop.f32.mrb[0].mxu0
        %v3607 = vpop.f32.mrb[0].mxu0
        %v3608 = vadd.f32 0.0, %v3607
        %v3609 = vpop.f32.mrb[0].mxu0
        %3610 = vmatprep.mubr.bf16.mxu0 0
        %3611 = vmatmul.mubr.bf16.gmra.mrb[0].mxu0 %v3115
        %v3612 = vpop.f32.mrb[0].mxu0
        %v3613 = vadd.f32 0.0, %v3612
        %v3614 = vpop.f32.mrb[0].mxu0
        %v3615 = vpop.f32.mrb[0].mxu0
        %v3616 = vadd.f32 0.0, %v3615
        %v3617 = vpop.f32.mrb[0].mxu0
        %3618 = vmatprep.mubr.bf16.mxu0 0
        %3619 = vmatmul.mubr.bf16.gmra.mrb[0].mxu0 %v3118
        %v3620 = vpop.f32.mrb[0].mxu0
        %v3621 = vadd.f32 0.0, %v3620
        %v3622 = vpop.f32.mrb[0].mxu0
        %v3623 = vpop.f32.mrb[0].mxu0
        %v3624 = vadd.f32 0.0, %v3623
        %v3625 = vpop.f32.mrb[0].mxu0
        %3626 = vmatprep.mubr.bf16.mxu0 0
        %3627 = vmatmul.mubr.bf16.gmra.mrb[0].mxu0 %v3121
        %v3628 = vpop.f32.mrb[0].mxu0
        %v3629 = vadd.f32 0.0, %v3628
        %v3630 = vpop.f32.mrb[0].mxu0
        %v3631 = vpop.f32.mrb[0].mxu0
        %v3632 = vadd.f32 0.0, %v3631
        %v3633 = vpop.f32.mrb[0].mxu0
        %3634 = vmatprep.mubr.bf16.mxu0 0
        %3635 = vmatmul.mubr.bf16.gmra.mrb[0].mxu0 %v3124
        %v3636 = vpop.f32.mrb[0].mxu0
        %v3637 = vadd.f32 0.0, %v3636
        %v3638 = vpop.f32.mrb[0].mxu0
        %v3639 = vpop.f32.mrb[0].mxu0
        %v3640 = vadd.f32 0.0, %v3639
        %v3641 = vpop.f32.mrb[0].mxu0
        %3642 = vmatprep.mubr.bf16.mxu0 0
        %3643 = vmatmul.mubr.bf16.gmra.mrb[0].mxu0 %v3127
        %v3644 = vpop.f32.mrb[0].mxu0
        %v3645 = vadd.f32 0.0, %v3644
        %v3646 = vpop.f32.mrb[0].mxu0
        %v3647 = vpop.f32.mrb[0].mxu0
        %v3648 = vadd.f32 0.0, %v3647
        %v3649 = vpop.f32.mrb[0].mxu0
        %3650 = vmatprep.mubr.bf16.mxu0 0
        %3651 = vmatmul.mubr.bf16.gmra.mrb[0].mxu0 %v3130
        %v3652 = vpop.f32.mrb[0].mxu0
        %v3653 = vadd.f32 0.0, %v3652
        %v3654 = vpop.f32.mrb[0].mxu0
        %v3655 = vpop.f32.mrb[0].mxu0
        %v3656 = vadd.f32 0.0, %v3655
        %v3657 = vpop.f32.mrb[0].mxu0
        %3658 = vmatprep.mubr.bf16.mxu0 0
        %3659 = vmatmul.mubr.bf16.gmra.mrb[0].mxu0 %v3133
        %v3660 = vpop.f32.mrb[0].mxu0
        %v3661 = vadd.f32 0.0, %v3660
        %v3662 = vpop.f32.mrb[0].mxu0
        %v3663 = vpop.f32.mrb[0].mxu0
        %v3664 = vadd.f32 0.0, %v3663
        %v3665 = vpop.f32.mrb[0].mxu0
        %3666 = vmatprep.mubr.bf16.mxu0 0
        %3667 = vmatmul.mubr.bf16.gmra.mrb[0].mxu0 %v3136
        %v3668 = vpop.f32.mrb[0].mxu0
        %v3669 = vadd.f32 0.0, %v3668
        %v3670 = vpop.f32.mrb[0].mxu0
        %v3671 = vpop.f32.mrb[0].mxu0
        %v3672 = vadd.f32 0.0, %v3671
        %v3673 = vpop.f32.mrb[0].mxu0
        %3674 = vmatprep.mubr.bf16.mxu0 0
        %3675 = vmatmul.mubr.bf16.gmra.mrb[0].mxu0 %v3139
        %v3676 = vpop.f32.mrb[0].mxu0
        %v3677 = vadd.f32 0.0, %v3676
        %v3678 = vpop.f32.mrb[0].mxu0
        %v3679 = vpop.f32.mrb[0].mxu0
        %v3680 = vadd.f32 0.0, %v3679
        %v3681 = vpop.f32.mrb[0].mxu0
        %3682 = vmatprep.mubr.bf16.mxu0 0
        %3683 = vmatmul.mubr.bf16.gmra.mrb[0].mxu0 %v3142
        %v3684 = vpop.f32.mrb[0].mxu0
        %v3685 = vadd.f32 0.0, %v3684
        %v3686 = vpop.f32.mrb[0].mxu0
        %v3687 = vpop.f32.mrb[0].mxu0
        %v3688 = vadd.f32 0.0, %v3687
        %v3689 = vpop.f32.mrb[0].mxu0
        %3690 = vmatprep.mubr.bf16.mxu0 0
        %3691 = vmatmul.mubr.bf16.gmra.mrb[0].mxu0 %v3145
        %v3692 = vpop.f32.mrb[0].mxu0
        %v3693 = vadd.f32 0.0, %v3692
        %v3694 = vpop.f32.mrb[0].mxu0
        %v3695 = vpop.f32.mrb[0].mxu0
        %v3696 = vadd.f32 0.0, %v3695
        %v3697 = vpop.f32.mrb[0].mxu0
        %3698 = vdwg.mxu0
        %v3827 = vunpack.c.l.b16 %v1021
        %v3828 = vunpack.c.l.b16 %v1022
        %v3829 = vunpack.c.l.b16 %v1023
        %v3830 = vunpack.c.l.b16 %v1024
        %v3831 = vunpack.c.l.b16 %v1025
        %v3832 = vunpack.c.l.b16 %v1026
        %v3833 = vunpack.c.l.b16 %v1027
        %v3834 = vunpack.c.l.b16 %v1028
        %v3835 = vunpack.c.l.b16 %v1029
        %v3836 = vunpack.c.l.b16 %v1030
        %v3837 = vunpack.c.l.b16 %v1031
        %v3838 = vunpack.c.l.b16 %v1032
        %v3839 = vunpack.c.l.b16 %v1033
        %v3840 = vunpack.c.l.b16 %v1034
        %v3841 = vunpack.c.l.b16 %v1035
        %v3842 = vunpack.c.l.b16 %v1036
        %v3843 = vunpack.c.l.b16 %v1037
        %v3844 = vunpack.c.l.b16 %v1038
        %v3845 = vunpack.c.l.b16 %v1039
        %v3846 = vunpack.c.l.b16 %v1040
        %v3847 = vunpack.c.l.b16 %v1041
        %v3848 = vunpack.c.l.b16 %v1042
        %v3849 = vunpack.c.l.b16 %v1043
        %v3850 = vunpack.c.l.b16 %v1044
        %v3851 = vunpack.c.l.b16 %v1045
        %v3852 = vunpack.c.l.b16 %v1046
        %v3853 = vunpack.c.l.b16 %v1047
        %v3854 = vunpack.c.l.b16 %v1048
        %v3855 = vunpack.c.l.b16 %v1049
        %v3856 = vunpack.c.l.b16 %v1050
        %v3857 = vunpack.c.l.b16 %v1051
        %v3858 = vunpack.c.l.b16 %v1052
        %v3859 = vunpack.c.l.b16 %v1053
        %v3860 = vunpack.c.l.b16 %v1054
        %v3861 = vunpack.c.l.b16 %v1055
        %v3862 = vunpack.c.l.b16 %v1056
        %v3863 = vunpack.c.l.b16 %v1057
        %v3864 = vunpack.c.l.b16 %v1058
        %v3865 = vunpack.c.l.b16 %v1059
        %v3866 = vunpack.c.l.b16 %v1060
        %v3867 = vunpack.c.l.b16 %v1061
        %v3868 = vunpack.c.l.b16 %v1062
        %v3869 = vunpack.c.l.b16 %v1063
        %v3870 = vunpack.c.l.b16 %v1064
        %v3871 = vunpack.c.l.b16 %v1065
        %v3872 = vunpack.c.l.b16 %v1066
        %v3873 = vunpack.c.l.b16 %v1067
        %v3874 = vunpack.c.l.b16 %v1068
        %v3875 = vunpack.c.l.b16 %v1069
        %v3876 = vunpack.c.l.b16 %v1070
        %v3877 = vunpack.c.l.b16 %v1071
        %v3878 = vunpack.c.l.b16 %v1072
        %v3879 = vunpack.c.l.b16 %v1073
        %v3880 = vunpack.c.l.b16 %v1074
        %v3881 = vunpack.c.l.b16 %v1075
        %v3882 = vunpack.c.l.b16 %v1076
        %v3883 = vunpack.c.l.b16 %v1077
        %v3884 = vunpack.c.l.b16 %v1078
        %v3885 = vunpack.c.l.b16 %v1079
        %v3886 = vunpack.c.l.b16 %v1080
        %v3887 = vunpack.c.l.b16 %v1081
        %v3888 = vunpack.c.l.b16 %v1082
        %v3889 = vunpack.c.l.b16 %v1083
        %v3890 = vunpack.c.l.b16 %v1084
        %v3891 = vunpack.c.l.b16 %v1085
        %v3892 = vunpack.c.l.b16 %v1086
        %v3893 = vunpack.c.l.b16 %v1087
        %v3894 = vunpack.c.l.b16 %v1088
        %v3895 = vunpack.c.l.b16 %v1089
        %v3896 = vunpack.c.l.b16 %v1090
        %v3897 = vunpack.c.l.b16 %v1091
        %v3898 = vunpack.c.l.b16 %v1092
        %v3899 = vunpack.c.l.b16 %v1093
        %v3900 = vunpack.c.l.b16 %v1094
        %v3901 = vunpack.c.l.b16 %v1095
        %v3902 = vunpack.c.l.b16 %v1096
        %v3903 = vunpack.c.l.b16 %v1097
        %v3904 = vunpack.c.l.b16 %v1098
        %v3905 = vunpack.c.l.b16 %v1099
        %v3906 = vunpack.c.l.b16 %v1100
        %v3907 = vunpack.c.l.b16 %v1101
        %v3908 = vunpack.c.l.b16 %v1102
        %v3909 = vunpack.c.l.b16 %v1103
        %v3910 = vunpack.c.l.b16 %v1104
        %v3911 = vunpack.c.l.b16 %v1105
        %v3912 = vunpack.c.l.b16 %v1106
        %v3913 = vunpack.c.l.b16 %v1107
        %v3914 = vunpack.c.l.b16 %v1108
        %v3915 = vunpack.c.l.b16 %v1109
        %v3916 = vunpack.c.l.b16 %v1110
        %v3917 = vunpack.c.l.b16 %v1111
        %v3918 = vunpack.c.l.b16 %v1112
        %v3919 = vunpack.c.l.b16 %v1113
        %v3920 = vunpack.c.l.b16 %v1114
        %v3921 = vunpack.c.l.b16 %v1115
        %v3922 = vunpack.c.l.b16 %v1116
        %v3923 = vunpack.c.l.b16 %v1117
        %v3924 = vunpack.c.l.b16 %v1118
        %v3925 = vunpack.c.l.b16 %v1119
        %v3926 = vunpack.c.l.b16 %v1120
        %v3927 = vunpack.c.l.b16 %v1121
        %v3928 = vunpack.c.l.b16 %v1122
        %v3929 = vunpack.c.l.b16 %v1123
        %v3930 = vunpack.c.l.b16 %v1124
        %v3931 = vunpack.c.l.b16 %v1125
        %v3932 = vunpack.c.l.b16 %v1126
        %v3933 = vunpack.c.l.b16 %v1127
        %v3934 = vunpack.c.l.b16 %v1128
        %v3935 = vunpack.c.l.b16 %v1129
        %v3936 = vunpack.c.l.b16 %v1130
        %v3937 = vunpack.c.l.b16 %v1131
        %v3938 = vunpack.c.l.b16 %v1132
        %v3939 = vunpack.c.l.b16 %v1133
        %v3940 = vunpack.c.l.b16 %v1134
        %v3941 = vunpack.c.l.b16 %v1135
        %v3942 = vunpack.c.l.b16 %v1136
        %v3943 = vunpack.c.l.b16 %v1137
        %v3944 = vunpack.c.l.b16 %v1138
        %v3945 = vunpack.c.l.b16 %v1139
        %v3946 = vunpack.c.l.b16 %v1140
        %v3947 = vunpack.c.l.b16 %v1141
        %v3948 = vunpack.c.l.b16 %v1142
        %v3949 = vunpack.c.l.b16 %v1143
        %v3950 = vunpack.c.l.b16 %v1144
        %v3951 = vunpack.c.l.b16 %v1145
        %v3952 = vunpack.c.l.b16 %v1146
        %v3953 = vunpack.c.l.b16 %v1147
        %v3954 = vunpack.c.l.b16 %v1148
        %v3955 = vpack.c.b16 %v3828, %v3827
        %v3956 = vpack.c.b16 %v3830, %v3829
        %v3957 = vpack.c.b16 %v3832, %v3831
        %v3958 = vpack.c.b16 %v3834, %v3833
        %v3959 = vpack.c.b16 %v3836, %v3835
        %v3960 = vpack.c.b16 %v3838, %v3837
        %v3961 = vpack.c.b16 %v3840, %v3839
        %v3962 = vpack.c.b16 %v3842, %v3841
        %v3963 = vpack.c.b16 %v3844, %v3843
        %v3964 = vpack.c.b16 %v3846, %v3845
        %v3965 = vpack.c.b16 %v3848, %v3847
        %v3966 = vpack.c.b16 %v3850, %v3849
        %v3967 = vpack.c.b16 %v3852, %v3851
        %v3968 = vpack.c.b16 %v3854, %v3853
        %v3969 = vpack.c.b16 %v3856, %v3855
        %v3970 = vpack.c.b16 %v3858, %v3857
        %v3971 = vpack.c.b16 %v3860, %v3859
        %v3972 = vpack.c.b16 %v3862, %v3861
        %v3973 = vpack.c.b16 %v3864, %v3863
        %v3974 = vpack.c.b16 %v3866, %v3865
        %v3975 = vpack.c.b16 %v3868, %v3867
        %v3976 = vpack.c.b16 %v3870, %v3869
        %v3977 = vpack.c.b16 %v3872, %v3871
        %v3978 = vpack.c.b16 %v3874, %v3873
        %v3979 = vpack.c.b16 %v3876, %v3875
        %v3980 = vpack.c.b16 %v3878, %v3877
        %v3981 = vpack.c.b16 %v3880, %v3879
        %v3982 = vpack.c.b16 %v3882, %v3881
        %v3983 = vpack.c.b16 %v3884, %v3883
        %v3984 = vpack.c.b16 %v3886, %v3885
        %v3985 = vpack.c.b16 %v3888, %v3887
        %v3986 = vpack.c.b16 %v3890, %v3889
        %v3987 = vpack.c.b16 %v3892, %v3891
        %v3988 = vpack.c.b16 %v3894, %v3893
        %v3989 = vpack.c.b16 %v3896, %v3895
        %v3990 = vpack.c.b16 %v3898, %v3897
        %v3991 = vpack.c.b16 %v3900, %v3899
        %v3992 = vpack.c.b16 %v3902, %v3901
        %v3993 = vpack.c.b16 %v3904, %v3903
        %v3994 = vpack.c.b16 %v3906, %v3905
        %v3995 = vpack.c.b16 %v3908, %v3907
        %v3996 = vpack.c.b16 %v3910, %v3909
        %v3997 = vpack.c.b16 %v3912, %v3911
        %v3998 = vpack.c.b16 %v3914, %v3913
        %v3999 = vpack.c.b16 %v3916, %v3915
        %v4000 = vpack.c.b16 %v3918, %v3917
        %v4001 = vpack.c.b16 %v3920, %v3919
        %v4002 = vpack.c.b16 %v3922, %v3921
        %v4003 = vpack.c.b16 %v3924, %v3923
        %v4004 = vpack.c.b16 %v3926, %v3925
        %v4005 = vpack.c.b16 %v3928, %v3927
        %v4006 = vpack.c.b16 %v3930, %v3929
        %v4007 = vpack.c.b16 %v3932, %v3931
        %v4008 = vpack.c.b16 %v3934, %v3933
        %v4009 = vpack.c.b16 %v3936, %v3935
        %v4010 = vpack.c.b16 %v3938, %v3937
        %v4011 = vpack.c.b16 %v3940, %v3939
        %v4012 = vpack.c.b16 %v3942, %v3941
        %v4013 = vpack.c.b16 %v3944, %v3943
        %v4014 = vpack.c.b16 %v3946, %v3945
        %v4015 = vpack.c.b16 %v3948, %v3947
        %v4016 = vpack.c.b16 %v3950, %v3949
        %v4017 = vpack.c.b16 %v3952, %v3951
        %v4018 = vpack.c.b16 %v3954, %v3953
        %v4021 = vunpack.c.l.b16 %v1149
        %v4022 = vunpack.c.l.b16 %v1150
        %v4023 = vpack.c.b16 %v4022, %v4021
        %v4025 = vsel %vm2954, %v3955, 0
        %v4028 = vsel %vm2954, %v3956, 0
        %v4031 = vsel %vm2954, %v3957, 0
        %v4034 = vsel %vm2954, %v3958, 0
        %v4037 = vsel %vm2954, %v3959, 0
        %v4040 = vsel %vm2954, %v3960, 0
        %v4043 = vsel %vm2954, %v3961, 0
        %v4046 = vsel %vm2954, %v3962, 0
        %v4049 = vsel %vm2954, %v3963, 0
        %v4052 = vsel %vm2954, %v3964, 0
        %v4055 = vsel %vm2954, %v3965, 0
        %v4058 = vsel %vm2954, %v3966, 0
        %v4061 = vsel %vm2954, %v3967, 0
        %v4064 = vsel %vm2954, %v3968, 0
        %v4067 = vsel %vm2954, %v3969, 0
        %v4070 = vsel %vm2954, %v3970, 0
        %v4073 = vsel %vm2954, %v3971, 0
        %v4076 = vsel %vm2954, %v3972, 0
        %v4079 = vsel %vm2954, %v3973, 0
        %v4082 = vsel %vm2954, %v3974, 0
        %v4085 = vsel %vm2954, %v3975, 0
        %v4088 = vsel %vm2954, %v3976, 0
        %v4091 = vsel %vm2954, %v3977, 0
        %v4094 = vsel %vm2954, %v3978, 0
        %v4097 = vsel %vm2954, %v3979, 0
        %v4100 = vsel %vm2954, %v3980, 0
        %v4103 = vsel %vm2954, %v3981, 0
        %v4106 = vsel %vm2954, %v3982, 0
        %v4109 = vsel %vm2954, %v3983, 0
        %v4112 = vsel %vm2954, %v3984, 0
        %v4115 = vsel %vm2954, %v3985, 0
        %v4118 = vsel %vm2954, %v3986, 0
        %v4121 = vsel %vm2954, %v3987, 0
        %v4124 = vsel %vm2954, %v3988, 0
        %v4127 = vsel %vm2954, %v3989, 0
        %v4130 = vsel %vm2954, %v3990, 0
        %v4133 = vsel %vm2954, %v3991, 0
        %v4136 = vsel %vm2954, %v3992, 0
        %v4139 = vsel %vm2954, %v3993, 0
        %v4142 = vsel %vm2954, %v3994, 0
        %v4145 = vsel %vm2954, %v3995, 0
        %v4148 = vsel %vm2954, %v3996, 0
        %v4151 = vsel %vm2954, %v3997, 0
        %v4154 = vsel %vm2954, %v3998, 0
        %v4157 = vsel %vm2954, %v3999, 0
        %v4160 = vsel %vm2954, %v4000, 0
        %v4163 = vsel %vm2954, %v4001, 0
        %v4166 = vsel %vm2954, %v4002, 0
        %v4169 = vsel %vm2954, %v4003, 0
        %v4172 = vsel %vm2954, %v4004, 0
        %v4175 = vsel %vm2954, %v4005, 0
        %v4178 = vsel %vm2954, %v4006, 0
        %v4181 = vsel %vm2954, %v4007, 0
        %v4184 = vsel %vm2954, %v4008, 0
        %v4187 = vsel %vm2954, %v4009, 0
        %v4190 = vsel %vm2954, %v4010, 0
        %v4193 = vsel %vm2954, %v4011, 0
        %v4196 = vsel %vm2954, %v4012, 0
        %v4199 = vsel %vm2954, %v4013, 0
        %v4202 = vsel %vm2954, %v4014, 0
        %v4205 = vsel %vm2954, %v4015, 0
        %v4208 = vsel %vm2954, %v4016, 0
        %v4211 = vsel %vm2954, %v4017, 0
        %v4214 = vsel %vm2954, %v4018, 0
        %v4217 = vand.u32 %v4023, %v3150
        %4219 = vmatprep.subr.bf16.mxu0 0
        %4220 = vmatpush1.bf16.msra.mxu0 %v4217
        %4221 = vmatprep.subr.bf16.mxu0 0
        %4222 = vmatpush1.bf16.msra.mxu0 0
        %4223 = vmatprep.subr.bf16.mxu0 0
        %4224 = vmatpush1.bf16.msra.mxu0 0
        %4225 = vmatprep.subr.bf16.mxu0 0
        %4226 = vmatpush1.bf16.msra.mxu0 0
        %4227 = vmatprep.subr.bf16.mxu0 0
        %4228 = vmatpush1.bf16.msra.mxu0 0
        %4229 = vmatprep.subr.bf16.mxu0 0
        %4230 = vmatpush1.bf16.msra.mxu0 0
        %4231 = vmatprep.subr.bf16.mxu0 0
        %4232 = vmatpush1.bf16.msra.mxu0 0
        %4233 = vmatprep.subr.bf16.mxu0 0
        %4234 = vmatpush1.bf16.msra.mxu0 0
        %4235 = vmatprep.subr.bf16.mxu0 0
        %4236 = vmatpush1.bf16.msra.mxu0 0
        %4237 = vmatprep.subr.bf16.mxu0 0
        %4238 = vmatpush1.bf16.msra.mxu0 0
        %4239 = vmatprep.subr.bf16.mxu0 0
        %4240 = vmatpush1.bf16.msra.mxu0 0
        %4241 = vmatprep.subr.bf16.mxu0 0
        %4242 = vmatpush1.bf16.msra.mxu0 0
        %4243 = vmatprep.subr.bf16.mxu0 0
        %4244 = vmatpush1.bf16.msra.mxu0 0
        %4245 = vmatprep.subr.bf16.mxu0 0
        %4246 = vmatpush1.bf16.msra.mxu0 0
        %4247 = vmatprep.subr.bf16.mxu0 0
        %4248 = vmatpush1.bf16.msra.mxu0 0
        %4249 = vmatprep.subr.bf16.mxu0 0
        %4250 = vmatpush1.bf16.msra.mxu0 0
        %4251 = vmatprep.mubr.bf16.mxu0 0
        %4252 = vmatmul.mubr.bf16.gmra.mrb[0].mxu0 %v4025
        %v4253 = vpop.f32.mrb[0].mxu0
        %v4254 = vadd.f32 %v3189, %v4253
        %v4255 = vpop.f32.mrb[0].mxu0
        %v4256 = vpop.f32.mrb[0].mxu0
        %v4257 = vadd.f32 %v3192, %v4256
        %v4258 = vpop.f32.mrb[0].mxu0
        %4259 = vmatprep.mubr.bf16.mxu0 0
        %4260 = vmatmul.mubr.bf16.gmra.mrb[0].mxu0 %v4028
        %v4261 = vpop.f32.mrb[0].mxu0
        %v4262 = vadd.f32 %v3197, %v4261
        %v4263 = vpop.f32.mrb[0].mxu0
        %v4264 = vpop.f32.mrb[0].mxu0
        %v4265 = vadd.f32 %v3200, %v4264
        %v4266 = vpop.f32.mrb[0].mxu0
        %4267 = vmatprep.mubr.bf16.mxu0 0
        %4268 = vmatmul.mubr.bf16.gmra.mrb[0].mxu0 %v4031
        %v4269 = vpop.f32.mrb[0].mxu0
        %v4270 = vadd.f32 %v3205, %v4269
        %v4271 = vpop.f32.mrb[0].mxu0
        %v4272 = vpop.f32.mrb[0].mxu0
        %v4273 = vadd.f32 %v3208, %v4272
        %v4274 = vpop.f32.mrb[0].mxu0
        %4275 = vmatprep.mubr.bf16.mxu0 0
        %4276 = vmatmul.mubr.bf16.gmra.mrb[0].mxu0 %v4034
        %v4277 = vpop.f32.mrb[0].mxu0
        %v4278 = vadd.f32 %v3213, %v4277
        %v4279 = vpop.f32.mrb[0].mxu0
        %v4280 = vpop.f32.mrb[0].mxu0
        %v4281 = vadd.f32 %v3216, %v4280
        %v4282 = vpop.f32.mrb[0].mxu0
        %4283 = vmatprep.mubr.bf16.mxu0 0
        %4284 = vmatmul.mubr.bf16.gmra.mrb[0].mxu0 %v4037
        %v4285 = vpop.f32.mrb[0].mxu0
        %v4286 = vadd.f32 %v3221, %v4285
        %v4287 = vpop.f32.mrb[0].mxu0
        %v4288 = vpop.f32.mrb[0].mxu0
        %v4289 = vadd.f32 %v3224, %v4288
        %v4290 = vpop.f32.mrb[0].mxu0
        %4291 = vmatprep.mubr.bf16.mxu0 0
        %4292 = vmatmul.mubr.bf16.gmra.mrb[0].mxu0 %v4040
        %v4293 = vpop.f32.mrb[0].mxu0
        %v4294 = vadd.f32 %v3229, %v4293
        %v4295 = vpop.f32.mrb[0].mxu0
        %v4296 = vpop.f32.mrb[0].mxu0
        %v4297 = vadd.f32 %v3232, %v4296
        %v4298 = vpop.f32.mrb[0].mxu0
        %4299 = vmatprep.mubr.bf16.mxu0 0
        %4300 = vmatmul.mubr.bf16.gmra.mrb[0].mxu0 %v4043
        %v4301 = vpop.f32.mrb[0].mxu0
        %v4302 = vadd.f32 %v3237, %v4301
        %v4303 = vpop.f32.mrb[0].mxu0
        %v4304 = vpop.f32.mrb[0].mxu0
        %v4305 = vadd.f32 %v3240, %v4304
        %v4306 = vpop.f32.mrb[0].mxu0
        %4307 = vmatprep.mubr.bf16.mxu0 0
        %4308 = vmatmul.mubr.bf16.gmra.mrb[0].mxu0 %v4046
        %v4309 = vpop.f32.mrb[0].mxu0
        %v4310 = vadd.f32 %v3245, %v4309
        %v4311 = vpop.f32.mrb[0].mxu0
        %v4312 = vpop.f32.mrb[0].mxu0
        %v4313 = vadd.f32 %v3248, %v4312
        %v4314 = vpop.f32.mrb[0].mxu0
        %4315 = vmatprep.mubr.bf16.mxu0 0
        %4316 = vmatmul.mubr.bf16.gmra.mrb[0].mxu0 %v4049
        %v4317 = vpop.f32.mrb[0].mxu0
        %v4318 = vadd.f32 %v3253, %v4317
        %v4319 = vpop.f32.mrb[0].mxu0
        %v4320 = vpop.f32.mrb[0].mxu0
        %v4321 = vadd.f32 %v3256, %v4320
        %v4322 = vpop.f32.mrb[0].mxu0
        %4323 = vmatprep.mubr.bf16.mxu0 0
        %4324 = vmatmul.mubr.bf16.gmra.mrb[0].mxu0 %v4052
        %v4325 = vpop.f32.mrb[0].mxu0
        %v4326 = vadd.f32 %v3261, %v4325
        %v4327 = vpop.f32.mrb[0].mxu0
        %v4328 = vpop.f32.mrb[0].mxu0
        %v4329 = vadd.f32 %v3264, %v4328
        %v4330 = vpop.f32.mrb[0].mxu0
        %4331 = vmatprep.mubr.bf16.mxu0 0
        %4332 = vmatmul.mubr.bf16.gmra.mrb[0].mxu0 %v4055
        %v4333 = vpop.f32.mrb[0].mxu0
        %v4334 = vadd.f32 %v3269, %v4333
        %v4335 = vpop.f32.mrb[0].mxu0
        %v4336 = vpop.f32.mrb[0].mxu0
        %v4337 = vadd.f32 %v3272, %v4336
        %v4338 = vpop.f32.mrb[0].mxu0
        %4339 = vmatprep.mubr.bf16.mxu0 0
        %4340 = vmatmul.mubr.bf16.gmra.mrb[0].mxu0 %v4058
        %v4341 = vpop.f32.mrb[0].mxu0
        %v4342 = vadd.f32 %v3277, %v4341
        %v4343 = vpop.f32.mrb[0].mxu0
        %v4344 = vpop.f32.mrb[0].mxu0
        %v4345 = vadd.f32 %v3280, %v4344
        %v4346 = vpop.f32.mrb[0].mxu0
        %4347 = vmatprep.mubr.bf16.mxu0 0
        %4348 = vmatmul.mubr.bf16.gmra.mrb[0].mxu0 %v4061
        %v4349 = vpop.f32.mrb[0].mxu0
        %v4350 = vadd.f32 %v3285, %v4349
        %v4351 = vpop.f32.mrb[0].mxu0
        %v4352 = vpop.f32.mrb[0].mxu0
        %v4353 = vadd.f32 %v3288, %v4352
        %v4354 = vpop.f32.mrb[0].mxu0
        %4355 = vmatprep.mubr.bf16.mxu0 0
        %4356 = vmatmul.mubr.bf16.gmra.mrb[0].mxu0 %v4064
        %v4357 = vpop.f32.mrb[0].mxu0
        %v4358 = vadd.f32 %v3293, %v4357
        %v4359 = vpop.f32.mrb[0].mxu0
        %v4360 = vpop.f32.mrb[0].mxu0
        %v4361 = vadd.f32 %v3296, %v4360
        %v4362 = vpop.f32.mrb[0].mxu0
        %4363 = vmatprep.mubr.bf16.mxu0 0
        %4364 = vmatmul.mubr.bf16.gmra.mrb[0].mxu0 %v4067
        %v4365 = vpop.f32.mrb[0].mxu0
        %v4366 = vadd.f32 %v3301, %v4365
        %v4367 = vpop.f32.mrb[0].mxu0
        %v4368 = vpop.f32.mrb[0].mxu0
        %v4369 = vadd.f32 %v3304, %v4368
        %v4370 = vpop.f32.mrb[0].mxu0
        %4371 = vmatprep.mubr.bf16.mxu0 0
        %4372 = vmatmul.mubr.bf16.gmra.mrb[0].mxu0 %v4070
        %v4373 = vpop.f32.mrb[0].mxu0
        %v4374 = vadd.f32 %v3309, %v4373
        %v4375 = vpop.f32.mrb[0].mxu0
        %v4376 = vpop.f32.mrb[0].mxu0
        %v4377 = vadd.f32 %v3312, %v4376
        %v4378 = vpop.f32.mrb[0].mxu0
        %4379 = vmatprep.mubr.bf16.mxu0 0
        %4380 = vmatmul.mubr.bf16.gmra.mrb[0].mxu0 %v4073
        %v4381 = vpop.f32.mrb[0].mxu0
        %v4382 = vadd.f32 %v3317, %v4381
        %v4383 = vpop.f32.mrb[0].mxu0
        %v4384 = vpop.f32.mrb[0].mxu0
        %v4385 = vadd.f32 %v3320, %v4384
        %v4386 = vpop.f32.mrb[0].mxu0
        %4387 = vmatprep.mubr.bf16.mxu0 0
        %4388 = vmatmul.mubr.bf16.gmra.mrb[0].mxu0 %v4076
        %v4389 = vpop.f32.mrb[0].mxu0
        %v4390 = vadd.f32 %v3325, %v4389
        %v4391 = vpop.f32.mrb[0].mxu0
        %v4392 = vpop.f32.mrb[0].mxu0
        %v4393 = vadd.f32 %v3328, %v4392
        %v4394 = vpop.f32.mrb[0].mxu0
        %4395 = vmatprep.mubr.bf16.mxu0 0
        %4396 = vmatmul.mubr.bf16.gmra.mrb[0].mxu0 %v4079
        %v4397 = vpop.f32.mrb[0].mxu0
        %v4398 = vadd.f32 %v3333, %v4397
        %v4399 = vpop.f32.mrb[0].mxu0
        %v4400 = vpop.f32.mrb[0].mxu0
        %v4401 = vadd.f32 %v3336, %v4400
        %v4402 = vpop.f32.mrb[0].mxu0
        %4403 = vmatprep.mubr.bf16.mxu0 0
        %4404 = vmatmul.mubr.bf16.gmra.mrb[0].mxu0 %v4082
        %v4405 = vpop.f32.mrb[0].mxu0
        %v4406 = vadd.f32 %v3341, %v4405
        %v4407 = vpop.f32.mrb[0].mxu0
        %v4408 = vpop.f32.mrb[0].mxu0
        %v4409 = vadd.f32 %v3344, %v4408
        %v4410 = vpop.f32.mrb[0].mxu0
        %4411 = vmatprep.mubr.bf16.mxu0 0
        %4412 = vmatmul.mubr.bf16.gmra.mrb[0].mxu0 %v4085
        %v4413 = vpop.f32.mrb[0].mxu0
        %v4414 = vadd.f32 %v3349, %v4413
        %v4415 = vpop.f32.mrb[0].mxu0
        %v4416 = vpop.f32.mrb[0].mxu0
        %v4417 = vadd.f32 %v3352, %v4416
        %v4418 = vpop.f32.mrb[0].mxu0
        %4419 = vmatprep.mubr.bf16.mxu0 0
        %4420 = vmatmul.mubr.bf16.gmra.mrb[0].mxu0 %v4088
        %v4421 = vpop.f32.mrb[0].mxu0
        %v4422 = vadd.f32 %v3357, %v4421
        %v4423 = vpop.f32.mrb[0].mxu0
        %v4424 = vpop.f32.mrb[0].mxu0
        %v4425 = vadd.f32 %v3360, %v4424
        %v4426 = vpop.f32.mrb[0].mxu0
        %4427 = vmatprep.mubr.bf16.mxu0 0
        %4428 = vmatmul.mubr.bf16.gmra.mrb[0].mxu0 %v4091
        %v4429 = vpop.f32.mrb[0].mxu0
        %v4430 = vadd.f32 %v3365, %v4429
        %v4431 = vpop.f32.mrb[0].mxu0
        %v4432 = vpop.f32.mrb[0].mxu0
        %v4433 = vadd.f32 %v3368, %v4432
        %v4434 = vpop.f32.mrb[0].mxu0
        %4435 = vmatprep.mubr.bf16.mxu0 0
        %4436 = vmatmul.mubr.bf16.gmra.mrb[0].mxu0 %v4094
        %v4437 = vpop.f32.mrb[0].mxu0
        %v4438 = vadd.f32 %v3373, %v4437
        %v4439 = vpop.f32.mrb[0].mxu0
        %v4440 = vpop.f32.mrb[0].mxu0
        %v4441 = vadd.f32 %v3376, %v4440
        %v4442 = vpop.f32.mrb[0].mxu0
        %4443 = vmatprep.mubr.bf16.mxu0 0
        %4444 = vmatmul.mubr.bf16.gmra.mrb[0].mxu0 %v4097
        %v4445 = vpop.f32.mrb[0].mxu0
        %v4446 = vadd.f32 %v3381, %v4445
        %v4447 = vpop.f32.mrb[0].mxu0
        %v4448 = vpop.f32.mrb[0].mxu0
        %v4449 = vadd.f32 %v3384, %v4448
        %v4450 = vpop.f32.mrb[0].mxu0
        %4451 = vmatprep.mubr.bf16.mxu0 0
        %4452 = vmatmul.mubr.bf16.gmra.mrb[0].mxu0 %v4100
        %v4453 = vpop.f32.mrb[0].mxu0
        %v4454 = vadd.f32 %v3389, %v4453
        %v4455 = vpop.f32.mrb[0].mxu0
        %v4456 = vpop.f32.mrb[0].mxu0
        %v4457 = vadd.f32 %v3392, %v4456
        %v4458 = vpop.f32.mrb[0].mxu0
        %4459 = vmatprep.mubr.bf16.mxu0 0
        %4460 = vmatmul.mubr.bf16.gmra.mrb[0].mxu0 %v4103
        %v4461 = vpop.f32.mrb[0].mxu0
        %v4462 = vadd.f32 %v3397, %v4461
        %v4463 = vpop.f32.mrb[0].mxu0
        %v4464 = vpop.f32.mrb[0].mxu0
        %v4465 = vadd.f32 %v3400, %v4464
        %v4466 = vpop.f32.mrb[0].mxu0
        %4467 = vmatprep.mubr.bf16.mxu0 0
        %4468 = vmatmul.mubr.bf16.gmra.mrb[0].mxu0 %v4106
        %v4469 = vpop.f32.mrb[0].mxu0
        %v4470 = vadd.f32 %v3405, %v4469
        %v4471 = vpop.f32.mrb[0].mxu0
        %v4472 = vpop.f32.mrb[0].mxu0
        %v4473 = vadd.f32 %v3408, %v4472
        %v4474 = vpop.f32.mrb[0].mxu0
        %4475 = vmatprep.mubr.bf16.mxu0 0
        %4476 = vmatmul.mubr.bf16.gmra.mrb[0].mxu0 %v4109
        %v4477 = vpop.f32.mrb[0].mxu0
        %v4478 = vadd.f32 %v3413, %v4477
        %v4479 = vpop.f32.mrb[0].mxu0
        %v4480 = vpop.f32.mrb[0].mxu0
        %v4481 = vadd.f32 %v3416, %v4480
        %v4482 = vpop.f32.mrb[0].mxu0
        %4483 = vmatprep.mubr.bf16.mxu0 0
        %4484 = vmatmul.mubr.bf16.gmra.mrb[0].mxu0 %v4112
        %v4485 = vpop.f32.mrb[0].mxu0
        %v4486 = vadd.f32 %v3421, %v4485
        %v4487 = vpop.f32.mrb[0].mxu0
        %v4488 = vpop.f32.mrb[0].mxu0
        %v4489 = vadd.f32 %v3424, %v4488
        %v4490 = vpop.f32.mrb[0].mxu0
        %4491 = vmatprep.mubr.bf16.mxu0 0
        %4492 = vmatmul.mubr.bf16.gmra.mrb[0].mxu0 %v4115
        %v4493 = vpop.f32.mrb[0].mxu0
        %v4494 = vadd.f32 %v3429, %v4493
        %v4495 = vpop.f32.mrb[0].mxu0
        %v4496 = vpop.f32.mrb[0].mxu0
        %v4497 = vadd.f32 %v3432, %v4496
        %v4498 = vpop.f32.mrb[0].mxu0
        %4499 = vmatprep.mubr.bf16.mxu0 0
        %4500 = vmatmul.mubr.bf16.gmra.mrb[0].mxu0 %v4118
        %v4501 = vpop.f32.mrb[0].mxu0
        %v4502 = vadd.f32 %v3437, %v4501
        %v4503 = vpop.f32.mrb[0].mxu0
        %v4504 = vpop.f32.mrb[0].mxu0
        %v4505 = vadd.f32 %v3440, %v4504
        %v4506 = vpop.f32.mrb[0].mxu0
        %4507 = vmatprep.mubr.bf16.mxu0 0
        %4508 = vmatmul.mubr.bf16.gmra.mrb[0].mxu0 %v4121
        %v4509 = vpop.f32.mrb[0].mxu0
        %v4510 = vadd.f32 %v3445, %v4509
        %v4511 = vpop.f32.mrb[0].mxu0
        %v4512 = vpop.f32.mrb[0].mxu0
        %v4513 = vadd.f32 %v3448, %v4512
        %v4514 = vpop.f32.mrb[0].mxu0
        %4515 = vmatprep.mubr.bf16.mxu0 0
        %4516 = vmatmul.mubr.bf16.gmra.mrb[0].mxu0 %v4124
        %v4517 = vpop.f32.mrb[0].mxu0
        %v4518 = vadd.f32 %v3453, %v4517
        %v4519 = vpop.f32.mrb[0].mxu0
        %v4520 = vpop.f32.mrb[0].mxu0
        %v4521 = vadd.f32 %v3456, %v4520
        %v4522 = vpop.f32.mrb[0].mxu0
        %4523 = vmatprep.mubr.bf16.mxu0 0
        %4524 = vmatmul.mubr.bf16.gmra.mrb[0].mxu0 %v4127
        %v4525 = vpop.f32.mrb[0].mxu0
        %v4526 = vadd.f32 %v3461, %v4525
        %v4527 = vpop.f32.mrb[0].mxu0
        %v4528 = vpop.f32.mrb[0].mxu0
        %v4529 = vadd.f32 %v3464, %v4528
        %v4530 = vpop.f32.mrb[0].mxu0
        %4531 = vmatprep.mubr.bf16.mxu0 0
        %4532 = vmatmul.mubr.bf16.gmra.mrb[0].mxu0 %v4130
        %v4533 = vpop.f32.mrb[0].mxu0
        %v4534 = vadd.f32 %v3469, %v4533
        %v4535 = vpop.f32.mrb[0].mxu0
        %v4536 = vpop.f32.mrb[0].mxu0
        %v4537 = vadd.f32 %v3472, %v4536
        %v4538 = vpop.f32.mrb[0].mxu0
        %4539 = vmatprep.mubr.bf16.mxu0 0
        %4540 = vmatmul.mubr.bf16.gmra.mrb[0].mxu0 %v4133
        %v4541 = vpop.f32.mrb[0].mxu0
        %v4542 = vadd.f32 %v3477, %v4541
        %v4543 = vpop.f32.mrb[0].mxu0
        %v4544 = vpop.f32.mrb[0].mxu0
        %v4545 = vadd.f32 %v3480, %v4544
        %v4546 = vpop.f32.mrb[0].mxu0
        %4547 = vmatprep.mubr.bf16.mxu0 0
        %4548 = vmatmul.mubr.bf16.gmra.mrb[0].mxu0 %v4136
        %v4549 = vpop.f32.mrb[0].mxu0
        %v4550 = vadd.f32 %v3485, %v4549
        %v4551 = vpop.f32.mrb[0].mxu0
        %v4552 = vpop.f32.mrb[0].mxu0
        %v4553 = vadd.f32 %v3488, %v4552
        %v4554 = vpop.f32.mrb[0].mxu0
        %4555 = vmatprep.mubr.bf16.mxu0 0
        %4556 = vmatmul.mubr.bf16.gmra.mrb[0].mxu0 %v4139
        %v4557 = vpop.f32.mrb[0].mxu0
        %v4558 = vadd.f32 %v3493, %v4557
        %v4559 = vpop.f32.mrb[0].mxu0
        %v4560 = vpop.f32.mrb[0].mxu0
        %v4561 = vadd.f32 %v3496, %v4560
        %v4562 = vpop.f32.mrb[0].mxu0
        %4563 = vmatprep.mubr.bf16.mxu0 0
        %4564 = vmatmul.mubr.bf16.gmra.mrb[0].mxu0 %v4142
        %v4565 = vpop.f32.mrb[0].mxu0
        %v4566 = vadd.f32 %v3501, %v4565
        %v4567 = vpop.f32.mrb[0].mxu0
        %v4568 = vpop.f32.mrb[0].mxu0
        %v4569 = vadd.f32 %v3504, %v4568
        %v4570 = vpop.f32.mrb[0].mxu0
        %4571 = vmatprep.mubr.bf16.mxu0 0
        %4572 = vmatmul.mubr.bf16.gmra.mrb[0].mxu0 %v4145
        %v4573 = vpop.f32.mrb[0].mxu0
        %v4574 = vadd.f32 %v3509, %v4573
        %v4575 = vpop.f32.mrb[0].mxu0
        %v4576 = vpop.f32.mrb[0].mxu0
        %v4577 = vadd.f32 %v3512, %v4576
        %v4578 = vpop.f32.mrb[0].mxu0
        %4579 = vmatprep.mubr.bf16.mxu0 0
        %4580 = vmatmul.mubr.bf16.gmra.mrb[0].mxu0 %v4148
        %v4581 = vpop.f32.mrb[0].mxu0
        %v4582 = vadd.f32 %v3517, %v4581
        %v4583 = vpop.f32.mrb[0].mxu0
        %v4584 = vpop.f32.mrb[0].mxu0
        %v4585 = vadd.f32 %v3520, %v4584
        %v4586 = vpop.f32.mrb[0].mxu0
        %4587 = vmatprep.mubr.bf16.mxu0 0
        %4588 = vmatmul.mubr.bf16.gmra.mrb[0].mxu0 %v4151
        %v4589 = vpop.f32.mrb[0].mxu0
        %v4590 = vadd.f32 %v3525, %v4589
        %v4591 = vpop.f32.mrb[0].mxu0
        %v4592 = vpop.f32.mrb[0].mxu0
        %v4593 = vadd.f32 %v3528, %v4592
        %v4594 = vpop.f32.mrb[0].mxu0
        %4595 = vmatprep.mubr.bf16.mxu0 0
        %4596 = vmatmul.mubr.bf16.gmra.mrb[0].mxu0 %v4154
        %v4597 = vpop.f32.mrb[0].mxu0
        %v4598 = vadd.f32 %v3533, %v4597
        %v4599 = vpop.f32.mrb[0].mxu0
        %v4600 = vpop.f32.mrb[0].mxu0
        %v4601 = vadd.f32 %v3536, %v4600
        %v4602 = vpop.f32.mrb[0].mxu0
        %4603 = vmatprep.mubr.bf16.mxu0 0
        %4604 = vmatmul.mubr.bf16.gmra.mrb[0].mxu0 %v4157
        %v4605 = vpop.f32.mrb[0].mxu0
        %v4606 = vadd.f32 %v3541, %v4605
        %v4607 = vpop.f32.mrb[0].mxu0
        %v4608 = vpop.f32.mrb[0].mxu0
        %v4609 = vadd.f32 %v3544, %v4608
        %v4610 = vpop.f32.mrb[0].mxu0
        %4611 = vmatprep.mubr.bf16.mxu0 0
        %4612 = vmatmul.mubr.bf16.gmra.mrb[0].mxu0 %v4160
        %v4613 = vpop.f32.mrb[0].mxu0
        %v4614 = vadd.f32 %v3549, %v4613
        %v4615 = vpop.f32.mrb[0].mxu0
        %v4616 = vpop.f32.mrb[0].mxu0
        %v4617 = vadd.f32 %v3552, %v4616
        %v4618 = vpop.f32.mrb[0].mxu0
        %4619 = vmatprep.mubr.bf16.mxu0 0
        %4620 = vmatmul.mubr.bf16.gmra.mrb[0].mxu0 %v4163
        %v4621 = vpop.f32.mrb[0].mxu0
        %v4622 = vadd.f32 %v3557, %v4621
        %v4623 = vpop.f32.mrb[0].mxu0
        %v4624 = vpop.f32.mrb[0].mxu0
        %v4625 = vadd.f32 %v3560, %v4624
        %v4626 = vpop.f32.mrb[0].mxu0
        %4627 = vmatprep.mubr.bf16.mxu0 0
        %4628 = vmatmul.mubr.bf16.gmra.mrb[0].mxu0 %v4166
        %v4629 = vpop.f32.mrb[0].mxu0
        %v4630 = vadd.f32 %v3565, %v4629
        %v4631 = vpop.f32.mrb[0].mxu0
        %v4632 = vpop.f32.mrb[0].mxu0
        %v4633 = vadd.f32 %v3568, %v4632
        %v4634 = vpop.f32.mrb[0].mxu0
        %4635 = vmatprep.mubr.bf16.mxu0 0
        %4636 = vmatmul.mubr.bf16.gmra.mrb[0].mxu0 %v4169
        %v4637 = vpop.f32.mrb[0].mxu0
        %v4638 = vadd.f32 %v3573, %v4637
        %v4639 = vpop.f32.mrb[0].mxu0
        %v4640 = vpop.f32.mrb[0].mxu0
        %v4641 = vadd.f32 %v3576, %v4640
        %v4642 = vpop.f32.mrb[0].mxu0
        %4643 = vmatprep.mubr.bf16.mxu0 0
        %4644 = vmatmul.mubr.bf16.gmra.mrb[0].mxu0 %v4172
        %v4645 = vpop.f32.mrb[0].mxu0
        %v4646 = vadd.f32 %v3581, %v4645
        %v4647 = vpop.f32.mrb[0].mxu0
        %v4648 = vpop.f32.mrb[0].mxu0
        %v4649 = vadd.f32 %v3584, %v4648
        %v4650 = vpop.f32.mrb[0].mxu0
        %4651 = vmatprep.mubr.bf16.mxu0 0
        %4652 = vmatmul.mubr.bf16.gmra.mrb[0].mxu0 %v4175
        %v4653 = vpop.f32.mrb[0].mxu0
        %v4654 = vadd.f32 %v3589, %v4653
        %v4655 = vpop.f32.mrb[0].mxu0
        %v4656 = vpop.f32.mrb[0].mxu0
        %v4657 = vadd.f32 %v3592, %v4656
        %v4658 = vpop.f32.mrb[0].mxu0
        %4659 = vmatprep.mubr.bf16.mxu0 0
        %4660 = vmatmul.mubr.bf16.gmra.mrb[0].mxu0 %v4178
        %v4661 = vpop.f32.mrb[0].mxu0
        %v4662 = vadd.f32 %v3597, %v4661
        %v4663 = vpop.f32.mrb[0].mxu0
        %v4664 = vpop.f32.mrb[0].mxu0
        %v4665 = vadd.f32 %v3600, %v4664
        %v4666 = vpop.f32.mrb[0].mxu0
        %4667 = vmatprep.mubr.bf16.mxu0 0
        %4668 = vmatmul.mubr.bf16.gmra.mrb[0].mxu0 %v4181
        %v4669 = vpop.f32.mrb[0].mxu0
        %v4670 = vadd.f32 %v3605, %v4669
        %v4671 = vpop.f32.mrb[0].mxu0
        %v4672 = vpop.f32.mrb[0].mxu0
        %v4673 = vadd.f32 %v3608, %v4672
        %v4674 = vpop.f32.mrb[0].mxu0
        %4675 = vmatprep.mubr.bf16.mxu0 0
        %4676 = vmatmul.mubr.bf16.gmra.mrb[0].mxu0 %v4184
        %v4677 = vpop.f32.mrb[0].mxu0
        %v4678 = vadd.f32 %v3613, %v4677
        %v4679 = vpop.f32.mrb[0].mxu0
        %v4680 = vpop.f32.mrb[0].mxu0
        %v4681 = vadd.f32 %v3616, %v4680
        %v4682 = vpop.f32.mrb[0].mxu0
        %4683 = vmatprep.mubr.bf16.mxu0 0
        %4684 = vmatmul.mubr.bf16.gmra.mrb[0].mxu0 %v4187
        %v4685 = vpop.f32.mrb[0].mxu0
        %v4686 = vadd.f32 %v3621, %v4685
        %v4687 = vpop.f32.mrb[0].mxu0
        %v4688 = vpop.f32.mrb[0].mxu0
        %v4689 = vadd.f32 %v3624, %v4688
        %v4690 = vpop.f32.mrb[0].mxu0
        %4691 = vmatprep.mubr.bf16.mxu0 0
        %4692 = vmatmul.mubr.bf16.gmra.mrb[0].mxu0 %v4190
        %v4693 = vpop.f32.mrb[0].mxu0
        %v4694 = vadd.f32 %v3629, %v4693
        %v4695 = vpop.f32.mrb[0].mxu0
        %v4696 = vpop.f32.mrb[0].mxu0
        %v4697 = vadd.f32 %v3632, %v4696
        %v4698 = vpop.f32.mrb[0].mxu0
        %4699 = vmatprep.mubr.bf16.mxu0 0
        %4700 = vmatmul.mubr.bf16.gmra.mrb[0].mxu0 %v4193
        %v4701 = vpop.f32.mrb[0].mxu0
        %v4702 = vadd.f32 %v3637, %v4701
        %v4703 = vpop.f32.mrb[0].mxu0
        %v4704 = vpop.f32.mrb[0].mxu0
        %v4705 = vadd.f32 %v3640, %v4704
        %v4706 = vpop.f32.mrb[0].mxu0
        %4707 = vmatprep.mubr.bf16.mxu0 0
        %4708 = vmatmul.mubr.bf16.gmra.mrb[0].mxu0 %v4196
        %v4709 = vpop.f32.mrb[0].mxu0
        %v4710 = vadd.f32 %v3645, %v4709
        %v4711 = vpop.f32.mrb[0].mxu0
        %v4712 = vpop.f32.mrb[0].mxu0
        %v4713 = vadd.f32 %v3648, %v4712
        %v4714 = vpop.f32.mrb[0].mxu0
        %4715 = vmatprep.mubr.bf16.mxu0 0
        %4716 = vmatmul.mubr.bf16.gmra.mrb[0].mxu0 %v4199
        %v4717 = vpop.f32.mrb[0].mxu0
        %v4718 = vadd.f32 %v3653, %v4717
        %v4719 = vpop.f32.mrb[0].mxu0
        %v4720 = vpop.f32.mrb[0].mxu0
        %v4721 = vadd.f32 %v3656, %v4720
        %v4722 = vpop.f32.mrb[0].mxu0
        %4723 = vmatprep.mubr.bf16.mxu0 0
        %4724 = vmatmul.mubr.bf16.gmra.mrb[0].mxu0 %v4202
        %v4725 = vpop.f32.mrb[0].mxu0
        %v4726 = vadd.f32 %v3661, %v4725
        %v4727 = vpop.f32.mrb[0].mxu0
        %v4728 = vpop.f32.mrb[0].mxu0
        %v4729 = vadd.f32 %v3664, %v4728
        %v4730 = vpop.f32.mrb[0].mxu0
        %4731 = vmatprep.mubr.bf16.mxu0 0
        %4732 = vmatmul.mubr.bf16.gmra.mrb[0].mxu0 %v4205
        %v4733 = vpop.f32.mrb[0].mxu0
        %v4734 = vadd.f32 %v3669, %v4733
        %v4735 = vpop.f32.mrb[0].mxu0
        %v4736 = vpop.f32.mrb[0].mxu0
        %v4737 = vadd.f32 %v3672, %v4736
        %v4738 = vpop.f32.mrb[0].mxu0
        %4739 = vmatprep.mubr.bf16.mxu0 0
        %4740 = vmatmul.mubr.bf16.gmra.mrb[0].mxu0 %v4208
        %v4741 = vpop.f32.mrb[0].mxu0
        %v4742 = vadd.f32 %v3677, %v4741
        %v4743 = vpop.f32.mrb[0].mxu0
        %v4744 = vpop.f32.mrb[0].mxu0
        %v4745 = vadd.f32 %v3680, %v4744
        %v4746 = vpop.f32.mrb[0].mxu0
        %4747 = vmatprep.mubr.bf16.mxu0 0
        %4748 = vmatmul.mubr.bf16.gmra.mrb[0].mxu0 %v4211
        %v4749 = vpop.f32.mrb[0].mxu0
        %v4750 = vadd.f32 %v3685, %v4749
        %v4751 = vpop.f32.mrb[0].mxu0
        %v4752 = vpop.f32.mrb[0].mxu0
        %v4753 = vadd.f32 %v3688, %v4752
        %v4754 = vpop.f32.mrb[0].mxu0
        %4755 = vmatprep.mubr.bf16.mxu0 0
        %4756 = vmatmul.mubr.bf16.gmra.mrb[0].mxu0 %v4214
        %v4757 = vpop.f32.mrb[0].mxu0
        %v4758 = vadd.f32 %v3693, %v4757
        %v4759 = vpop.f32.mrb[0].mxu0
        %v4760 = vpop.f32.mrb[0].mxu0
        %v4761 = vadd.f32 %v3696, %v4760
        %v4762 = vpop.f32.mrb[0].mxu0
        %4763 = vdwg.mxu0
        %v4764 = vld [vmem:[%s995] sm:$0xe]
        %v4765 = vld [vmem:[%s995 + $0xc] sm:$0xe]
        %v4766 = vld [vmem:[%s995 + $0x18] sm:$0xe]
        %v4767 = vld [vmem:[%s995 + $0x24] sm:$0xe]
        %v4768 = vld [vmem:[%s995 + $0x30] sm:$0xe]
        %v4769 = vld [vmem:[%s995 + $0x3c] sm:$0xe]
        %v4770 = vld [vmem:[%s995 + $0x48] sm:$0xe]
        %v4771 = vld [vmem:[%s995 + $0x54] sm:$0xe]
        %v4772 = vld [vmem:[%s995 + $0x60] sm:$0xe]
        %v4773 = vld [vmem:[%s995 + $0x6c] sm:$0xe]
        %v4774 = vld [vmem:[%s995 + $0x78] sm:$0xe]
        %v4775 = vld [vmem:[%s995 + $0x84] sm:$0xe]
        %v4776 = vld [vmem:[%s995 + $0x90] sm:$0xe]
        %v4777 = vld [vmem:[%s995 + $0x9c] sm:$0xe]
        %v4778 = vld [vmem:[%s995 + $0xa8] sm:$0xe]
        %v4779 = vld [vmem:[%s995 + $0xb4] sm:$0xe]
        %v4780 = vld [vmem:[%s995 + $0xc0] sm:$0xe]
        %v4781 = vld [vmem:[%s995 + $0xcc] sm:$0xe]
        %v4782 = vld [vmem:[%s995 + $0xd8] sm:$0xe]
        %v4783 = vld [vmem:[%s995 + $0xe4] sm:$0xe]
        %v4784 = vld [vmem:[%s995 + $0xf0] sm:$0xe]
        %v4785 = vld [vmem:[%s995 + $0xfc] sm:$0xe]
        %v4786 = vld [vmem:[%s995 + $0x108] sm:$0xe]
        %v4787 = vld [vmem:[%s995 + $0x114] sm:$0xe]
        %v4788 = vld [vmem:[%s995 + $0x120] sm:$0xe]
        %v4789 = vld [vmem:[%s995 + $0x12c] sm:$0xe]
        %v4790 = vld [vmem:[%s995 + $0x138] sm:$0xe]
        %v4791 = vld [vmem:[%s995 + $0x144] sm:$0xe]
        %v4792 = vld [vmem:[%s995 + $0x150] sm:$0xe]
        %v4793 = vld [vmem:[%s995 + $0x15c] sm:$0xe]
        %v4794 = vld [vmem:[%s995 + $0x168] sm:$0xe]
        %v4795 = vld [vmem:[%s995 + $0x174] sm:$0xe]
        %v4796 = vld [vmem:[%s995 + $0x180] sm:$0xe]
        %v4797 = vld [vmem:[%s995 + $0x18c] sm:$0xe]
        %v4798 = vld [vmem:[%s995 + $0x198] sm:$0xe]
        %v4799 = vld [vmem:[%s995 + $0x1a4] sm:$0xe]
        %v4800 = vld [vmem:[%s995 + $0x1b0] sm:$0xe]
        %v4801 = vld [vmem:[%s995 + $0x1bc] sm:$0xe]
        %v4802 = vld [vmem:[%s995 + $0x1c8] sm:$0xe]
        %v4803 = vld [vmem:[%s995 + $0x1d4] sm:$0xe]
        %v4804 = vld [vmem:[%s995 + $0x1e0] sm:$0xe]
        %v4805 = vld [vmem:[%s995 + $0x1ec] sm:$0xe]
        %v4806 = vld [vmem:[%s995 + $0x1f8] sm:$0xe]
        %v4807 = vld [vmem:[%s995 + $0x204] sm:$0xe]
        %v4808 = vld [vmem:[%s995 + $0x210] sm:$0xe]
        %v4809 = vld [vmem:[%s995 + $0x21c] sm:$0xe]
        %v4810 = vld [vmem:[%s995 + $0x228] sm:$0xe]
        %v4811 = vld [vmem:[%s995 + $0x234] sm:$0xe]
        %v4812 = vld [vmem:[%s995 + $0x240] sm:$0xe]
        %v4813 = vld [vmem:[%s995 + $0x24c] sm:$0xe]
        %v4814 = vld [vmem:[%s995 + $0x258] sm:$0xe]
        %v4815 = vld [vmem:[%s995 + $0x264] sm:$0xe]
        %v4816 = vld [vmem:[%s995 + $0x270] sm:$0xe]
        %v4817 = vld [vmem:[%s995 + $0x27c] sm:$0xe]
        %v4818 = vld [vmem:[%s995 + $0x288] sm:$0xe]
        %v4819 = vld [vmem:[%s995 + $0x294] sm:$0xe]
        %v4820 = vld [vmem:[%s995 + $0x2a0] sm:$0xe]
        %v4821 = vld [vmem:[%s995 + $0x2ac] sm:$0xe]
        %v4822 = vld [vmem:[%s995 + $0x2b8] sm:$0xe]
        %v4823 = vld [vmem:[%s995 + $0x2c4] sm:$0xe]
        %v4824 = vld [vmem:[%s995 + $0x2d0] sm:$0xe]
        %v4825 = vld [vmem:[%s995 + $0x2dc] sm:$0xe]
        %v4826 = vld [vmem:[%s995 + $0x2e8] sm:$0xe]
        %v4827 = vld [vmem:[%s995 + $0x2f4] sm:$0xe]
        %vm4956 = vcmask 1042432
        %vm4957 = vcmask 1046532
        %vm4958 = vmor %vm4956, %vm4957
        %v4959 = vrot.slane %v4764, 5
        %v4960 = vrot.slane %v4959, 4
        %v4961 = vrot.slane %v1022, 5
        %v4962 = vsel %vm4958, %v4960, %v4961
        %v4963 = vrot.slane %v4961, 4
        %v4964 = vrot.slane %v1151, 5
        %v4965 = vsel %vm4958, %v4963, %v4964
        %v4966 = vrot.slane %v4765, 5
        %v4967 = vrot.slane %v4966, 4
        %v4968 = vrot.slane %v1024, 5
        %v4969 = vsel %vm4958, %v4967, %v4968
        %v4970 = vrot.slane %v4968, 4
        %v4971 = vrot.slane %v1152, 5
        %v4972 = vsel %vm4958, %v4970, %v4971
        %v4973 = vrot.slane %v4766, 5
        %v4974 = vrot.slane %v4973, 4
        %v4975 = vrot.slane %v1026, 5
        %v4976 = vsel %vm4958, %v4974, %v4975
        %v4977 = vrot.slane %v4975, 4
        %v4978 = vrot.slane %v1153, 5
        %v4979 = vsel %vm4958, %v4977, %v4978
        %v4980 = vrot.slane %v4767, 5
        %v4981 = vrot.slane %v4980, 4
        %v4982 = vrot.slane %v1028, 5
        %v4983 = vsel %vm4958, %v4981, %v4982
        %v4984 = vrot.slane %v4982, 4
        %v4985 = vrot.slane %v1154, 5
        %v4986 = vsel %vm4958, %v4984, %v4985
        %v4987 = vrot.slane %v4768, 5
        %v4988 = vrot.slane %v4987, 4
        %v4989 = vrot.slane %v1030, 5
        %v4990 = vsel %vm4958, %v4988, %v4989
        %v4991 = vrot.slane %v4989, 4
        %v4992 = vrot.slane %v1155, 5
        %v4993 = vsel %vm4958, %v4991, %v4992
        %v4994 = vrot.slane %v4769, 5
        %v4995 = vrot.slane %v4994, 4
        %v4996 = vrot.slane %v1032, 5
        %v4997 = vsel %vm4958, %v4995, %v4996
        %v4998 = vrot.slane %v4996, 4
        %v4999 = vrot.slane %v1156, 5
        %v5000 = vsel %vm4958, %v4998, %v4999
        %v5001 = vrot.slane %v4770, 5
        %v5002 = vrot.slane %v5001, 4
        %v5003 = vrot.slane %v1034, 5
        %v5004 = vsel %vm4958, %v5002, %v5003
        %v5005 = vrot.slane %v5003, 4
        %v5006 = vrot.slane %v1157, 5
        %v5007 = vsel %vm4958, %v5005, %v5006
        %v5008 = vrot.slane %v4771, 5
        %v5009 = vrot.slane %v5008, 4
        %v5010 = vrot.slane %v1036, 5
        %v5011 = vsel %vm4958, %v5009, %v5010
        %v5012 = vrot.slane %v5010, 4
        %v5013 = vrot.slane %v1158, 5
        %v5014 = vsel %vm4958, %v5012, %v5013
        %v5015 = vrot.slane %v4772, 5
        %v5016 = vrot.slane %v5015, 4
        %v5017 = vrot.slane %v1038, 5
        %v5018 = vsel %vm4958, %v5016, %v5017
        %v5019 = vrot.slane %v5017, 4
        %v5020 = vrot.slane %v1159, 5
        %v5021 = vsel %vm4958, %v5019, %v5020
        %v5022 = vrot.slane %v4773, 5
        %v5023 = vrot.slane %v5022, 4
        %v5024 = vrot.slane %v1040, 5
        %v5025 = vsel %vm4958, %v5023, %v5024
        %v5026 = vrot.slane %v5024, 4
        %v5027 = vrot.slane %v1160, 5
        %v5028 = vsel %vm4958, %v5026, %v5027
        %v5029 = vrot.slane %v4774, 5
        %v5030 = vrot.slane %v5029, 4
        %v5031 = vrot.slane %v1042, 5
        %v5032 = vsel %vm4958, %v5030, %v5031
        %v5033 = vrot.slane %v5031, 4
        %v5034 = vrot.slane %v1161, 5
        %v5035 = vsel %vm4958, %v5033, %v5034
        %v5036 = vrot.slane %v4775, 5
        %v5037 = vrot.slane %v5036, 4
        %v5038 = vrot.slane %v1044, 5
        %v5039 = vsel %vm4958, %v5037, %v5038
        %v5040 = vrot.slane %v5038, 4
        %v5041 = vrot.slane %v1162, 5
        %v5042 = vsel %vm4958, %v5040, %v5041
        %v5043 = vrot.slane %v4776, 5
        %v5044 = vrot.slane %v5043, 4
        %v5045 = vrot.slane %v1046, 5
        %v5046 = vsel %vm4958, %v5044, %v5045
        %v5047 = vrot.slane %v5045, 4
        %v5048 = vrot.slane %v1163, 5
        %v5049 = vsel %vm4958, %v5047, %v5048
        %v5050 = vrot.slane %v4777, 5
        %v5051 = vrot.slane %v5050, 4
        %v5052 = vrot.slane %v1048, 5
        %v5053 = vsel %vm4958, %v5051, %v5052
        %v5054 = vrot.slane %v5052, 4
        %v5055 = vrot.slane %v1164, 5
        %v5056 = vsel %vm4958, %v5054, %v5055
        %v5057 = vrot.slane %v4778, 5
        %v5058 = vrot.slane %v5057, 4
        %v5059 = vrot.slane %v1050, 5
        %v5060 = vsel %vm4958, %v5058, %v5059
        %v5061 = vrot.slane %v5059, 4
        %v5062 = vrot.slane %v1165, 5
        %v5063 = vsel %vm4958, %v5061, %v5062
        %v5064 = vrot.slane %v4779, 5
        %v5065 = vrot.slane %v5064, 4
        %v5066 = vrot.slane %v1052, 5
        %v5067 = vsel %vm4958, %v5065, %v5066
        %v5068 = vrot.slane %v5066, 4
        %v5069 = vrot.slane %v1166, 5
        %v5070 = vsel %vm4958, %v5068, %v5069
        %v5071 = vrot.slane %v4780, 5
        %v5072 = vrot.slane %v5071, 4
        %v5073 = vrot.slane %v1054, 5
        %v5074 = vsel %vm4958, %v5072, %v5073
        %v5075 = vrot.slane %v5073, 4
        %v5076 = vrot.slane %v1167, 5
        %v5077 = vsel %vm4958, %v5075, %v5076
        %v5078 = vrot.slane %v4781, 5
        %v5079 = vrot.slane %v5078, 4
        %v5080 = vrot.slane %v1056, 5
        %v5081 = vsel %vm4958, %v5079, %v5080
        %v5082 = vrot.slane %v5080, 4
        %v5083 = vrot.slane %v1168, 5
        %v5084 = vsel %vm4958, %v5082, %v5083
        %v5085 = vrot.slane %v4782, 5
        %v5086 = vrot.slane %v5085, 4
        %v5087 = vrot.slane %v1058, 5
        %v5088 = vsel %vm4958, %v5086, %v5087
        %v5089 = vrot.slane %v5087, 4
        %v5090 = vrot.slane %v1169, 5
        %v5091 = vsel %vm4958, %v5089, %v5090
        %v5092 = vrot.slane %v4783, 5
        %v5093 = vrot.slane %v5092, 4
        %v5094 = vrot.slane %v1060, 5
        %v5095 = vsel %vm4958, %v5093, %v5094
        %v5096 = vrot.slane %v5094, 4
        %v5097 = vrot.slane %v1170, 5
        %v5098 = vsel %vm4958, %v5096, %v5097
        %v5099 = vrot.slane %v4784, 5
        %v5100 = vrot.slane %v5099, 4
        %v5101 = vrot.slane %v1062, 5
        %v5102 = vsel %vm4958, %v5100, %v5101
        %v5103 = vrot.slane %v5101, 4
        %v5104 = vrot.slane %v1171, 5
        %v5105 = vsel %vm4958, %v5103, %v5104
        %v5106 = vrot.slane %v4785, 5
        %v5107 = vrot.slane %v5106, 4
        %v5108 = vrot.slane %v1064, 5
        %v5109 = vsel %vm4958, %v5107, %v5108
        %v5110 = vrot.slane %v5108, 4
        %v5111 = vrot.slane %v1172, 5
        %v5112 = vsel %vm4958, %v5110, %v5111
        %v5113 = vrot.slane %v4786, 5
        %v5114 = vrot.slane %v5113, 4
        %v5115 = vrot.slane %v1066, 5
        %v5116 = vsel %vm4958, %v5114, %v5115
        %v5117 = vrot.slane %v5115, 4
        %v5118 = vrot.slane %v1173, 5
        %v5119 = vsel %vm4958, %v5117, %v5118
        %v5120 = vrot.slane %v4787, 5
        %v5121 = vrot.slane %v5120, 4
        %v5122 = vrot.slane %v1068, 5
        %v5123 = vsel %vm4958, %v5121, %v5122
        %v5124 = vrot.slane %v5122, 4
        %v5125 = vrot.slane %v1174, 5
        %v5126 = vsel %vm4958, %v5124, %v5125
        %v5127 = vrot.slane %v4788, 5
        %v5128 = vrot.slane %v5127, 4
        %v5129 = vrot.slane %v1070, 5
        %v5130 = vsel %vm4958, %v5128, %v5129
        %v5131 = vrot.slane %v5129, 4
        %v5132 = vrot.slane %v1175, 5
        %v5133 = vsel %vm4958, %v5131, %v5132
        %v5134 = vrot.slane %v4789, 5
        %v5135 = vrot.slane %v5134, 4
        %v5136 = vrot.slane %v1072, 5
        %v5137 = vsel %vm4958, %v5135, %v5136
        %v5138 = vrot.slane %v5136, 4
        %v5139 = vrot.slane %v1176, 5
        %v5140 = vsel %vm4958, %v5138, %v5139
        %v5141 = vrot.slane %v4790, 5
        %v5142 = vrot.slane %v5141, 4
        %v5143 = vrot.slane %v1074, 5
        %v5144 = vsel %vm4958, %v5142, %v5143
        %v5145 = vrot.slane %v5143, 4
        %v5146 = vrot.slane %v1177, 5
        %v5147 = vsel %vm4958, %v5145, %v5146
        %v5148 = vrot.slane %v4791, 5
        %v5149 = vrot.slane %v5148, 4
        %v5150 = vrot.slane %v1076, 5
        %v5151 = vsel %vm4958, %v5149, %v5150
        %v5152 = vrot.slane %v5150, 4
        %v5153 = vrot.slane %v1178, 5
        %v5154 = vsel %vm4958, %v5152, %v5153
        %v5155 = vrot.slane %v4792, 5
        %v5156 = vrot.slane %v5155, 4
        %v5157 = vrot.slane %v1078, 5
        %v5158 = vsel %vm4958, %v5156, %v5157
        %v5159 = vrot.slane %v5157, 4
        %v5160 = vrot.slane %v1179, 5
        %v5161 = vsel %vm4958, %v5159, %v5160
        %v5162 = vrot.slane %v4793, 5
        %v5163 = vrot.slane %v5162, 4
        %v5164 = vrot.slane %v1080, 5
        %v5165 = vsel %vm4958, %v5163, %v5164
        %v5166 = vrot.slane %v5164, 4
        %v5167 = vrot.slane %v1180, 5
        %v5168 = vsel %vm4958, %v5166, %v5167
        %v5169 = vrot.slane %v4794, 5
        %v5170 = vrot.slane %v5169, 4
        %v5171 = vrot.slane %v1082, 5
        %v5172 = vsel %vm4958, %v5170, %v5171
        %v5173 = vrot.slane %v5171, 4
        %v5174 = vrot.slane %v1181, 5
        %v5175 = vsel %vm4958, %v5173, %v5174
        %v5176 = vrot.slane %v4795, 5
        %v5177 = vrot.slane %v5176, 4
        %v5178 = vrot.slane %v1084, 5
        %v5179 = vsel %vm4958, %v5177, %v5178
        %v5180 = vrot.slane %v5178, 4
        %v5181 = vrot.slane %v1182, 5
        %v5182 = vsel %vm4958, %v5180, %v5181
        %v5183 = vrot.slane %v4796, 5
        %v5184 = vrot.slane %v5183, 4
        %v5185 = vrot.slane %v1086, 5
        %v5186 = vsel %vm4958, %v5184, %v5185
        %v5187 = vrot.slane %v5185, 4
        %v5188 = vrot.slane %v1183, 5
        %v5189 = vsel %vm4958, %v5187, %v5188
        %v5190 = vrot.slane %v4797, 5
        %v5191 = vrot.slane %v5190, 4
        %v5192 = vrot.slane %v1088, 5
        %v5193 = vsel %vm4958, %v5191, %v5192
        %v5194 = vrot.slane %v5192, 4
        %v5195 = vrot.slane %v1184, 5
        %v5196 = vsel %vm4958, %v5194, %v5195
        %v5197 = vrot.slane %v4798, 5
        %v5198 = vrot.slane %v5197, 4
        %v5199 = vrot.slane %v1090, 5
        %v5200 = vsel %vm4958, %v5198, %v5199
        %v5201 = vrot.slane %v5199, 4
        %v5202 = vrot.slane %v1185, 5
        %v5203 = vsel %vm4958, %v5201, %v5202
        %v5204 = vrot.slane %v4799, 5
        %v5205 = vrot.slane %v5204, 4
        %v5206 = vrot.slane %v1092, 5
        %v5207 = vsel %vm4958, %v5205, %v5206
        %v5208 = vrot.slane %v5206, 4
        %v5209 = vrot.slane %v1186, 5
        %v5210 = vsel %vm4958, %v5208, %v5209
        %v5211 = vrot.slane %v4800, 5
        %v5212 = vrot.slane %v5211, 4
        %v5213 = vrot.slane %v1094, 5
        %v5214 = vsel %vm4958, %v5212, %v5213
        %v5215 = vrot.slane %v5213, 4
        %v5216 = vrot.slane %v1187, 5
        %v5217 = vsel %vm4958, %v5215, %v5216
        %v5218 = vrot.slane %v4801, 5
        %v5219 = vrot.slane %v5218, 4
        %v5220 = vrot.slane %v1096, 5
        %v5221 = vsel %vm4958, %v5219, %v5220
        %v5222 = vrot.slane %v5220, 4
        %v5223 = vrot.slane %v1188, 5
        %v5224 = vsel %vm4958, %v5222, %v5223
        %v5225 = vrot.slane %v4802, 5
        %v5226 = vrot.slane %v5225, 4
        %v5227 = vrot.slane %v1098, 5
        %v5228 = vsel %vm4958, %v5226, %v5227
        %v5229 = vrot.slane %v5227, 4
        %v5230 = vrot.slane %v1189, 5
        %v5231 = vsel %vm4958, %v5229, %v5230
        %v5232 = vrot.slane %v4803, 5
        %v5233 = vrot.slane %v5232, 4
        %v5234 = vrot.slane %v1100, 5
        %v5235 = vsel %vm4958, %v5233, %v5234
        %v5236 = vrot.slane %v5234, 4
        %v5237 = vrot.slane %v1190, 5
        %v5238 = vsel %vm4958, %v5236, %v5237
        %v5239 = vrot.slane %v4804, 5
        %v5240 = vrot.slane %v5239, 4
        %v5241 = vrot.slane %v1102, 5
        %v5242 = vsel %vm4958, %v5240, %v5241
        %v5243 = vrot.slane %v5241, 4
        %v5244 = vrot.slane %v1191, 5
        %v5245 = vsel %vm4958, %v5243, %v5244
        %v5246 = vrot.slane %v4805, 5
        %v5247 = vrot.slane %v5246, 4
        %v5248 = vrot.slane %v1104, 5
        %v5249 = vsel %vm4958, %v5247, %v5248
        %v5250 = vrot.slane %v5248, 4
        %v5251 = vrot.slane %v1192, 5
        %v5252 = vsel %vm4958, %v5250, %v5251
        %v5253 = vrot.slane %v4806, 5
        %v5254 = vrot.slane %v5253, 4
        %v5255 = vrot.slane %v1106, 5
        %v5256 = vsel %vm4958, %v5254, %v5255
        %v5257 = vrot.slane %v5255, 4
        %v5258 = vrot.slane %v1193, 5
        %v5259 = vsel %vm4958, %v5257, %v5258
        %v5260 = vrot.slane %v4807, 5
        %v5261 = vrot.slane %v5260, 4
        %v5262 = vrot.slane %v1108, 5
        %v5263 = vsel %vm4958, %v5261, %v5262
        %v5264 = vrot.slane %v5262, 4
        %v5265 = vrot.slane %v1194, 5
        %v5266 = vsel %vm4958, %v5264, %v5265
        %v5267 = vrot.slane %v4808, 5
        %v5268 = vrot.slane %v5267, 4
        %v5269 = vrot.slane %v1110, 5
        %v5270 = vsel %vm4958, %v5268, %v5269
        %v5271 = vrot.slane %v5269, 4
        %v5272 = vrot.slane %v1195, 5
        %v5273 = vsel %vm4958, %v5271, %v5272
        %v5274 = vrot.slane %v4809, 5
        %v5275 = vrot.slane %v5274, 4
        %v5276 = vrot.slane %v1112, 5
        %v5277 = vsel %vm4958, %v5275, %v5276
        %v5278 = vrot.slane %v5276, 4
        %v5279 = vrot.slane %v1196, 5
        %v5280 = vsel %vm4958, %v5278, %v5279
        %v5281 = vrot.slane %v4810, 5
        %v5282 = vrot.slane %v5281, 4
        %v5283 = vrot.slane %v1114, 5
        %v5284 = vsel %vm4958, %v5282, %v5283
        %v5285 = vrot.slane %v5283, 4
        %v5286 = vrot.slane %v1197, 5
        %v5287 = vsel %vm4958, %v5285, %v5286
        %v5288 = vrot.slane %v4811, 5
        %v5289 = vrot.slane %v5288, 4
        %v5290 = vrot.slane %v1116, 5
        %v5291 = vsel %vm4958, %v5289, %v5290
        %v5292 = vrot.slane %v5290, 4
        %v5293 = vrot.slane %v1198, 5
        %v5294 = vsel %vm4958, %v5292, %v5293
        %v5295 = vrot.slane %v4812, 5
        %v5296 = vrot.slane %v5295, 4
        %v5297 = vrot.slane %v1118, 5
        %v5298 = vsel %vm4958, %v5296, %v5297
        %v5299 = vrot.slane %v5297, 4
        %v5300 = vrot.slane %v1199, 5
        %v5301 = vsel %vm4958, %v5299, %v5300
        %v5302 = vrot.slane %v4813, 5
        %v5303 = vrot.slane %v5302, 4
        %v5304 = vrot.slane %v1120, 5
        %v5305 = vsel %vm4958, %v5303, %v5304
        %v5306 = vrot.slane %v5304, 4
        %v5307 = vrot.slane %v1200, 5
        %v5308 = vsel %vm4958, %v5306, %v5307
        %v5309 = vrot.slane %v4814, 5
        %v5310 = vrot.slane %v5309, 4
        %v5311 = vrot.slane %v1122, 5
        %v5312 = vsel %vm4958, %v5310, %v5311
        %v5313 = vrot.slane %v5311, 4
        %v5314 = vrot.slane %v1201, 5
        %v5315 = vsel %vm4958, %v5313, %v5314
        %v5316 = vrot.slane %v4815, 5
        %v5317 = vrot.slane %v5316, 4
        %v5318 = vrot.slane %v1124, 5
        %v5319 = vsel %vm4958, %v5317, %v5318
        %v5320 = vrot.slane %v5318, 4
        %v5321 = vrot.slane %v1202, 5
        %v5322 = vsel %vm4958, %v5320, %v5321
        %v5323 = vrot.slane %v4816, 5
        %v5324 = vrot.slane %v5323, 4
        %v5325 = vrot.slane %v1126, 5
        %v5326 = vsel %vm4958, %v5324, %v5325
        %v5327 = vrot.slane %v5325, 4
        %v5328 = vrot.slane %v1203, 5
        %v5329 = vsel %vm4958, %v5327, %v5328
        %v5330 = vrot.slane %v4817, 5
        %v5331 = vrot.slane %v5330, 4
        %v5332 = vrot.slane %v1128, 5
        %v5333 = vsel %vm4958, %v5331, %v5332
        %v5334 = vrot.slane %v5332, 4
        %v5335 = vrot.slane %v1204, 5
        %v5336 = vsel %vm4958, %v5334, %v5335
        %v5337 = vrot.slane %v4818, 5
        %v5338 = vrot.slane %v5337, 4
        %v5339 = vrot.slane %v1130, 5
        %v5340 = vsel %vm4958, %v5338, %v5339
        %v5341 = vrot.slane %v5339, 4
        %v5342 = vrot.slane %v1205, 5
        %v5343 = vsel %vm4958, %v5341, %v5342
        %v5344 = vrot.slane %v4819, 5
        %v5345 = vrot.slane %v5344, 4
        %v5346 = vrot.slane %v1132, 5
        %v5347 = vsel %vm4958, %v5345, %v5346
        %v5348 = vrot.slane %v5346, 4
        %v5349 = vrot.slane %v1206, 5
        %v5350 = vsel %vm4958, %v5348, %v5349
        %v5351 = vrot.slane %v4820, 5
        %v5352 = vrot.slane %v5351, 4
        %v5353 = vrot.slane %v1134, 5
        %v5354 = vsel %vm4958, %v5352, %v5353
        %v5355 = vrot.slane %v5353, 4
        %v5356 = vrot.slane %v1207, 5
        %v5357 = vsel %vm4958, %v5355, %v5356
        %v5358 = vrot.slane %v4821, 5
        %v5359 = vrot.slane %v5358, 4
        %v5360 = vrot.slane %v1136, 5
        %v5361 = vsel %vm4958, %v5359, %v5360
        %v5362 = vrot.slane %v5360, 4
        %v5363 = vrot.slane %v1208, 5
        %v5364 = vsel %vm4958, %v5362, %v5363
        %v5365 = vrot.slane %v4822, 5
        %v5366 = vrot.slane %v5365, 4
        %v5367 = vrot.slane %v1138, 5
        %v5368 = vsel %vm4958, %v5366, %v5367
        %v5369 = vrot.slane %v5367, 4
        %v5370 = vrot.slane %v1209, 5
        %v5371 = vsel %vm4958, %v5369, %v5370
        %v5372 = vrot.slane %v4823, 5
        %v5373 = vrot.slane %v5372, 4
        %v5374 = vrot.slane %v1140, 5
        %v5375 = vsel %vm4958, %v5373, %v5374
        %v5376 = vrot.slane %v5374, 4
        %v5377 = vrot.slane %v1210, 5
        %v5378 = vsel %vm4958, %v5376, %v5377
        %v5379 = vrot.slane %v4824, 5
        %v5380 = vrot.slane %v5379, 4
        %v5381 = vrot.slane %v1142, 5
        %v5382 = vsel %vm4958, %v5380, %v5381
        %v5383 = vrot.slane %v5381, 4
        %v5384 = vrot.slane %v1211, 5
        %v5385 = vsel %vm4958, %v5383, %v5384
        %v5386 = vrot.slane %v4825, 5
        %v5387 = vrot.slane %v5386, 4
        %v5388 = vrot.slane %v1144, 5
        %v5389 = vsel %vm4958, %v5387, %v5388
        %v5390 = vrot.slane %v5388, 4
        %v5391 = vrot.slane %v1212, 5
        %v5392 = vsel %vm4958, %v5390, %v5391
        %v5393 = vrot.slane %v4826, 5
        %v5394 = vrot.slane %v5393, 4
        %v5395 = vrot.slane %v1146, 5
        %v5396 = vsel %vm4958, %v5394, %v5395
        %v5397 = vrot.slane %v5395, 4
        %v5398 = vrot.slane %v1213, 5
        %v5399 = vsel %vm4958, %v5397, %v5398
        %v5400 = vrot.slane %v4827, 5
        %v5401 = vrot.slane %v5400, 4
        %v5402 = vrot.slane %v1148, 5
        %v5403 = vsel %vm4958, %v5401, %v5402
        %v5404 = vrot.slane %v5402, 4
        %v5405 = vrot.slane %v1214, 5
        %v5406 = vsel %vm4958, %v5404, %v5405
        %s5407 = scalar_lea.vmem %s1, 16
        %v5408 = vld [vmem:[%s5407] sm:$0xf]
        %v5409 = vld [vmem:[%s5407 + $0x4] sm:$0x1]
        %v5410 = vunpack.c.l.b16 %v4962
        %v5411 = vunpack.c.l.b16 %v4965
        %v5412 = vunpack.c.l.b16 %v4969
        %v5413 = vunpack.c.l.b16 %v4972
        %v5414 = vunpack.c.l.b16 %v4976
        %v5415 = vunpack.c.l.b16 %v4979
        %v5416 = vunpack.c.l.b16 %v4983
        %v5417 = vunpack.c.l.b16 %v4986
        %v5418 = vunpack.c.l.b16 %v4990
        %v5419 = vunpack.c.l.b16 %v4993
        %v5420 = vunpack.c.l.b16 %v4997
        %v5421 = vunpack.c.l.b16 %v5000
        %v5422 = vunpack.c.l.b16 %v5004
        %v5423 = vunpack.c.l.b16 %v5007
        %v5424 = vunpack.c.l.b16 %v5011
        %v5425 = vunpack.c.l.b16 %v5014
        %v5426 = vunpack.c.l.b16 %v5018
        %v5427 = vunpack.c.l.b16 %v5021
        %v5428 = vunpack.c.l.b16 %v5025
        %v5429 = vunpack.c.l.b16 %v5028
        %v5430 = vunpack.c.l.b16 %v5032
        %v5431 = vunpack.c.l.b16 %v5035
        %v5432 = vunpack.c.l.b16 %v5039
        %v5433 = vunpack.c.l.b16 %v5042
        %v5434 = vunpack.c.l.b16 %v5046
        %v5435 = vunpack.c.l.b16 %v5049
        %v5436 = vunpack.c.l.b16 %v5053
        %v5437 = vunpack.c.l.b16 %v5056
        %v5438 = vunpack.c.l.b16 %v5060
        %v5439 = vunpack.c.l.b16 %v5063
        %v5440 = vunpack.c.l.b16 %v5067
        %v5441 = vunpack.c.l.b16 %v5070
        %v5442 = vunpack.c.l.b16 %v5074
        %v5443 = vunpack.c.l.b16 %v5077
        %v5444 = vunpack.c.l.b16 %v5081
        %v5445 = vunpack.c.l.b16 %v5084
        %v5446 = vunpack.c.l.b16 %v5088
        %v5447 = vunpack.c.l.b16 %v5091
        %v5448 = vunpack.c.l.b16 %v5095
        %v5449 = vunpack.c.l.b16 %v5098
        %v5450 = vunpack.c.l.b16 %v5102
        %v5451 = vunpack.c.l.b16 %v5105
        %v5452 = vunpack.c.l.b16 %v5109
        %v5453 = vunpack.c.l.b16 %v5112
        %v5454 = vunpack.c.l.b16 %v5116
        %v5455 = vunpack.c.l.b16 %v5119
        %v5456 = vunpack.c.l.b16 %v5123
        %v5457 = vunpack.c.l.b16 %v5126
        %v5458 = vunpack.c.l.b16 %v5130
        %v5459 = vunpack.c.l.b16 %v5133
        %v5460 = vunpack.c.l.b16 %v5137
        %v5461 = vunpack.c.l.b16 %v5140
        %v5462 = vunpack.c.l.b16 %v5144
        %v5463 = vunpack.c.l.b16 %v5147
        %v5464 = vunpack.c.l.b16 %v5151
        %v5465 = vunpack.c.l.b16 %v5154
        %v5466 = vunpack.c.l.b16 %v5158
        %v5467 = vunpack.c.l.b16 %v5161
        %v5468 = vunpack.c.l.b16 %v5165
        %v5469 = vunpack.c.l.b16 %v5168
        %v5470 = vunpack.c.l.b16 %v5172
        %v5471 = vunpack.c.l.b16 %v5175
        %v5472 = vunpack.c.l.b16 %v5179
        %v5473 = vunpack.c.l.b16 %v5182
        %v5474 = vunpack.c.l.b16 %v5186
        %v5475 = vunpack.c.l.b16 %v5189
        %v5476 = vunpack.c.l.b16 %v5193
        %v5477 = vunpack.c.l.b16 %v5196
        %v5478 = vunpack.c.l.b16 %v5200
        %v5479 = vunpack.c.l.b16 %v5203
        %v5480 = vunpack.c.l.b16 %v5207
        %v5481 = vunpack.c.l.b16 %v5210
        %v5482 = vunpack.c.l.b16 %v5214
        %v5483 = vunpack.c.l.b16 %v5217
        %v5484 = vunpack.c.l.b16 %v5221
        %v5485 = vunpack.c.l.b16 %v5224
        %v5486 = vunpack.c.l.b16 %v5228
        %v5487 = vunpack.c.l.b16 %v5231
        %v5488 = vunpack.c.l.b16 %v5235
        %v5489 = vunpack.c.l.b16 %v5238
        %v5490 = vunpack.c.l.b16 %v5242
        %v5491 = vunpack.c.l.b16 %v5245
        %v5492 = vunpack.c.l.b16 %v5249
        %v5493 = vunpack.c.l.b16 %v5252
        %v5494 = vunpack.c.l.b16 %v5256
        %v5495 = vunpack.c.l.b16 %v5259
        %v5496 = vunpack.c.l.b16 %v5263
        %v5497 = vunpack.c.l.b16 %v5266
        %v5498 = vunpack.c.l.b16 %v5270
        %v5499 = vunpack.c.l.b16 %v5273
        %v5500 = vunpack.c.l.b16 %v5277
        %v5501 = vunpack.c.l.b16 %v5280
        %v5502 = vunpack.c.l.b16 %v5284
        %v5503 = vunpack.c.l.b16 %v5287
        %v5504 = vunpack.c.l.b16 %v5291
        %v5505 = vunpack.c.l.b16 %v5294
        %v5506 = vunpack.c.l.b16 %v5298
        %v5507 = vunpack.c.l.b16 %v5301
        %v5508 = vunpack.c.l.b16 %v5305
        %v5509 = vunpack.c.l.b16 %v5308
        %v5510 = vunpack.c.l.b16 %v5312
        %v5511 = vunpack.c.l.b16 %v5315
        %v5512 = vunpack.c.l.b16 %v5319
        %v5513 = vunpack.c.l.b16 %v5322
        %v5514 = vunpack.c.l.b16 %v5326
        %v5515 = vunpack.c.l.b16 %v5329
        %v5516 = vunpack.c.l.b16 %v5333
        %v5517 = vunpack.c.l.b16 %v5336
        %v5518 = vunpack.c.l.b16 %v5340
        %v5519 = vunpack.c.l.b16 %v5343
        %v5520 = vunpack.c.l.b16 %v5347
        %v5521 = vunpack.c.l.b16 %v5350
        %v5522 = vunpack.c.l.b16 %v5354
        %v5523 = vunpack.c.l.b16 %v5357
        %v5524 = vunpack.c.l.b16 %v5361
        %v5525 = vunpack.c.l.b16 %v5364
        %v5526 = vunpack.c.l.b16 %v5368
        %v5527 = vunpack.c.l.b16 %v5371
        %v5528 = vunpack.c.l.b16 %v5375
        %v5529 = vunpack.c.l.b16 %v5378
        %v5530 = vunpack.c.l.b16 %v5382
        %v5531 = vunpack.c.l.b16 %v5385
        %v5532 = vunpack.c.l.b16 %v5389
        %v5533 = vunpack.c.l.b16 %v5392
        %v5534 = vunpack.c.l.b16 %v5396
        %v5535 = vunpack.c.l.b16 %v5399
        %v5536 = vunpack.c.l.b16 %v5403
        %v5537 = vunpack.c.l.b16 %v5406
        %v5538 = vpack.c.b16 %v5411, %v5410
        %v5539 = vpack.c.b16 %v5413, %v5412
        %v5540 = vpack.c.b16 %v5415, %v5414
        %v5541 = vpack.c.b16 %v5417, %v5416
        %v5542 = vpack.c.b16 %v5419, %v5418
        %v5543 = vpack.c.b16 %v5421, %v5420
        %v5544 = vpack.c.b16 %v5423, %v5422
        %v5545 = vpack.c.b16 %v5425, %v5424
        %v5546 = vpack.c.b16 %v5427, %v5426
        %v5547 = vpack.c.b16 %v5429, %v5428
        %v5548 = vpack.c.b16 %v5431, %v5430
        %v5549 = vpack.c.b16 %v5433, %v5432
        %v5550 = vpack.c.b16 %v5435, %v5434
        %v5551 = vpack.c.b16 %v5437, %v5436
        %v5552 = vpack.c.b16 %v5439, %v5438
        %v5553 = vpack.c.b16 %v5441, %v5440
        %v5554 = vpack.c.b16 %v5443, %v5442
        %v5555 = vpack.c.b16 %v5445, %v5444
        %v5556 = vpack.c.b16 %v5447, %v5446
        %v5557 = vpack.c.b16 %v5449, %v5448
        %v5558 = vpack.c.b16 %v5451, %v5450
        %v5559 = vpack.c.b16 %v5453, %v5452
        %v5560 = vpack.c.b16 %v5455, %v5454
        %v5561 = vpack.c.b16 %v5457, %v5456
        %v5562 = vpack.c.b16 %v5459, %v5458
        %v5563 = vpack.c.b16 %v5461, %v5460
        %v5564 = vpack.c.b16 %v5463, %v5462
        %v5565 = vpack.c.b16 %v5465, %v5464
        %v5566 = vpack.c.b16 %v5467, %v5466
        %v5567 = vpack.c.b16 %v5469, %v5468
        %v5568 = vpack.c.b16 %v5471, %v5470
        %v5569 = vpack.c.b16 %v5473, %v5472
        %v5570 = vpack.c.b16 %v5475, %v5474
        %v5571 = vpack.c.b16 %v5477, %v5476
        %v5572 = vpack.c.b16 %v5479, %v5478
        %v5573 = vpack.c.b16 %v5481, %v5480
        %v5574 = vpack.c.b16 %v5483, %v5482
        %v5575 = vpack.c.b16 %v5485, %v5484
        %v5576 = vpack.c.b16 %v5487, %v5486
        %v5577 = vpack.c.b16 %v5489, %v5488
        %v5578 = vpack.c.b16 %v5491, %v5490
        %v5579 = vpack.c.b16 %v5493, %v5492
        %v5580 = vpack.c.b16 %v5495, %v5494
        %v5581 = vpack.c.b16 %v5497, %v5496
        %v5582 = vpack.c.b16 %v5499, %v5498
        %v5583 = vpack.c.b16 %v5501, %v5500
        %v5584 = vpack.c.b16 %v5503, %v5502
        %v5585 = vpack.c.b16 %v5505, %v5504
        %v5586 = vpack.c.b16 %v5507, %v5506
        %v5587 = vpack.c.b16 %v5509, %v5508
        %v5588 = vpack.c.b16 %v5511, %v5510
        %v5589 = vpack.c.b16 %v5513, %v5512
        %v5590 = vpack.c.b16 %v5515, %v5514
        %v5591 = vpack.c.b16 %v5517, %v5516
        %v5592 = vpack.c.b16 %v5519, %v5518
        %v5593 = vpack.c.b16 %v5521, %v5520
        %v5594 = vpack.c.b16 %v5523, %v5522
        %v5595 = vpack.c.b16 %v5525, %v5524
        %v5596 = vpack.c.b16 %v5527, %v5526
        %v5597 = vpack.c.b16 %v5529, %v5528
        %v5598 = vpack.c.b16 %v5531, %v5530
        %v5599 = vpack.c.b16 %v5533, %v5532
        %v5600 = vpack.c.b16 %v5535, %v5534
        %v5601 = vpack.c.b16 %v5537, %v5536
        %v5604 = vunpack.c.l.b16 %v5408
        %v5605 = vunpack.c.l.b16 %v5409
        %v5606 = vpack.c.b16 %v5605, %v5604
        %v5608 = vsel %vm2954, %v5538, 0
        %v5611 = vsel %vm2954, %v5539, 0
        %v5614 = vsel %vm2954, %v5540, 0
        %v5617 = vsel %vm2954, %v5541, 0
        %v5620 = vsel %vm2954, %v5542, 0
        %v5623 = vsel %vm2954, %v5543, 0
        %v5626 = vsel %vm2954, %v5544, 0
        %v5629 = vsel %vm2954, %v5545, 0
        %v5632 = vsel %vm2954, %v5546, 0
        %v5635 = vsel %vm2954, %v5547, 0
        %v5638 = vsel %vm2954, %v5548, 0
        %v5641 = vsel %vm2954, %v5549, 0
        %v5644 = vsel %vm2954, %v5550, 0
        %v5647 = vsel %vm2954, %v5551, 0
        %v5650 = vsel %vm2954, %v5552, 0
        %v5653 = vsel %vm2954, %v5553, 0
        %v5656 = vsel %vm2954, %v5554, 0
        %v5659 = vsel %vm2954, %v5555, 0
        %v5662 = vsel %vm2954, %v5556, 0
        %v5665 = vsel %vm2954, %v5557, 0
        %v5668 = vsel %vm2954, %v5558, 0
        %v5671 = vsel %vm2954, %v5559, 0
        %v5674 = vsel %vm2954, %v5560, 0
        %v5677 = vsel %vm2954, %v5561, 0
        %v5680 = vsel %vm2954, %v5562, 0
        %v5683 = vsel %vm2954, %v5563, 0
        %v5686 = vsel %vm2954, %v5564, 0
        %v5689 = vsel %vm2954, %v5565, 0
        %v5692 = vsel %vm2954, %v5566, 0
        %v5695 = vsel %vm2954, %v5567, 0
        %v5698 = vsel %vm2954, %v5568, 0
        %v5701 = vsel %vm2954, %v5569, 0
        %v5704 = vsel %vm2954, %v5570, 0
        %v5707 = vsel %vm2954, %v5571, 0
        %v5710 = vsel %vm2954, %v5572, 0
        %v5713 = vsel %vm2954, %v5573, 0
        %v5716 = vsel %vm2954, %v5574, 0
        %v5719 = vsel %vm2954, %v5575, 0
        %v5722 = vsel %vm2954, %v5576, 0
        %v5725 = vsel %vm2954, %v5577, 0
        %v5728 = vsel %vm2954, %v5578, 0
        %v5731 = vsel %vm2954, %v5579, 0
        %v5734 = vsel %vm2954, %v5580, 0
        %v5737 = vsel %vm2954, %v5581, 0
        %v5740 = vsel %vm2954, %v5582, 0
        %v5743 = vsel %vm2954, %v5583, 0
        %v5746 = vsel %vm2954, %v5584, 0
        %v5749 = vsel %vm2954, %v5585, 0
        %v5752 = vsel %vm2954, %v5586, 0
        %v5755 = vsel %vm2954, %v5587, 0
        %v5758 = vsel %vm2954, %v5588, 0
        %v5761 = vsel %vm2954, %v5589, 0
        %v5764 = vsel %vm2954, %v5590, 0
        %v5767 = vsel %vm2954, %v5591, 0
        %v5770 = vsel %vm2954, %v5592, 0
        %v5773 = vsel %vm2954, %v5593, 0
        %v5776 = vsel %vm2954, %v5594, 0
        %v5779 = vsel %vm2954, %v5595, 0
        %v5782 = vsel %vm2954, %v5596, 0
        %v5785 = vsel %vm2954, %v5597, 0
        %v5788 = vsel %vm2954, %v5598, 0
        %v5791 = vsel %vm2954, %v5599, 0
        %v5794 = vsel %vm2954, %v5600, 0
        %v5797 = vsel %vm2954, %v5601, 0
        %v5800 = vand.u32 %v5606, %v3150
        %5802 = vmatprep.subr.bf16.mxu0 0
        %5803 = vmatpush1.bf16.msra.mxu0 %v5800
        %5804 = vmatprep.subr.bf16.mxu0 0
        %5805 = vmatpush1.bf16.msra.mxu0 0
        %5806 = vmatprep.subr.bf16.mxu0 0
        %5807 = vmatpush1.bf16.msra.mxu0 0
        %5808 = vmatprep.subr.bf16.mxu0 0
        %5809 = vmatpush1.bf16.msra.mxu0 0
        %5810 = vmatprep.subr.bf16.mxu0 0
        %5811 = vmatpush1.bf16.msra.mxu0 0
        %5812 = vmatprep.subr.bf16.mxu0 0
        %5813 = vmatpush1.bf16.msra.mxu0 0
        %5814 = vmatprep.subr.bf16.mxu0 0
        %5815 = vmatpush1.bf16.msra.mxu0 0
        %5816 = vmatprep.subr.bf16.mxu0 0
        %5817 = vmatpush1.bf16.msra.mxu0 0
        %5818 = vmatprep.subr.bf16.mxu0 0
        %5819 = vmatpush1.bf16.msra.mxu0 0
        %5820 = vmatprep.subr.bf16.mxu0 0
        %5821 = vmatpush1.bf16.msra.mxu0 0
        %5822 = vmatprep.subr.bf16.mxu0 0
        %5823 = vmatpush1.bf16.msra.mxu0 0
        %5824 = vmatprep.subr.bf16.mxu0 0
        %5825 = vmatpush1.bf16.msra.mxu0 0
        %5826 = vmatprep.subr.bf16.mxu0 0
        %5827 = vmatpush1.bf16.msra.mxu0 0
        %5828 = vmatprep.subr.bf16.mxu0 0
        %5829 = vmatpush1.bf16.msra.mxu0 0
        %5830 = vmatprep.subr.bf16.mxu0 0
        %5831 = vmatpush1.bf16.msra.mxu0 0
        %5832 = vmatprep.subr.bf16.mxu0 0
        %5833 = vmatpush1.bf16.msra.mxu0 0
        %5834 = vmatprep.mubr.bf16.mxu0 0
        %5835 = vmatmul.mubr.bf16.gmra.mrb[0].mxu0 %v5608
        %v5836 = vpop.f32.mrb[0].mxu0
        %v5837 = vadd.f32 0.0, %v5836
        %v5838 = vpop.f32.mrb[0].mxu0
        %v5839 = vpop.f32.mrb[0].mxu0
        %v5840 = vadd.f32 0.0, %v5839
        %v5841 = vpop.f32.mrb[0].mxu0
        %5842 = vmatprep.mubr.bf16.mxu0 0
        %5843 = vmatmul.mubr.bf16.gmra.mrb[0].mxu0 %v5611
        %v5844 = vpop.f32.mrb[0].mxu0
        %v5845 = vadd.f32 0.0, %v5844
        %v5846 = vpop.f32.mrb[0].mxu0
        %v5847 = vpop.f32.mrb[0].mxu0
        %v5848 = vadd.f32 0.0, %v5847
        %v5849 = vpop.f32.mrb[0].mxu0
        %5850 = vmatprep.mubr.bf16.mxu0 0
        %5851 = vmatmul.mubr.bf16.gmra.mrb[0].mxu0 %v5614
        %v5852 = vpop.f32.mrb[0].mxu0
        %v5853 = vadd.f32 0.0, %v5852
        %v5854 = vpop.f32.mrb[0].mxu0
        %v5855 = vpop.f32.mrb[0].mxu0
        %v5856 = vadd.f32 0.0, %v5855
        %v5857 = vpop.f32.mrb[0].mxu0
        %5858 = vmatprep.mubr.bf16.mxu0 0
        %5859 = vmatmul.mubr.bf16.gmra.mrb[0].mxu0 %v5617
        %v5860 = vpop.f32.mrb[0].mxu0
        %v5861 = vadd.f32 0.0, %v5860
        %v5862 = vpop.f32.mrb[0].mxu0
        %v5863 = vpop.f32.mrb[0].mxu0
        %v5864 = vadd.f32 0.0, %v5863
        %v5865 = vpop.f32.mrb[0].mxu0
        %5866 = vmatprep.mubr.bf16.mxu0 0
        %5867 = vmatmul.mubr.bf16.gmra.mrb[0].mxu0 %v5620
        %v5868 = vpop.f32.mrb[0].mxu0
        %v5869 = vadd.f32 0.0, %v5868
        %v5870 = vpop.f32.mrb[0].mxu0
        %v5871 = vpop.f32.mrb[0].mxu0
        %v5872 = vadd.f32 0.0, %v5871
        %v5873 = vpop.f32.mrb[0].mxu0
        %5874 = vmatprep.mubr.bf16.mxu0 0
        %5875 = vmatmul.mubr.bf16.gmra.mrb[0].mxu0 %v5623
        %v5876 = vpop.f32.mrb[0].mxu0
        %v5877 = vadd.f32 0.0, %v5876
        %v5878 = vpop.f32.mrb[0].mxu0
        %v5879 = vpop.f32.mrb[0].mxu0
        %v5880 = vadd.f32 0.0, %v5879
        %v5881 = vpop.f32.mrb[0].mxu0
        %5882 = vmatprep.mubr.bf16.mxu0 0
        %5883 = vmatmul.mubr.bf16.gmra.mrb[0].mxu0 %v5626
        %v5884 = vpop.f32.mrb[0].mxu0
        %v5885 = vadd.f32 0.0, %v5884
        %v5886 = vpop.f32.mrb[0].mxu0
        %v5887 = vpop.f32.mrb[0].mxu0
        %v5888 = vadd.f32 0.0, %v5887
        %v5889 = vpop.f32.mrb[0].mxu0
        %5890 = vmatprep.mubr.bf16.mxu0 0
        %5891 = vmatmul.mubr.bf16.gmra.mrb[0].mxu0 %v5629
        %v5892 = vpop.f32.mrb[0].mxu0
        %v5893 = vadd.f32 0.0, %v5892
        %v5894 = vpop.f32.mrb[0].mxu0
        %v5895 = vpop.f32.mrb[0].mxu0
        %v5896 = vadd.f32 0.0, %v5895
        %v5897 = vpop.f32.mrb[0].mxu0
        %5898 = vmatprep.mubr.bf16.mxu0 0
        %5899 = vmatmul.mubr.bf16.gmra.mrb[0].mxu0 %v5632
        %v5900 = vpop.f32.mrb[0].mxu0
        %v5901 = vadd.f32 0.0, %v5900
        %v5902 = vpop.f32.mrb[0].mxu0
        %v5903 = vpop.f32.mrb[0].mxu0
        %v5904 = vadd.f32 0.0, %v5903
        %v5905 = vpop.f32.mrb[0].mxu0
        %5906 = vmatprep.mubr.bf16.mxu0 0
        %5907 = vmatmul.mubr.bf16.gmra.mrb[0].mxu0 %v5635
        %v5908 = vpop.f32.mrb[0].mxu0
        %v5909 = vadd.f32 0.0, %v5908
        %v5910 = vpop.f32.mrb[0].mxu0
        %v5911 = vpop.f32.mrb[0].mxu0
        %v5912 = vadd.f32 0.0, %v5911
        %v5913 = vpop.f32.mrb[0].mxu0
        %5914 = vmatprep.mubr.bf16.mxu0 0
        %5915 = vmatmul.mubr.bf16.gmra.mrb[0].mxu0 %v5638
        %v5916 = vpop.f32.mrb[0].mxu0
        %v5917 = vadd.f32 0.0, %v5916
        %v5918 = vpop.f32.mrb[0].mxu0
        %v5919 = vpop.f32.mrb[0].mxu0
        %v5920 = vadd.f32 0.0, %v5919
        %v5921 = vpop.f32.mrb[0].mxu0
        %5922 = vmatprep.mubr.bf16.mxu0 0
        %5923 = vmatmul.mubr.bf16.gmra.mrb[0].mxu0 %v5641
        %v5924 = vpop.f32.mrb[0].mxu0
        %v5925 = vadd.f32 0.0, %v5924
        %v5926 = vpop.f32.mrb[0].mxu0
        %v5927 = vpop.f32.mrb[0].mxu0
        %v5928 = vadd.f32 0.0, %v5927
        %v5929 = vpop.f32.mrb[0].mxu0
        %5930 = vmatprep.mubr.bf16.mxu0 0
        %5931 = vmatmul.mubr.bf16.gmra.mrb[0].mxu0 %v5644
        %v5932 = vpop.f32.mrb[0].mxu0
        %v5933 = vadd.f32 0.0, %v5932
        %v5934 = vpop.f32.mrb[0].mxu0
        %v5935 = vpop.f32.mrb[0].mxu0
        %v5936 = vadd.f32 0.0, %v5935
        %v5937 = vpop.f32.mrb[0].mxu0
        %5938 = vmatprep.mubr.bf16.mxu0 0
        %5939 = vmatmul.mubr.bf16.gmra.mrb[0].mxu0 %v5647
        %v5940 = vpop.f32.mrb[0].mxu0
        %v5941 = vadd.f32 0.0, %v5940
        %v5942 = vpop.f32.mrb[0].mxu0
        %v5943 = vpop.f32.mrb[0].mxu0
        %v5944 = vadd.f32 0.0, %v5943
        %v5945 = vpop.f32.mrb[0].mxu0
        %5946 = vmatprep.mubr.bf16.mxu0 0
        %5947 = vmatmul.mubr.bf16.gmra.mrb[0].mxu0 %v5650
        %v5948 = vpop.f32.mrb[0].mxu0
        %v5949 = vadd.f32 0.0, %v5948
        %v5950 = vpop.f32.mrb[0].mxu0
        %v5951 = vpop.f32.mrb[0].mxu0
        %v5952 = vadd.f32 0.0, %v5951
        %v5953 = vpop.f32.mrb[0].mxu0
        %5954 = vmatprep.mubr.bf16.mxu0 0
        %5955 = vmatmul.mubr.bf16.gmra.mrb[0].mxu0 %v5653
        %v5956 = vpop.f32.mrb[0].mxu0
        %v5957 = vadd.f32 0.0, %v5956
        %v5958 = vpop.f32.mrb[0].mxu0
        %v5959 = vpop.f32.mrb[0].mxu0
        %v5960 = vadd.f32 0.0, %v5959
        %v5961 = vpop.f32.mrb[0].mxu0
        %5962 = vmatprep.mubr.bf16.mxu0 0
        %5963 = vmatmul.mubr.bf16.gmra.mrb[0].mxu0 %v5656
        %v5964 = vpop.f32.mrb[0].mxu0
        %v5965 = vadd.f32 0.0, %v5964
        %v5966 = vpop.f32.mrb[0].mxu0
        %v5967 = vpop.f32.mrb[0].mxu0
        %v5968 = vadd.f32 0.0, %v5967
        %v5969 = vpop.f32.mrb[0].mxu0
        %5970 = vmatprep.mubr.bf16.mxu0 0
        %5971 = vmatmul.mubr.bf16.gmra.mrb[0].mxu0 %v5659
        %v5972 = vpop.f32.mrb[0].mxu0
        %v5973 = vadd.f32 0.0, %v5972
        %v5974 = vpop.f32.mrb[0].mxu0
        %v5975 = vpop.f32.mrb[0].mxu0
        %v5976 = vadd.f32 0.0, %v5975
        %v5977 = vpop.f32.mrb[0].mxu0
        %5978 = vmatprep.mubr.bf16.mxu0 0
        %5979 = vmatmul.mubr.bf16.gmra.mrb[0].mxu0 %v5662
        %v5980 = vpop.f32.mrb[0].mxu0
        %v5981 = vadd.f32 0.0, %v5980
        %v5982 = vpop.f32.mrb[0].mxu0
        %v5983 = vpop.f32.mrb[0].mxu0
        %v5984 = vadd.f32 0.0, %v5983
        %v5985 = vpop.f32.mrb[0].mxu0
        %5986 = vmatprep.mubr.bf16.mxu0 0
        %5987 = vmatmul.mubr.bf16.gmra.mrb[0].mxu0 %v5665
        %v5988 = vpop.f32.mrb[0].mxu0
        %v5989 = vadd.f32 0.0, %v5988
        %v5990 = vpop.f32.mrb[0].mxu0
        %v5991 = vpop.f32.mrb[0].mxu0
        %v5992 = vadd.f32 0.0, %v5991
        %v5993 = vpop.f32.mrb[0].mxu0
        %5994 = vmatprep.mubr.bf16.mxu0 0
        %5995 = vmatmul.mubr.bf16.gmra.mrb[0].mxu0 %v5668
        %v5996 = vpop.f32.mrb[0].mxu0
        %v5997 = vadd.f32 0.0, %v5996
        %v5998 = vpop.f32.mrb[0].mxu0
        %v5999 = vpop.f32.mrb[0].mxu0
        %v6000 = vadd.f32 0.0, %v5999
        %v6001 = vpop.f32.mrb[0].mxu0
        %6002 = vmatprep.mubr.bf16.mxu0 0
        %6003 = vmatmul.mubr.bf16.gmra.mrb[0].mxu0 %v5671
        %v6004 = vpop.f32.mrb[0].mxu0
        %v6005 = vadd.f32 0.0, %v6004
        %v6006 = vpop.f32.mrb[0].mxu0
        %v6007 = vpop.f32.mrb[0].mxu0
        %v6008 = vadd.f32 0.0, %v6007
        %v6009 = vpop.f32.mrb[0].mxu0
        %6010 = vmatprep.mubr.bf16.mxu0 0
        %6011 = vmatmul.mubr.bf16.gmra.mrb[0].mxu0 %v5674
        %v6012 = vpop.f32.mrb[0].mxu0
        %v6013 = vadd.f32 0.0, %v6012
        %v6014 = vpop.f32.mrb[0].mxu0
        %v6015 = vpop.f32.mrb[0].mxu0
        %v6016 = vadd.f32 0.0, %v6015
        %v6017 = vpop.f32.mrb[0].mxu0
        %6018 = vmatprep.mubr.bf16.mxu0 0
        %6019 = vmatmul.mubr.bf16.gmra.mrb[0].mxu0 %v5677
        %v6020 = vpop.f32.mrb[0].mxu0
        %v6021 = vadd.f32 0.0, %v6020
        %v6022 = vpop.f32.mrb[0].mxu0
        %v6023 = vpop.f32.mrb[0].mxu0
        %v6024 = vadd.f32 0.0, %v6023
        %v6025 = vpop.f32.mrb[0].mxu0
        %6026 = vmatprep.mubr.bf16.mxu0 0
        %6027 = vmatmul.mubr.bf16.gmra.mrb[0].mxu0 %v5680
        %v6028 = vpop.f32.mrb[0].mxu0
        %v6029 = vadd.f32 0.0, %v6028
        %v6030 = vpop.f32.mrb[0].mxu0
        %v6031 = vpop.f32.mrb[0].mxu0
        %v6032 = vadd.f32 0.0, %v6031
        %v6033 = vpop.f32.mrb[0].mxu0
        %6034 = vmatprep.mubr.bf16.mxu0 0
        %6035 = vmatmul.mubr.bf16.gmra.mrb[0].mxu0 %v5683
        %v6036 = vpop.f32.mrb[0].mxu0
        %v6037 = vadd.f32 0.0, %v6036
        %v6038 = vpop.f32.mrb[0].mxu0
        %v6039 = vpop.f32.mrb[0].mxu0
        %v6040 = vadd.f32 0.0, %v6039
        %v6041 = vpop.f32.mrb[0].mxu0
        %6042 = vmatprep.mubr.bf16.mxu0 0
        %6043 = vmatmul.mubr.bf16.gmra.mrb[0].mxu0 %v5686
        %v6044 = vpop.f32.mrb[0].mxu0
        %v6045 = vadd.f32 0.0, %v6044
        %v6046 = vpop.f32.mrb[0].mxu0
        %v6047 = vpop.f32.mrb[0].mxu0
        %v6048 = vadd.f32 0.0, %v6047
        %v6049 = vpop.f32.mrb[0].mxu0
        %6050 = vmatprep.mubr.bf16.mxu0 0
        %6051 = vmatmul.mubr.bf16.gmra.mrb[0].mxu0 %v5689
        %v6052 = vpop.f32.mrb[0].mxu0
        %v6053 = vadd.f32 0.0, %v6052
        %v6054 = vpop.f32.mrb[0].mxu0
        %v6055 = vpop.f32.mrb[0].mxu0
        %v6056 = vadd.f32 0.0, %v6055
        %v6057 = vpop.f32.mrb[0].mxu0
        %6058 = vmatprep.mubr.bf16.mxu0 0
        %6059 = vmatmul.mubr.bf16.gmra.mrb[0].mxu0 %v5692
        %v6060 = vpop.f32.mrb[0].mxu0
        %v6061 = vadd.f32 0.0, %v6060
        %v6062 = vpop.f32.mrb[0].mxu0
        %v6063 = vpop.f32.mrb[0].mxu0
        %v6064 = vadd.f32 0.0, %v6063
        %v6065 = vpop.f32.mrb[0].mxu0
        %6066 = vmatprep.mubr.bf16.mxu0 0
        %6067 = vmatmul.mubr.bf16.gmra.mrb[0].mxu0 %v5695
        %v6068 = vpop.f32.mrb[0].mxu0
        %v6069 = vadd.f32 0.0, %v6068
        %v6070 = vpop.f32.mrb[0].mxu0
        %v6071 = vpop.f32.mrb[0].mxu0
        %v6072 = vadd.f32 0.0, %v6071
        %v6073 = vpop.f32.mrb[0].mxu0
        %6074 = vmatprep.mubr.bf16.mxu0 0
        %6075 = vmatmul.mubr.bf16.gmra.mrb[0].mxu0 %v5698
        %v6076 = vpop.f32.mrb[0].mxu0
        %v6077 = vadd.f32 0.0, %v6076
        %v6078 = vpop.f32.mrb[0].mxu0
        %v6079 = vpop.f32.mrb[0].mxu0
        %v6080 = vadd.f32 0.0, %v6079
        %v6081 = vpop.f32.mrb[0].mxu0
        %6082 = vmatprep.mubr.bf16.mxu0 0
        %6083 = vmatmul.mubr.bf16.gmra.mrb[0].mxu0 %v5701
        %v6084 = vpop.f32.mrb[0].mxu0
        %v6085 = vadd.f32 0.0, %v6084
        %v6086 = vpop.f32.mrb[0].mxu0
        %v6087 = vpop.f32.mrb[0].mxu0
        %v6088 = vadd.f32 0.0, %v6087
        %v6089 = vpop.f32.mrb[0].mxu0
        %6090 = vmatprep.mubr.bf16.mxu0 0
        %6091 = vmatmul.mubr.bf16.gmra.mrb[0].mxu0 %v5704
        %v6092 = vpop.f32.mrb[0].mxu0
        %v6093 = vadd.f32 0.0, %v6092
        %v6094 = vpop.f32.mrb[0].mxu0
        %v6095 = vpop.f32.mrb[0].mxu0
        %v6096 = vadd.f32 0.0, %v6095
        %v6097 = vpop.f32.mrb[0].mxu0
        %6098 = vmatprep.mubr.bf16.mxu0 0
        %6099 = vmatmul.mubr.bf16.gmra.mrb[0].mxu0 %v5707
        %v6100 = vpop.f32.mrb[0].mxu0
        %v6101 = vadd.f32 0.0, %v6100
        %v6102 = vpop.f32.mrb[0].mxu0
        %v6103 = vpop.f32.mrb[0].mxu0
        %v6104 = vadd.f32 0.0, %v6103
        %v6105 = vpop.f32.mrb[0].mxu0
        %6106 = vmatprep.mubr.bf16.mxu0 0
        %6107 = vmatmul.mubr.bf16.gmra.mrb[0].mxu0 %v5710
        %v6108 = vpop.f32.mrb[0].mxu0
        %v6109 = vadd.f32 0.0, %v6108
        %v6110 = vpop.f32.mrb[0].mxu0
        %v6111 = vpop.f32.mrb[0].mxu0
        %v6112 = vadd.f32 0.0, %v6111
        %v6113 = vpop.f32.mrb[0].mxu0
        %6114 = vmatprep.mubr.bf16.mxu0 0
        %6115 = vmatmul.mubr.bf16.gmra.mrb[0].mxu0 %v5713
        %v6116 = vpop.f32.mrb[0].mxu0
        %v6117 = vadd.f32 0.0, %v6116
        %v6118 = vpop.f32.mrb[0].mxu0
        %v6119 = vpop.f32.mrb[0].mxu0
        %v6120 = vadd.f32 0.0, %v6119
        %v6121 = vpop.f32.mrb[0].mxu0
        %6122 = vmatprep.mubr.bf16.mxu0 0
        %6123 = vmatmul.mubr.bf16.gmra.mrb[0].mxu0 %v5716
        %v6124 = vpop.f32.mrb[0].mxu0
        %v6125 = vadd.f32 0.0, %v6124
        %v6126 = vpop.f32.mrb[0].mxu0
        %v6127 = vpop.f32.mrb[0].mxu0
        %v6128 = vadd.f32 0.0, %v6127
        %v6129 = vpop.f32.mrb[0].mxu0
        %6130 = vmatprep.mubr.bf16.mxu0 0
        %6131 = vmatmul.mubr.bf16.gmra.mrb[0].mxu0 %v5719
        %v6132 = vpop.f32.mrb[0].mxu0
        %v6133 = vadd.f32 0.0, %v6132
        %v6134 = vpop.f32.mrb[0].mxu0
        %v6135 = vpop.f32.mrb[0].mxu0
        %v6136 = vadd.f32 0.0, %v6135
        %v6137 = vpop.f32.mrb[0].mxu0
        %6138 = vmatprep.mubr.bf16.mxu0 0
        %6139 = vmatmul.mubr.bf16.gmra.mrb[0].mxu0 %v5722
        %v6140 = vpop.f32.mrb[0].mxu0
        %v6141 = vadd.f32 0.0, %v6140
        %v6142 = vpop.f32.mrb[0].mxu0
        %v6143 = vpop.f32.mrb[0].mxu0
        %v6144 = vadd.f32 0.0, %v6143
        %v6145 = vpop.f32.mrb[0].mxu0
        %6146 = vmatprep.mubr.bf16.mxu0 0
        %6147 = vmatmul.mubr.bf16.gmra.mrb[0].mxu0 %v5725
        %v6148 = vpop.f32.mrb[0].mxu0
        %v6149 = vadd.f32 0.0, %v6148
        %v6150 = vpop.f32.mrb[0].mxu0
        %v6151 = vpop.f32.mrb[0].mxu0
        %v6152 = vadd.f32 0.0, %v6151
        %v6153 = vpop.f32.mrb[0].mxu0
        %6154 = vmatprep.mubr.bf16.mxu0 0
        %6155 = vmatmul.mubr.bf16.gmra.mrb[0].mxu0 %v5728
        %v6156 = vpop.f32.mrb[0].mxu0
        %v6157 = vadd.f32 0.0, %v6156
        %v6158 = vpop.f32.mrb[0].mxu0
        %v6159 = vpop.f32.mrb[0].mxu0
        %v6160 = vadd.f32 0.0, %v6159
        %v6161 = vpop.f32.mrb[0].mxu0
        %6162 = vmatprep.mubr.bf16.mxu0 0
        %6163 = vmatmul.mubr.bf16.gmra.mrb[0].mxu0 %v5731
        %v6164 = vpop.f32.mrb[0].mxu0
        %v6165 = vadd.f32 0.0, %v6164
        %v6166 = vpop.f32.mrb[0].mxu0
        %v6167 = vpop.f32.mrb[0].mxu0
        %v6168 = vadd.f32 0.0, %v6167
        %v6169 = vpop.f32.mrb[0].mxu0
        %6170 = vmatprep.mubr.bf16.mxu0 0
        %6171 = vmatmul.mubr.bf16.gmra.mrb[0].mxu0 %v5734
        %v6172 = vpop.f32.mrb[0].mxu0
        %v6173 = vadd.f32 0.0, %v6172
        %v6174 = vpop.f32.mrb[0].mxu0
        %v6175 = vpop.f32.mrb[0].mxu0
        %v6176 = vadd.f32 0.0, %v6175
        %v6177 = vpop.f32.mrb[0].mxu0
        %6178 = vmatprep.mubr.bf16.mxu0 0
        %6179 = vmatmul.mubr.bf16.gmra.mrb[0].mxu0 %v5737
        %v6180 = vpop.f32.mrb[0].mxu0
        %v6181 = vadd.f32 0.0, %v6180
        %v6182 = vpop.f32.mrb[0].mxu0
        %v6183 = vpop.f32.mrb[0].mxu0
        %v6184 = vadd.f32 0.0, %v6183
        %v6185 = vpop.f32.mrb[0].mxu0
        %6186 = vmatprep.mubr.bf16.mxu0 0
        %6187 = vmatmul.mubr.bf16.gmra.mrb[0].mxu0 %v5740
        %v6188 = vpop.f32.mrb[0].mxu0
        %v6189 = vadd.f32 0.0, %v6188
        %v6190 = vpop.f32.mrb[0].mxu0
        %v6191 = vpop.f32.mrb[0].mxu0
        %v6192 = vadd.f32 0.0, %v6191
        %v6193 = vpop.f32.mrb[0].mxu0
        %6194 = vmatprep.mubr.bf16.mxu0 0
        %6195 = vmatmul.mubr.bf16.gmra.mrb[0].mxu0 %v5743
        %v6196 = vpop.f32.mrb[0].mxu0
        %v6197 = vadd.f32 0.0, %v6196
        %v6198 = vpop.f32.mrb[0].mxu0
        %v6199 = vpop.f32.mrb[0].mxu0
        %v6200 = vadd.f32 0.0, %v6199
        %v6201 = vpop.f32.mrb[0].mxu0
        %6202 = vmatprep.mubr.bf16.mxu0 0
        %6203 = vmatmul.mubr.bf16.gmra.mrb[0].mxu0 %v5746
        %v6204 = vpop.f32.mrb[0].mxu0
        %v6205 = vadd.f32 0.0, %v6204
        %v6206 = vpop.f32.mrb[0].mxu0
        %v6207 = vpop.f32.mrb[0].mxu0
        %v6208 = vadd.f32 0.0, %v6207
        %v6209 = vpop.f32.mrb[0].mxu0
        %6210 = vmatprep.mubr.bf16.mxu0 0
        %6211 = vmatmul.mubr.bf16.gmra.mrb[0].mxu0 %v5749
        %v6212 = vpop.f32.mrb[0].mxu0
        %v6213 = vadd.f32 0.0, %v6212
        %v6214 = vpop.f32.mrb[0].mxu0
        %v6215 = vpop.f32.mrb[0].mxu0
        %v6216 = vadd.f32 0.0, %v6215
        %v6217 = vpop.f32.mrb[0].mxu0
        %6218 = vmatprep.mubr.bf16.mxu0 0
        %6219 = vmatmul.mubr.bf16.gmra.mrb[0].mxu0 %v5752
        %v6220 = vpop.f32.mrb[0].mxu0
        %v6221 = vadd.f32 0.0, %v6220
        %v6222 = vpop.f32.mrb[0].mxu0
        %v6223 = vpop.f32.mrb[0].mxu0
        %v6224 = vadd.f32 0.0, %v6223
        %v6225 = vpop.f32.mrb[0].mxu0
        %6226 = vmatprep.mubr.bf16.mxu0 0
        %6227 = vmatmul.mubr.bf16.gmra.mrb[0].mxu0 %v5755
        %v6228 = vpop.f32.mrb[0].mxu0
        %v6229 = vadd.f32 0.0, %v6228
        %v6230 = vpop.f32.mrb[0].mxu0
        %v6231 = vpop.f32.mrb[0].mxu0
        %v6232 = vadd.f32 0.0, %v6231
        %v6233 = vpop.f32.mrb[0].mxu0
        %6234 = vmatprep.mubr.bf16.mxu0 0
        %6235 = vmatmul.mubr.bf16.gmra.mrb[0].mxu0 %v5758
        %v6236 = vpop.f32.mrb[0].mxu0
        %v6237 = vadd.f32 0.0, %v6236
        %v6238 = vpop.f32.mrb[0].mxu0
        %v6239 = vpop.f32.mrb[0].mxu0
        %v6240 = vadd.f32 0.0, %v6239
        %v6241 = vpop.f32.mrb[0].mxu0
        %6242 = vmatprep.mubr.bf16.mxu0 0
        %6243 = vmatmul.mubr.bf16.gmra.mrb[0].mxu0 %v5761
        %v6244 = vpop.f32.mrb[0].mxu0
        %v6245 = vadd.f32 0.0, %v6244
        %v6246 = vpop.f32.mrb[0].mxu0
        %v6247 = vpop.f32.mrb[0].mxu0
        %v6248 = vadd.f32 0.0, %v6247
        %v6249 = vpop.f32.mrb[0].mxu0
        %6250 = vmatprep.mubr.bf16.mxu0 0
        %6251 = vmatmul.mubr.bf16.gmra.mrb[0].mxu0 %v5764
        %v6252 = vpop.f32.mrb[0].mxu0
        %v6253 = vadd.f32 0.0, %v6252
        %v6254 = vpop.f32.mrb[0].mxu0
        %v6255 = vpop.f32.mrb[0].mxu0
        %v6256 = vadd.f32 0.0, %v6255
        %v6257 = vpop.f32.mrb[0].mxu0
        %6258 = vmatprep.mubr.bf16.mxu0 0
        %6259 = vmatmul.mubr.bf16.gmra.mrb[0].mxu0 %v5767
        %v6260 = vpop.f32.mrb[0].mxu0
        %v6261 = vadd.f32 0.0, %v6260
        %v6262 = vpop.f32.mrb[0].mxu0
        %v6263 = vpop.f32.mrb[0].mxu0
        %v6264 = vadd.f32 0.0, %v6263
        %v6265 = vpop.f32.mrb[0].mxu0
        %6266 = vmatprep.mubr.bf16.mxu0 0
        %6267 = vmatmul.mubr.bf16.gmra.mrb[0].mxu0 %v5770
        %v6268 = vpop.f32.mrb[0].mxu0
        %v6269 = vadd.f32 0.0, %v6268
        %v6270 = vpop.f32.mrb[0].mxu0
        %v6271 = vpop.f32.mrb[0].mxu0
        %v6272 = vadd.f32 0.0, %v6271
        %v6273 = vpop.f32.mrb[0].mxu0
        %6274 = vmatprep.mubr.bf16.mxu0 0
        %6275 = vmatmul.mubr.bf16.gmra.mrb[0].mxu0 %v5773
        %v6276 = vpop.f32.mrb[0].mxu0
        %v6277 = vadd.f32 0.0, %v6276
        %v6278 = vpop.f32.mrb[0].mxu0
        %v6279 = vpop.f32.mrb[0].mxu0
        %v6280 = vadd.f32 0.0, %v6279
        %v6281 = vpop.f32.mrb[0].mxu0
        %6282 = vmatprep.mubr.bf16.mxu0 0
        %6283 = vmatmul.mubr.bf16.gmra.mrb[0].mxu0 %v5776
        %v6284 = vpop.f32.mrb[0].mxu0
        %v6285 = vadd.f32 0.0, %v6284
        %v6286 = vpop.f32.mrb[0].mxu0
        %v6287 = vpop.f32.mrb[0].mxu0
        %v6288 = vadd.f32 0.0, %v6287
        %v6289 = vpop.f32.mrb[0].mxu0
        %6290 = vmatprep.mubr.bf16.mxu0 0
        %6291 = vmatmul.mubr.bf16.gmra.mrb[0].mxu0 %v5779
        %v6292 = vpop.f32.mrb[0].mxu0
        %v6293 = vadd.f32 0.0, %v6292
        %v6294 = vpop.f32.mrb[0].mxu0
        %v6295 = vpop.f32.mrb[0].mxu0
        %v6296 = vadd.f32 0.0, %v6295
        %v6297 = vpop.f32.mrb[0].mxu0
        %6298 = vmatprep.mubr.bf16.mxu0 0
        %6299 = vmatmul.mubr.bf16.gmra.mrb[0].mxu0 %v5782
        %v6300 = vpop.f32.mrb[0].mxu0
        %v6301 = vadd.f32 0.0, %v6300
        %v6302 = vpop.f32.mrb[0].mxu0
        %v6303 = vpop.f32.mrb[0].mxu0
        %v6304 = vadd.f32 0.0, %v6303
        %v6305 = vpop.f32.mrb[0].mxu0
        %6306 = vmatprep.mubr.bf16.mxu0 0
        %6307 = vmatmul.mubr.bf16.gmra.mrb[0].mxu0 %v5785
        %v6308 = vpop.f32.mrb[0].mxu0
        %v6309 = vadd.f32 0.0, %v6308
        %v6310 = vpop.f32.mrb[0].mxu0
        %v6311 = vpop.f32.mrb[0].mxu0
        %v6312 = vadd.f32 0.0, %v6311
        %v6313 = vpop.f32.mrb[0].mxu0
        %6314 = vmatprep.mubr.bf16.mxu0 0
        %6315 = vmatmul.mubr.bf16.gmra.mrb[0].mxu0 %v5788
        %v6316 = vpop.f32.mrb[0].mxu0
        %v6317 = vadd.f32 0.0, %v6316
        %v6318 = vpop.f32.mrb[0].mxu0
        %v6319 = vpop.f32.mrb[0].mxu0
        %v6320 = vadd.f32 0.0, %v6319
        %v6321 = vpop.f32.mrb[0].mxu0
        %6322 = vmatprep.mubr.bf16.mxu0 0
        %6323 = vmatmul.mubr.bf16.gmra.mrb[0].mxu0 %v5791
        %v6324 = vpop.f32.mrb[0].mxu0
        %v6325 = vadd.f32 0.0, %v6324
        %v6326 = vpop.f32.mrb[0].mxu0
        %v6327 = vpop.f32.mrb[0].mxu0
        %v6328 = vadd.f32 0.0, %v6327
        %v6329 = vpop.f32.mrb[0].mxu0
        %6330 = vmatprep.mubr.bf16.mxu0 0
        %6331 = vmatmul.mubr.bf16.gmra.mrb[0].mxu0 %v5794
        %v6332 = vpop.f32.mrb[0].mxu0
        %v6333 = vadd.f32 0.0, %v6332
        %v6334 = vpop.f32.mrb[0].mxu0
        %v6335 = vpop.f32.mrb[0].mxu0
        %v6336 = vadd.f32 0.0, %v6335
        %v6337 = vpop.f32.mrb[0].mxu0
        %6338 = vmatprep.mubr.bf16.mxu0 0
        %6339 = vmatmul.mubr.bf16.gmra.mrb[0].mxu0 %v5797
        %v6340 = vpop.f32.mrb[0].mxu0
        %v6341 = vadd.f32 0.0, %v6340
        %v6342 = vpop.f32.mrb[0].mxu0
        %v6343 = vpop.f32.mrb[0].mxu0
        %v6344 = vadd.f32 0.0, %v6343
        %v6345 = vpop.f32.mrb[0].mxu0
        %6346 = vdwg.mxu0
        %v6347 = vadd.f32 %v4254, %v5837
        %v6348 = vadd.f32 %v4257, %v5840
        %v6349 = vadd.f32 %v4262, %v5845
        %v6350 = vadd.f32 %v4265, %v5848
        %v6351 = vadd.f32 %v4270, %v5853
        %v6352 = vadd.f32 %v4273, %v5856
        %v6353 = vadd.f32 %v4278, %v5861
        %v6354 = vadd.f32 %v4281, %v5864
        %v6355 = vadd.f32 %v4286, %v5869
        %v6356 = vadd.f32 %v4289, %v5872
        %v6357 = vadd.f32 %v4294, %v5877
        %v6358 = vadd.f32 %v4297, %v5880
        %v6359 = vadd.f32 %v4302, %v5885
        %v6360 = vadd.f32 %v4305, %v5888
        %v6361 = vadd.f32 %v4310, %v5893
        %v6362 = vadd.f32 %v4313, %v5896
        %v6363 = vadd.f32 %v4318, %v5901
        %v6364 = vadd.f32 %v4321, %v5904
        %v6365 = vadd.f32 %v4326, %v5909
        %v6366 = vadd.f32 %v4329, %v5912
        %v6367 = vadd.f32 %v4334, %v5917
        %v6368 = vadd.f32 %v4337, %v5920
        %v6369 = vadd.f32 %v4342, %v5925
        %v6370 = vadd.f32 %v4345, %v5928
        %v6371 = vadd.f32 %v4350, %v5933
        %v6372 = vadd.f32 %v4353, %v5936
        %v6373 = vadd.f32 %v4358, %v5941
        %v6374 = vadd.f32 %v4361, %v5944
        %v6375 = vadd.f32 %v4366, %v5949
        %v6376 = vadd.f32 %v4369, %v5952
        %v6377 = vadd.f32 %v4374, %v5957
        %v6378 = vadd.f32 %v4377, %v5960
        %v6379 = vadd.f32 %v4382, %v5965
        %v6380 = vadd.f32 %v4385, %v5968
        %v6381 = vadd.f32 %v4390, %v5973
        %v6382 = vadd.f32 %v4393, %v5976
        %v6383 = vadd.f32 %v4398, %v5981
        %v6384 = vadd.f32 %v4401, %v5984
        %v6385 = vadd.f32 %v4406, %v5989
        %v6386 = vadd.f32 %v4409, %v5992
        %v6387 = vadd.f32 %v4414, %v5997
        %v6388 = vadd.f32 %v4417, %v6000
        %v6389 = vadd.f32 %v4422, %v6005
        %v6390 = vadd.f32 %v4425, %v6008
        %v6391 = vadd.f32 %v4430, %v6013
        %v6392 = vadd.f32 %v4433, %v6016
        %v6393 = vadd.f32 %v4438, %v6021
        %v6394 = vadd.f32 %v4441, %v6024
        %v6395 = vadd.f32 %v4446, %v6029
        %v6396 = vadd.f32 %v4449, %v6032
        %v6397 = vadd.f32 %v4454, %v6037
        %v6398 = vadd.f32 %v4457, %v6040
        %v6399 = vadd.f32 %v4462, %v6045
        %v6400 = vadd.f32 %v4465, %v6048
        %v6401 = vadd.f32 %v4470, %v6053
        %v6402 = vadd.f32 %v4473, %v6056
        %v6403 = vadd.f32 %v4478, %v6061
        %v6404 = vadd.f32 %v4481, %v6064
        %v6405 = vadd.f32 %v4486, %v6069
        %v6406 = vadd.f32 %v4489, %v6072
        %v6407 = vadd.f32 %v4494, %v6077
        %v6408 = vadd.f32 %v4497, %v6080
        %v6409 = vadd.f32 %v4502, %v6085
        %v6410 = vadd.f32 %v4505, %v6088
        %v6411 = vadd.f32 %v4510, %v6093
        %v6412 = vadd.f32 %v4513, %v6096
        %v6413 = vadd.f32 %v4518, %v6101
        %v6414 = vadd.f32 %v4521, %v6104
        %v6415 = vadd.f32 %v4526, %v6109
        %v6416 = vadd.f32 %v4529, %v6112
        %v6417 = vadd.f32 %v4534, %v6117
        %v6418 = vadd.f32 %v4537, %v6120
        %v6419 = vadd.f32 %v4542, %v6125
        %v6420 = vadd.f32 %v4545, %v6128
        %v6421 = vadd.f32 %v4550, %v6133
        %v6422 = vadd.f32 %v4553, %v6136
        %v6423 = vadd.f32 %v4558, %v6141
        %v6424 = vadd.f32 %v4561, %v6144
        %v6425 = vadd.f32 %v4566, %v6149
        %v6426 = vadd.f32 %v4569, %v6152
        %v6427 = vadd.f32 %v4574, %v6157
        %v6428 = vadd.f32 %v4577, %v6160
        %v6429 = vadd.f32 %v4582, %v6165
        %v6430 = vadd.f32 %v4585, %v6168
        %v6431 = vadd.f32 %v4590, %v6173
        %v6432 = vadd.f32 %v4593, %v6176
        %v6433 = vadd.f32 %v4598, %v6181
        %v6434 = vadd.f32 %v4601, %v6184
        %v6435 = vadd.f32 %v4606, %v6189
        %v6436 = vadd.f32 %v4609, %v6192
        %v6437 = vadd.f32 %v4614, %v6197
        %v6438 = vadd.f32 %v4617, %v6200
        %v6439 = vadd.f32 %v4622, %v6205
        %v6440 = vadd.f32 %v4625, %v6208
        %v6441 = vadd.f32 %v4630, %v6213
        %v6442 = vadd.f32 %v4633, %v6216
        %v6443 = vadd.f32 %v4638, %v6221
        %v6444 = vadd.f32 %v4641, %v6224
        %v6445 = vadd.f32 %v4646, %v6229
        %v6446 = vadd.f32 %v4649, %v6232
        %v6447 = vadd.f32 %v4654, %v6237
        %v6448 = vadd.f32 %v4657, %v6240
        %v6449 = vadd.f32 %v4662, %v6245
        %v6450 = vadd.f32 %v4665, %v6248
        %v6451 = vadd.f32 %v4670, %v6253
        %v6452 = vadd.f32 %v4673, %v6256
        %v6453 = vadd.f32 %v4678, %v6261
        %v6454 = vadd.f32 %v4681, %v6264
        %v6455 = vadd.f32 %v4686, %v6269
        %v6456 = vadd.f32 %v4689, %v6272
        %v6457 = vadd.f32 %v4694, %v6277
        %v6458 = vadd.f32 %v4697, %v6280
        %v6459 = vadd.f32 %v4702, %v6285
        %v6460 = vadd.f32 %v4705, %v6288
        %v6461 = vadd.f32 %v4710, %v6293
        %v6462 = vadd.f32 %v4713, %v6296
        %v6463 = vadd.f32 %v4718, %v6301
        %v6464 = vadd.f32 %v4721, %v6304
        %v6465 = vadd.f32 %v4726, %v6309
        %v6466 = vadd.f32 %v4729, %v6312
        %v6467 = vadd.f32 %v4734, %v6317
        %v6468 = vadd.f32 %v4737, %v6320
        %v6469 = vadd.f32 %v4742, %v6325
        %v6470 = vadd.f32 %v4745, %v6328
        %v6471 = vadd.f32 %v4750, %v6333
        %v6472 = vadd.f32 %v4753, %v6336
        %v6473 = vadd.f32 %v4758, %v6341
        %v6474 = vadd.f32 %v4761, %v6344
        %v6475 = vmax.f32 %v6347, 0.0
        %v6476 = vmax.f32 %v6348, 0.0
        %v6477 = vmax.f32 %v6349, 0.0
        %v6478 = vmax.f32 %v6350, 0.0
        %v6479 = vmax.f32 %v6351, 0.0
        %v6480 = vmax.f32 %v6352, 0.0
        %v6481 = vmax.f32 %v6353, 0.0
        %v6482 = vmax.f32 %v6354, 0.0
        %v6483 = vmax.f32 %v6355, 0.0
        %v6484 = vmax.f32 %v6356, 0.0
        %v6485 = vmax.f32 %v6357, 0.0
        %v6486 = vmax.f32 %v6358, 0.0
        %v6487 = vmax.f32 %v6359, 0.0
        %v6488 = vmax.f32 %v6360, 0.0
        %v6489 = vmax.f32 %v6361, 0.0
        %v6490 = vmax.f32 %v6362, 0.0
        %v6491 = vmax.f32 %v6363, 0.0
        %v6492 = vmax.f32 %v6364, 0.0
        %v6493 = vmax.f32 %v6365, 0.0
        %v6494 = vmax.f32 %v6366, 0.0
        %v6495 = vmax.f32 %v6367, 0.0
        %v6496 = vmax.f32 %v6368, 0.0
        %v6497 = vmax.f32 %v6369, 0.0
        %v6498 = vmax.f32 %v6370, 0.0
        %v6499 = vmax.f32 %v6371, 0.0
        %v6500 = vmax.f32 %v6372, 0.0
        %v6501 = vmax.f32 %v6373, 0.0
        %v6502 = vmax.f32 %v6374, 0.0
        %v6503 = vmax.f32 %v6375, 0.0
        %v6504 = vmax.f32 %v6376, 0.0
        %v6505 = vmax.f32 %v6377, 0.0
        %v6506 = vmax.f32 %v6378, 0.0
        %v6507 = vmax.f32 %v6379, 0.0
        %v6508 = vmax.f32 %v6380, 0.0
        %v6509 = vmax.f32 %v6381, 0.0
        %v6510 = vmax.f32 %v6382, 0.0
        %v6511 = vmax.f32 %v6383, 0.0
        %v6512 = vmax.f32 %v6384, 0.0
        %v6513 = vmax.f32 %v6385, 0.0
        %v6514 = vmax.f32 %v6386, 0.0
        %v6515 = vmax.f32 %v6387, 0.0
        %v6516 = vmax.f32 %v6388, 0.0
        %v6517 = vmax.f32 %v6389, 0.0
        %v6518 = vmax.f32 %v6390, 0.0
        %v6519 = vmax.f32 %v6391, 0.0
        %v6520 = vmax.f32 %v6392, 0.0
        %v6521 = vmax.f32 %v6393, 0.0
        %v6522 = vmax.f32 %v6394, 0.0
        %v6523 = vmax.f32 %v6395, 0.0
        %v6524 = vmax.f32 %v6396, 0.0
        %v6525 = vmax.f32 %v6397, 0.0
        %v6526 = vmax.f32 %v6398, 0.0
        %v6527 = vmax.f32 %v6399, 0.0
        %v6528 = vmax.f32 %v6400, 0.0
        %v6529 = vmax.f32 %v6401, 0.0
        %v6530 = vmax.f32 %v6402, 0.0
        %v6531 = vmax.f32 %v6403, 0.0
        %v6532 = vmax.f32 %v6404, 0.0
        %v6533 = vmax.f32 %v6405, 0.0
        %v6534 = vmax.f32 %v6406, 0.0
        %v6535 = vmax.f32 %v6407, 0.0
        %v6536 = vmax.f32 %v6408, 0.0
        %v6537 = vmax.f32 %v6409, 0.0
        %v6538 = vmax.f32 %v6410, 0.0
        %v6539 = vmax.f32 %v6411, 0.0
        %v6540 = vmax.f32 %v6412, 0.0
        %v6541 = vmax.f32 %v6413, 0.0
        %v6542 = vmax.f32 %v6414, 0.0
        %v6543 = vmax.f32 %v6415, 0.0
        %v6544 = vmax.f32 %v6416, 0.0
        %v6545 = vmax.f32 %v6417, 0.0
        %v6546 = vmax.f32 %v6418, 0.0
        %v6547 = vmax.f32 %v6419, 0.0
        %v6548 = vmax.f32 %v6420, 0.0
        %v6549 = vmax.f32 %v6421, 0.0
        %v6550 = vmax.f32 %v6422, 0.0
        %v6551 = vmax.f32 %v6423, 0.0
        %v6552 = vmax.f32 %v6424, 0.0
        %v6553 = vmax.f32 %v6425, 0.0
        %v6554 = vmax.f32 %v6426, 0.0
        %v6555 = vmax.f32 %v6427, 0.0
        %v6556 = vmax.f32 %v6428, 0.0
        %v6557 = vmax.f32 %v6429, 0.0
        %v6558 = vmax.f32 %v6430, 0.0
        %v6559 = vmax.f32 %v6431, 0.0
        %v6560 = vmax.f32 %v6432, 0.0
        %v6561 = vmax.f32 %v6433, 0.0
        %v6562 = vmax.f32 %v6434, 0.0
        %v6563 = vmax.f32 %v6435, 0.0
        %v6564 = vmax.f32 %v6436, 0.0
        %v6565 = vmax.f32 %v6437, 0.0
        %v6566 = vmax.f32 %v6438, 0.0
        %v6567 = vmax.f32 %v6439, 0.0
        %v6568 = vmax.f32 %v6440, 0.0
        %v6569 = vmax.f32 %v6441, 0.0
        %v6570 = vmax.f32 %v6442, 0.0
        %v6571 = vmax.f32 %v6443, 0.0
        %v6572 = vmax.f32 %v6444, 0.0
        %v6573 = vmax.f32 %v6445, 0.0
        %v6574 = vmax.f32 %v6446, 0.0
        %v6575 = vmax.f32 %v6447, 0.0
        %v6576 = vmax.f32 %v6448, 0.0
        %v6577 = vmax.f32 %v6449, 0.0
        %v6578 = vmax.f32 %v6450, 0.0
        %v6579 = vmax.f32 %v6451, 0.0
        %v6580 = vmax.f32 %v6452, 0.0
        %v6581 = vmax.f32 %v6453, 0.0
        %v6582 = vmax.f32 %v6454, 0.0
        %v6583 = vmax.f32 %v6455, 0.0
        %v6584 = vmax.f32 %v6456, 0.0
        %v6585 = vmax.f32 %v6457, 0.0
        %v6586 = vmax.f32 %v6458, 0.0
        %v6587 = vmax.f32 %v6459, 0.0
        %v6588 = vmax.f32 %v6460, 0.0
        %v6589 = vmax.f32 %v6461, 0.0
        %v6590 = vmax.f32 %v6462, 0.0
        %v6591 = vmax.f32 %v6463, 0.0
        %v6592 = vmax.f32 %v6464, 0.0
        %v6593 = vmax.f32 %v6465, 0.0
        %v6594 = vmax.f32 %v6466, 0.0
        %v6595 = vmax.f32 %v6467, 0.0
        %v6596 = vmax.f32 %v6468, 0.0
        %v6597 = vmax.f32 %v6469, 0.0
        %v6598 = vmax.f32 %v6470, 0.0
        %v6599 = vmax.f32 %v6471, 0.0
        %v6600 = vmax.f32 %v6472, 0.0
        %v6601 = vmax.f32 %v6473, 0.0
        %v6602 = vmax.f32 %v6474, 0.0
        %v6603 = vld [vmem:[#allocation2] sm:$0xff]
        %v6604 = vadd.f32 %v6475, %v6476
        %v6605 = vadd.f32 %v6604, %v6477
        %v6606 = vadd.f32 %v6605, %v6478
        %v6607 = vadd.f32 %v6606, %v6479
        %v6608 = vadd.f32 %v6607, %v6480
        %v6609 = vadd.f32 %v6608, %v6481
        %v6610 = vadd.f32 %v6609, %v6482
        %v6611 = vadd.f32 %v6610, %v6483
        %v6612 = vadd.f32 %v6611, %v6484
        %v6613 = vadd.f32 %v6612, %v6485
        %v6614 = vadd.f32 %v6613, %v6486
        %v6615 = vadd.f32 %v6614, %v6487
        %v6616 = vadd.f32 %v6615, %v6488
        %v6617 = vadd.f32 %v6616, %v6489
        %v6618 = vadd.f32 %v6617, %v6490
        %v6619 = vrot.slane %v6618, 4
        %v6620 = vadd.f32 %v6618, %v6619
        %v6621 = vrot.slane %v6620, 2
        %v6622 = vadd.f32 %v6620, %v6621
        %v6623 = vrot.slane %v6622, 1
        %v6624 = vadd.f32 %v6622, %v6623
        %v6625 = vadd.f32 %v6491, %v6492
        %v6626 = vadd.f32 %v6625, %v6493
        %v6627 = vadd.f32 %v6626, %v6494
        %v6628 = vadd.f32 %v6627, %v6495
        %v6629 = vadd.f32 %v6628, %v6496
        %v6630 = vadd.f32 %v6629, %v6497
        %v6631 = vadd.f32 %v6630, %v6498
        %v6632 = vadd.f32 %v6631, %v6499
        %v6633 = vadd.f32 %v6632, %v6500
        %v6634 = vadd.f32 %v6633, %v6501
        %v6635 = vadd.f32 %v6634, %v6502
        %v6636 = vadd.f32 %v6635, %v6503
        %v6637 = vadd.f32 %v6636, %v6504
        %v6638 = vadd.f32 %v6637, %v6505
        %v6639 = vadd.f32 %v6638, %v6506
        %v6640 = vrot.slane %v6639, 4
        %v6641 = vadd.f32 %v6639, %v6640
        %v6642 = vrot.slane %v6641, 2
        %v6643 = vadd.f32 %v6641, %v6642
        %v6644 = vrot.slane %v6643, 1
        %v6645 = vadd.f32 %v6643, %v6644
        %v6646 = vadd.f32 %v6507, %v6508
        %v6647 = vadd.f32 %v6646, %v6509
        %v6648 = vadd.f32 %v6647, %v6510
        %v6649 = vadd.f32 %v6648, %v6511
        %v6650 = vadd.f32 %v6649, %v6512
        %v6651 = vadd.f32 %v6650, %v6513
        %v6652 = vadd.f32 %v6651, %v6514
        %v6653 = vadd.f32 %v6652, %v6515
        %v6654 = vadd.f32 %v6653, %v6516
        %v6655 = vadd.f32 %v6654, %v6517
        %v6656 = vadd.f32 %v6655, %v6518
        %v6657 = vadd.f32 %v6656, %v6519
        %v6658 = vadd.f32 %v6657, %v6520
        %v6659 = vadd.f32 %v6658, %v6521
        %v6660 = vadd.f32 %v6659, %v6522
        %v6661 = vrot.slane %v6660, 4
        %v6662 = vadd.f32 %v6660, %v6661
        %v6663 = vrot.slane %v6662, 2
        %v6664 = vadd.f32 %v6662, %v6663
        %v6665 = vrot.slane %v6664, 1
        %v6666 = vadd.f32 %v6664, %v6665
        %v6667 = vadd.f32 %v6523, %v6524
        %v6668 = vadd.f32 %v6667, %v6525
        %v6669 = vadd.f32 %v6668, %v6526
        %v6670 = vadd.f32 %v6669, %v6527
        %v6671 = vadd.f32 %v6670, %v6528
        %v6672 = vadd.f32 %v6671, %v6529
        %v6673 = vadd.f32 %v6672, %v6530
        %v6674 = vadd.f32 %v6673, %v6531
        %v6675 = vadd.f32 %v6674, %v6532
        %v6676 = vadd.f32 %v6675, %v6533
        %v6677 = vadd.f32 %v6676, %v6534
        %v6678 = vadd.f32 %v6677, %v6535
        %v6679 = vadd.f32 %v6678, %v6536
        %v6680 = vadd.f32 %v6679, %v6537
        %v6681 = vadd.f32 %v6680, %v6538
        %v6682 = vrot.slane %v6681, 4
        %v6683 = vadd.f32 %v6681, %v6682
        %v6684 = vrot.slane %v6683, 2
        %v6685 = vadd.f32 %v6683, %v6684
        %v6686 = vrot.slane %v6685, 1
        %v6687 = vadd.f32 %v6685, %v6686
        %v6688 = vadd.f32 %v6539, %v6540
        %v6689 = vadd.f32 %v6688, %v6541
        %v6690 = vadd.f32 %v6689, %v6542
        %v6691 = vadd.f32 %v6690, %v6543
        %v6692 = vadd.f32 %v6691, %v6544
        %v6693 = vadd.f32 %v6692, %v6545
        %v6694 = vadd.f32 %v6693, %v6546
        %v6695 = vadd.f32 %v6694, %v6547
        %v6696 = vadd.f32 %v6695, %v6548
        %v6697 = vadd.f32 %v6696, %v6549
        %v6698 = vadd.f32 %v6697, %v6550
        %v6699 = vadd.f32 %v6698, %v6551
        %v6700 = vadd.f32 %v6699, %v6552
        %v6701 = vadd.f32 %v6700, %v6553
        %v6702 = vadd.f32 %v6701, %v6554
        %v6703 = vrot.slane %v6702, 4
        %v6704 = vadd.f32 %v6702, %v6703
        %v6705 = vrot.slane %v6704, 2
        %v6706 = vadd.f32 %v6704, %v6705
        %v6707 = vrot.slane %v6706, 1
        %v6708 = vadd.f32 %v6706, %v6707
        %v6709 = vadd.f32 %v6555, %v6556
        %v6710 = vadd.f32 %v6709, %v6557
        %v6711 = vadd.f32 %v6710, %v6558
        %v6712 = vadd.f32 %v6711, %v6559
        %v6713 = vadd.f32 %v6712, %v6560
        %v6714 = vadd.f32 %v6713, %v6561
        %v6715 = vadd.f32 %v6714, %v6562
        %v6716 = vadd.f32 %v6715, %v6563
        %v6717 = vadd.f32 %v6716, %v6564
        %v6718 = vadd.f32 %v6717, %v6565
        %v6719 = vadd.f32 %v6718, %v6566
        %v6720 = vadd.f32 %v6719, %v6567
        %v6721 = vadd.f32 %v6720, %v6568
        %v6722 = vadd.f32 %v6721, %v6569
        %v6723 = vadd.f32 %v6722, %v6570
        %v6724 = vrot.slane %v6723, 4
        %v6725 = vadd.f32 %v6723, %v6724
        %v6726 = vrot.slane %v6725, 2
        %v6727 = vadd.f32 %v6725, %v6726
        %v6728 = vrot.slane %v6727, 1
        %v6729 = vadd.f32 %v6727, %v6728
        %v6730 = vadd.f32 %v6571, %v6572
        %v6731 = vadd.f32 %v6730, %v6573
        %v6732 = vadd.f32 %v6731, %v6574
        %v6733 = vadd.f32 %v6732, %v6575
        %v6734 = vadd.f32 %v6733, %v6576
        %v6735 = vadd.f32 %v6734, %v6577
        %v6736 = vadd.f32 %v6735, %v6578
        %v6737 = vadd.f32 %v6736, %v6579
        %v6738 = vadd.f32 %v6737, %v6580
        %v6739 = vadd.f32 %v6738, %v6581
        %v6740 = vadd.f32 %v6739, %v6582
        %v6741 = vadd.f32 %v6740, %v6583
        %v6742 = vadd.f32 %v6741, %v6584
        %v6743 = vadd.f32 %v6742, %v6585
        %v6744 = vadd.f32 %v6743, %v6586
        %v6745 = vrot.slane %v6744, 4
        %v6746 = vadd.f32 %v6744, %v6745
        %v6747 = vrot.slane %v6746, 2
        %v6748 = vadd.f32 %v6746, %v6747
        %v6749 = vrot.slane %v6748, 1
        %v6750 = vadd.f32 %v6748, %v6749
        %v6751 = vadd.f32 %v6587, %v6588
        %v6752 = vadd.f32 %v6751, %v6589
        %v6753 = vadd.f32 %v6752, %v6590
        %v6754 = vadd.f32 %v6753, %v6591
        %v6755 = vadd.f32 %v6754, %v6592
        %v6756 = vadd.f32 %v6755, %v6593
        %v6757 = vadd.f32 %v6756, %v6594
        %v6758 = vadd.f32 %v6757, %v6595
        %v6759 = vadd.f32 %v6758, %v6596
        %v6760 = vadd.f32 %v6759, %v6597
        %v6761 = vadd.f32 %v6760, %v6598
        %v6762 = vadd.f32 %v6761, %v6599
        %v6763 = vadd.f32 %v6762, %v6600
        %v6764 = vadd.f32 %v6763, %v6601
        %v6765 = vadd.f32 %v6764, %v6602
        %v6766 = vrot.slane %v6765, 4
        %v6767 = vadd.f32 %v6765, %v6766
        %v6768 = vrot.slane %v6767, 2
        %v6769 = vadd.f32 %v6767, %v6768
        %v6770 = vrot.slane %v6769, 1
        %v6771 = vadd.f32 %v6769, %v6770
        %vm6780 = vcmask 1041409
        %v6781 = vsel %vm6780, %v6645, %v6624
        %vm6782 = vcmask 1042434
        %v6783 = vsel %vm6782, %v6666, %v6781
        %vm6784 = vcmask 1043459
        %v6785 = vsel %vm6784, %v6687, %v6783
        %vm6786 = vcmask 1044484
        %v6787 = vsel %vm6786, %v6708, %v6785
        %vm6788 = vcmask 1045509
        %v6789 = vsel %vm6788, %v6729, %v6787
        %vm6790 = vcmask 1046534
        %v6791 = vsel %vm6790, %v6750, %v6789
        %vm6792 = vcmask 1047559
        %v6793 = vsel %vm6792, %v6771, %v6791
        %v6795 = vadd.f32 %v6603, %v6793
        %6796 = vst [vmem:[#allocation2] sm:$0xff] %v6795
        %p6797 = scmp.eq.s32.totalorder %s21, 1
        // Predicated region
        $region82: #{tpu_custom_call.1} parent=72 // pred_check
          %p6798 = pneg %p6797
        $region83: #{tpu_custom_call.1} parent=72 // pred_check_branch
          %6800 = sbr.rel (%p6798) target = $region85
        $region84: #{tpu_custom_call.1} parent=72 // pred_region
          %v6801 = vld [vmem:[#allocation2] sm:$0xff]
          %v6802 = vmul.f32 %v6801, 0.00390625
          %v6803 = vld [vmem:[%s2] sm:$0xff]
          %v6804 = vld [vmem:[%s2 + $0x8] sm:$0xff]
          %v6805 = vld [vmem:[%s2 + $0x10] sm:$0xff]
          %v6806 = vld [vmem:[%s2 + $0x18] sm:$0xff]
          %v6807 = vld [vmem:[%s2 + $0x20] sm:$0xff]
          %v6808 = vld [vmem:[%s2 + $0x28] sm:$0xff]
          %v6809 = vld [vmem:[%s2 + $0x30] sm:$0xff]
          %v6810 = vld [vmem:[%s2 + $0x38] sm:$0xff]
          %v6811 = vld [vmem:[%s2 + $0x40] sm:$0xff]
          %v6812 = vld [vmem:[%s2 + $0x48] sm:$0xff]
          %v6813 = vld [vmem:[%s2 + $0x50] sm:$0xff]
          %v6814 = vld [vmem:[%s2 + $0x58] sm:$0xff]
          %v6815 = vld [vmem:[%s2 + $0x60] sm:$0xff]
          %v6816 = vld [vmem:[%s2 + $0x68] sm:$0xff]
          %v6817 = vld [vmem:[%s2 + $0x70] sm:$0xff]
          %v6818 = vld [vmem:[%s2 + $0x78] sm:$0xff]
          %v6819 = vld [vmem:[%s3] sm:$0x1]
          %v6821 = vlaneseq
          %v6822 = vshrl.u32 %v6821, 7
          %v6823 = vsub.s32 0, %v6822
          %v6824 = vrot.slane %v6819, %v6823
          %6826 = vmatprep.subr.mxu0 0.0
          %6827 = vmatpush1.msra.mxu0 %v6803
          %6828 = vmatprep.subr.mxu0 0.0
          %6829 = vmatpush1.msra.mxu0 %v6804
          %6830 = vmatprep.subr.mxu0 0.0
          %6831 = vmatpush1.msra.mxu0 %v6805
          %6832 = vmatprep.subr.mxu0 0.0
          %6833 = vmatpush1.msra.mxu0 %v6806
          %6834 = vmatprep.subr.mxu0 0.0
          %6835 = vmatpush1.msra.mxu0 %v6807
          %6836 = vmatprep.subr.mxu0 0.0
          %6837 = vmatpush1.msra.mxu0 %v6808
          %6838 = vmatprep.subr.mxu0 0.0
          %6839 = vmatpush1.msra.mxu0 %v6809
          %6840 = vmatprep.subr.mxu0 0.0
          %6841 = vmatpush1.msra.mxu0 %v6810
          %6842 = vmatprep.subr.mxu0 0.0
          %6843 = vmatpush1.msra.mxu0 %v6811
          %6844 = vmatprep.subr.mxu0 0.0
          %6845 = vmatpush1.msra.mxu0 %v6812
          %6846 = vmatprep.subr.mxu0 0.0
          %6847 = vmatpush1.msra.mxu0 %v6813
          %6848 = vmatprep.subr.mxu0 0.0
          %6849 = vmatpush1.msra.mxu0 %v6814
          %6850 = vmatprep.subr.mxu0 0.0
          %6851 = vmatpush1.msra.mxu0 %v6815
          %6852 = vmatprep.subr.mxu0 0.0
          %6853 = vmatpush1.msra.mxu0 %v6816
          %6854 = vmatprep.subr.mxu0 0.0
          %6855 = vmatpush1.msra.mxu0 %v6817
          %6856 = vmatprep.subr.mxu0 0.0
          %6857 = vmatpush1.msra.mxu0 %v6818
          %6858 = vmatprep.subr.mxu0 0.0
          %6859 = vmatpush1.msra.mxu0 0.0
          %6860 = vmatprep.subr.mxu0 0.0
          %6861 = vmatpush1.msra.mxu0 0.0
          %6862 = vmatprep.subr.mxu0 0.0
          %6863 = vmatpush1.msra.mxu0 0.0
          %6864 = vmatprep.subr.mxu0 0.0
          %6865 = vmatpush1.msra.mxu0 0.0
          %6866 = vmatprep.subr.mxu0 0.0
          %6867 = vmatpush1.msra.mxu0 0.0
          %6868 = vmatprep.subr.mxu0 0.0
          %6869 = vmatpush1.msra.mxu0 0.0
          %6870 = vmatprep.subr.mxu0 0.0
          %6871 = vmatpush1.msra.mxu0 0.0
          %6872 = vmatprep.subr.mxu0 0.0
          %6873 = vmatpush1.msra.mxu0 0.0
          %6874 = vmatprep.subr.mxu0 0.0
          %6875 = vmatpush1.msra.mxu0 0.0
          %6876 = vmatprep.subr.mxu0 0.0
          %6877 = vmatpush1.msra.mxu0 0.0
          %6878 = vmatprep.subr.mxu0 0.0
          %6879 = vmatpush1.msra.mxu0 0.0
          %6880 = vmatprep.subr.mxu0 0.0
          %6881 = vmatpush1.msra.mxu0 0.0
          %6882 = vmatprep.subr.mxu0 0.0
          %6883 = vmatpush1.msra.mxu0 0.0
          %6884 = vmatprep.subr.mxu0 0.0
          %6885 = vmatpush1.msra.mxu0 0.0
          %6886 = vmatprep.subr.mxu0 0.0
          %6887 = vmatpush1.msra.mxu0 0.0
          %6888 = vmatprep.subr.mxu0 0.0
          %6889 = vmatpush1.msra.mxu0 0.0
          %6890 = vmatprep.mubr.f32.mxu0 0.0
          %6891 = vmatmul.mubr.f32.gmra.mrb[0].mxu0 %v6802
          %v6892 = vpop.f32.mrb[0].mxu0
          %v6893 = vadd.f32 %v6824, %v6892
          %v6894 = vpop.f32.mrb[0].mxu0
          %6895 = vdwg.mxu0
          %6896 = vst [vmem:[#allocation4] sm:$0xff] %v6893
        $region85: #{tpu_custom_call.1} parent=72 // pred_fallthru
          _
        // Predicated region
        $region86: #{tpu_custom_call.1} parent=72 // pred_check
          %p6897 = pneg %p137
        $region87: #{tpu_custom_call.1} parent=72 // pred_check_branch
          %6899 = sbr.rel (%p6897) target = $region89
        $region88: #{tpu_custom_call.1} parent=72 // pred_region
          %s6901 = ssub.s32 128, 128
          %6902 = vsyncadd [#allocation5], %s6901
          %s6903 = smul.addr %s20, 128
          %s6904 = scalar_lea.hbm %s4, %s6903
          %s6906 = sshll.u32 [#allocation4], 4
          %s6907 = int_to_ptr.vmem [resolvable:$true] %s6906
          %6909 = dma.vmem_to_hbm [thread:$0]  %s6907, 128, %s6904, [#allocation5]
        $region89: #{tpu_custom_call.1} parent=72 // pred_fallthru
          _
        // Predicated region
        $region90: #{tpu_custom_call.1} parent=72 // pred_check
          %p6910 = pneg %p137
        $region91: #{tpu_custom_call.1} parent=72 // pred_check_branch
          %6912 = sbr.rel (%p6910) target = $region93
        $region92: #{tpu_custom_call.1} parent=72 // pred_region
          %6913 = dma.done [#allocation5], 128
        $region93: #{tpu_custom_call.1} parent=72 // pred_fallthru
          _
      $region73: #{tpu_custom_call.1} parent=5 // pred_fallthru
        _
      %p6914 = scmp.le.s32.totalorder 2, %s11
      // Predicated region
      $region94: #{tpu_custom_call.1} parent=5 // pred_check
        %p6915 = pneg %p6914
      $region95: #{tpu_custom_call.1} parent=5 // pred_check_branch
        %6917 = sbr.rel (%p6915) target = $region97
      $region96: #{tpu_custom_call.1} parent=5 // pred_region
        %s6918 = ssub.s32 %s11, 2
      $region97: #{tpu_custom_call.1} parent=5 // pred_fallthru
        _
    $region6: #{tpu_custom_call.1} parent=1 // loop_footer
      %s15 = sadd.s32 1, %s11
    $region7: #{tpu_custom_call.1} parent=1 // loop_footer_branch
      %10 = sbr.rel target = $region3
    $region8: #{tpu_custom_call.1} parent=1 // loop_exit
      _
    %6919 = vsyncpa [#allocation5], 1
    %s6920 = scalar_lea.sflag [#allocation5], 1
    %6921 = vsyncpa %s6920, 1

</llo_original>
